<compile_context>
chip_gen: v7x
topology: tpu7x:2x2x1
jax: 0.10.0
libtpu: 0.0.40
codegen_flags: <defaults>
</compile_context>

<pallas_src>
import math

import numpy as np
import jax
import jax.numpy as jnp
from jax.experimental import pallas as pl
from jax.experimental.pallas import tpu as pltpu

H = 16          # input height
W = 16          # input width
KS = 8          # conv kernel size
DIL = 2         # dilation
PAD = 7         # padding -> output spatial size == input spatial size
ROWS = 32       # H-padded scratch rows (needs >= H + 2*PAD = 30)
NCH = 16        # channel slots in the lane-packed activation layout
LANES = NCH * W                 # 256 lanes = (channel, w) packed
CHANNELS = [1, 3, 6, 12, 16]    # conv, conv2, conv3, conv4
# Per-layer (cin_pad, cout_pad): padded channel counts so activation lane
# widths are always whole 128-lane tiles (8*16=128 or 16*16=256).
LAYER_PADS = [(8, 8), (8, 8), (8, 16), (16, 16)]


# ----------------------- trace-time weight packing ------------------------- #

def _build_tap_matrix():
    """(kw, wp, w_out) selector: 1 where wp == w_out + DIL*kw - PAD (in range).

    Encodes the dilated kw taps *and* the zero padding along W: taps that
    would read outside [0, W) simply have no entry.
    """
    t = np.zeros((KS, W, W), np.float32)
    for kw in range(KS):
        for w in range(W):
            wp = w + DIL * kw - PAD
            if 0 <= wp < W:
                t[kw, wp, w] = 1.0
    return t


_TAPS = _build_tap_matrix()


def _pack_layer(w, b, cin_pad, cout_pad):
    """Pack a Conv2d weight (cout, cin, 8, 8) into the banded matrix WB.

    WB[(kh*cin_pad + ci)*16 + wp, co*16 + w_out] = w[co, ci, kh, kw]
    with wp = w_out + 2*kw - 7 (out-of-range taps dropped = W zero padding).
    Rows for ci >= cin and columns for co >= cout are zero, so channel
    padding is numerically inert.
    """
    cout, cin = w.shape[0], w.shape[1]
    taps = jnp.asarray(_TAPS)                                  # (kw, wp, w)
    # r[kh, ci, wp, co, w] = sum_kw w[co, ci, kh, kw] * taps[kw, wp, w]
    r = jnp.einsum("oihk,kpw->hipow", w.astype(jnp.float32), taps)
    r = jnp.pad(r, ((0, 0), (0, cin_pad - cin), (0, 0),
                    (0, cout_pad - cout), (0, 0)))
    wb = r.reshape(KS * cin_pad * W, cout_pad * W).astype(jnp.bfloat16)
    bb = jnp.repeat(jnp.pad(b, (0, cout_pad - cout)), W)
    bb = bb.reshape(1, cout_pad * W).astype(jnp.float32)
    return wb, bb


# ------------------------------ Pallas kernel ------------------------------ #

def coefs_kernel(x_ref, w1_ref, b1_ref, w2_ref, b2_ref, w3_ref, b3_ref,
                 w4_ref, b4_ref, out_ref, act_ref):
    # act_ref: (ROWS, 256) f32, lane layout (c*16 + w), rows [PAD, PAD+H) live.
    # Single copy of the (already zero-padded) input; pad rows are never
    # rewritten, so no per-layer zeroing is required.
    act_ref[...] = x_ref[...]

    def layer(w_ref, b_ref, cin_lanes, relu):
        # One big matmul per layer: the 8 dilated kh taps are 8 row-shifted
        # slabs of the padded activation (static sublane-offset slices),
        # concatenated along the contraction axis.  All slabs are whole
        # 128-lane tiles, so the concat is reshape/transpose free.
        lhs = jnp.concatenate(
            [act_ref[pl.ds(DIL * kh, H), pl.ds(0, cin_lanes)]
             for kh in range(KS)],
            axis=1).astype(jnp.bfloat16)                # (16, 8*cin_lanes)
        out = jax.lax.dot_general(
            lhs, w_ref[...],                            # bf16 x bf16 -> f32
            dimension_numbers=(((1,), (0,)), ((), ())),
            preferred_element_type=jnp.float32)         # (16, cout_lanes)
        out = out + b_ref[...]                          # (1, cout_lanes) bias
        if relu:
            out = jnp.maximum(out, 0.0)
        return out

    a1 = layer(w1_ref, b1_ref, 8 * W, relu=True)        # (16, 128)
    act_ref[pl.ds(PAD, H), pl.ds(0, 8 * W)] = a1
    a2 = layer(w2_ref, b2_ref, 8 * W, relu=True)        # (16, 128)
    act_ref[pl.ds(PAD, H), pl.ds(0, 8 * W)] = a2
    a3 = layer(w3_ref, b3_ref, 8 * W, relu=True)        # (16, 256)
    act_ref[pl.ds(PAD, H), pl.ds(0, 16 * W)] = a3
    out_ref[...] = layer(w4_ref, b4_ref, 16 * W, relu=False)   # (16, 256)


# ------------------------------ JAX wrapper -------------------------------- #

@jax.jit
def coefs_model(x, params):
    """x: (1, H, W) float32 -> (H*W, 4, 4), matching CoefsModel.forward."""
    args = []
    for (w, b), (cin_pad, cout_pad) in zip(params, LAYER_PADS):
        wb, bb = _pack_layer(w, b, cin_pad, cout_pad)
        args += [wb, bb]

    # Input laid out as (row = h + PAD, lane = c*16 + w), zero elsewhere.
    x_pad = jnp.zeros((ROWS, LANES), jnp.float32)
    x_pad = x_pad.at[PAD:PAD + H, 0:W].set(x[0].astype(jnp.float32))

    out = pl.pallas_call(
        coefs_kernel,
        out_shape=jax.ShapeDtypeStruct((H, LANES), jnp.float32),
        in_specs=[pl.BlockSpec(memory_space=pltpu.MemorySpace.VMEM)]
        * (1 + len(args)),
        out_specs=pl.BlockSpec(memory_space=pltpu.MemorySpace.VMEM),
        scratch_shapes=[pltpu.VMEM((ROWS, LANES), jnp.float32)],
    )(x_pad, *args)

    # (h, c*16+w) -> (c, h, w) -> torch's contiguous NCHW .view(-1, 4, 4).
    out_chw = jnp.transpose(out.reshape(H, NCH, W), (1, 0, 2))
    return out_chw.reshape(-1, 4, 4)


# -------------------------- params & reference ----------------------------- #

def init_params(key):
    """Deterministic init mirroring torch.nn.Conv2d default (U(-1/sqrt(fan_in), ...))."""
    params = []
    for cin, cout in zip(CHANNELS[:-1], CHANNELS[1:]):
        key, kw, kb = jax.random.split(key, 3)
        bound = 1.0 / math.sqrt(cin * KS * KS)
        w = jax.random.uniform(kw, (cout, cin, KS, KS), jnp.float32, -bound, bound)
        b = jax.random.uniform(kb, (cout,), jnp.float32, -bound, bound)
        params.append((w, b))
    return params


def ref_forward(x, params):
    """Pure-JAX reference with identical semantics to the PyTorch forward."""
    y = x[None].astype(jnp.float32)                     # (1, 1, H, W)
    n = len(params)
    for i, (w, b) in enumerate(params):
        y = jax.lax.conv_general_dilated(
            y, w, window_strides=(1, 1), padding=((PAD, PAD), (PAD, PAD)),
            rhs_dilation=(DIL, DIL),
            dimension_numbers=("NCHW", "OIHW", "NCHW"),
            precision=jax.lax.Precision.HIGHEST)
        y = y + b[None, :, None, None]
        if i < n - 1:
            y = jax.nn.relu(y)
    return y.reshape(-1, 4, 4)


# ---------------------------------- main ------------------------------------ #

if __name__ == "__main__":
    root = jax.random.PRNGKey(0)
    pkey, xkey = jax.random.split(root)
    params = init_params(pkey)
    x = jax.random.normal(xkey, (1, H, W), jnp.float32)   # (C=1, H, W)

    out = jax.block_until_ready(coefs_model(x, params))
    assert out.shape == (H * W, 4, 4), out.shape

    ref = ref_forward(x, params)
    max_err = float(jnp.max(jnp.abs(out - ref)))
    if not bool(jnp.allclose(out, ref, rtol=2e-2, atol=2e-2)):
        raise AssertionError(
            f"Pallas kernel mismatch vs reference, max abs err = {max_err}")
    print("KERNEL_OK")
</pallas_src>

<mosaic_0001>
module attributes {stable_mosaic.version = 11 : i64} {
  func.func @coefs_kernel(%arg0: memref<32x256xf32, #tpu.memory_space<vmem>>, %arg1: memref<1024x128xbf16, #tpu.memory_space<vmem>>, %arg2: memref<1x128xf32, #tpu.memory_space<vmem>>, %arg3: memref<1024x128xbf16, #tpu.memory_space<vmem>>, %arg4: memref<1x128xf32, #tpu.memory_space<vmem>>, %arg5: memref<1024x256xbf16, #tpu.memory_space<vmem>>, %arg6: memref<1x256xf32, #tpu.memory_space<vmem>>, %arg7: memref<2048x256xbf16, #tpu.memory_space<vmem>>, %arg8: memref<1x256xf32, #tpu.memory_space<vmem>>, %arg9: memref<16x256xf32, #tpu.memory_space<vmem>>, %arg10: memref<32x256xf32, #tpu.memory_space<vmem>>) attributes {dimension_semantics = [], scalar_prefetch = 0 : i64, scratch_operands = 1 : i64, tpu.core_type = #tpu.core_type<tc>} {
    %c0 = arith.constant 0 : index
    %c0_0 = arith.constant 0 : index
    %0 = vector.load %arg0[%c0, %c0_0] : memref<32x256xf32, #tpu.memory_space<vmem>>, vector<32x256xf32>
    %c0_1 = arith.constant 0 : index
    %c0_2 = arith.constant 0 : index
    %1 = vector.load %arg10[%c0_1, %c0_2] : memref<32x256xf32, #tpu.memory_space<vmem>>, vector<32x256xf32>
    tpu.vector_store %arg10[%c0_1, %c0_2], %0 {strides = array<i32>} : memref<32x256xf32, #tpu.memory_space<vmem>>, vector<32x256xf32>,
    %c0_3 = arith.constant 0 : index
    %c0_4 = arith.constant 0 : index
    %2 = vector.load %arg10[%c0_3, %c0_4] : memref<32x256xf32, #tpu.memory_space<vmem>>, vector<16x128xf32>
    %c2 = arith.constant 2 : index
    %c0_5 = arith.constant 0 : index
    %3 = vector.load %arg10[%c2, %c0_5] : memref<32x256xf32, #tpu.memory_space<vmem>>, vector<16x128xf32>
    %c4 = arith.constant 4 : index
    %c0_6 = arith.constant 0 : index
    %4 = vector.load %arg10[%c4, %c0_6] : memref<32x256xf32, #tpu.memory_space<vmem>>, vector<16x128xf32>
    %c6 = arith.constant 6 : index
    %c0_7 = arith.constant 0 : index
    %5 = vector.load %arg10[%c6, %c0_7] : memref<32x256xf32, #tpu.memory_space<vmem>>, vector<16x128xf32>
    %c8 = arith.constant 8 : index
    %c0_8 = arith.constant 0 : index
    %6 = vector.load %arg10[%c8, %c0_8] : memref<32x256xf32, #tpu.memory_space<vmem>>, vector<16x128xf32>
    %c10 = arith.constant 10 : index
    %c0_9 = arith.constant 0 : index
    %7 = vector.load %arg10[%c10, %c0_9] : memref<32x256xf32, #tpu.memory_space<vmem>>, vector<16x128xf32>
    %c12 = arith.constant 12 : index
    %c0_10 = arith.constant 0 : index
    %8 = vector.load %arg10[%c12, %c0_10] : memref<32x256xf32, #tpu.memory_space<vmem>>, vector<16x128xf32>
    %c14 = arith.constant 14 : index
    %c0_11 = arith.constant 0 : index
    %9 = vector.load %arg10[%c14, %c0_11] : memref<32x256xf32, #tpu.memory_space<vmem>>, vector<16x128xf32>
    %10 = tpu.concatenate %2, %3, %4, %5, %6, %7, %8, %9 in 1 : vector<16x128xf32>, vector<16x128xf32>, vector<16x128xf32>, vector<16x128xf32>, vector<16x128xf32>, vector<16x128xf32>, vector<16x128xf32>, vector<16x128xf32> -> vector<16x1024xf32>
    %11 = arith.truncf %10 : vector<16x1024xf32> to vector<16x1024xbf16>
    %c0_12 = arith.constant 0 : index
    %c0_13 = arith.constant 0 : index
    %12 = vector.load %arg1[%c0_12, %c0_13] : memref<1024x128xbf16, #tpu.memory_space<vmem>>, vector<1024x128xbf16>
    %cst = arith.constant dense<0.000000e+00> : vector<16x128xf32>
    %13 = tpu.matmul %11, %12, %cst {dimension_numbers = #tpu.dot_dimension_numbers<[1], [0], [0], [1], [0, 0, 1, 1], [], []>} : vector<16x1024xbf16>, vector<1024x128xbf16>, vector<16x128xf32> -> vector<16x128xf32>
    %c0_14 = arith.constant 0 : index
    %c0_15 = arith.constant 0 : index
    %14 = vector.load %arg2[%c0_14, %c0_15] : memref<1x128xf32, #tpu.memory_space<vmem>>, vector<1x128xf32>
    %15 = vector.broadcast %14 : vector<1x128xf32> to vector<16x128xf32>
    %16 = arith.addf %13, %15 : vector<16x128xf32>
    %cst_16 = arith.constant 0.000000e+00 : f32
    %17 = vector.broadcast %cst_16 : f32 to vector<16x128xf32>
    %18 = arith.maximumf %16, %17 : vector<16x128xf32>
    %c7 = arith.constant 7 : index
    %c0_17 = arith.constant 0 : index
    %19 = vector.load %arg10[%c7, %c0_17] : memref<32x256xf32, #tpu.memory_space<vmem>>, vector<16x128xf32>
    tpu.vector_store %arg10[%c7, %c0_17], %18 {strides = array<i32>} : memref<32x256xf32, #tpu.memory_space<vmem>>, vector<16x128xf32>,
    %c0_18 = arith.constant 0 : index
    %c0_19 = arith.constant 0 : index
    %20 = vector.load %arg10[%c0_18, %c0_19] : memref<32x256xf32, #tpu.memory_space<vmem>>, vector<16x128xf32>
    %c2_20 = arith.constant 2 : index
    %c0_21 = arith.constant 0 : index
    %21 = vector.load %arg10[%c2_20, %c0_21] : memref<32x256xf32, #tpu.memory_space<vmem>>, vector<16x128xf32>
    %c4_22 = arith.constant 4 : index
    %c0_23 = arith.constant 0 : index
    %22 = vector.load %arg10[%c4_22, %c0_23] : memref<32x256xf32, #tpu.memory_space<vmem>>, vector<16x128xf32>
    %c6_24 = arith.constant 6 : index
    %c0_25 = arith.constant 0 : index
    %23 = vector.load %arg10[%c6_24, %c0_25] : memref<32x256xf32, #tpu.memory_space<vmem>>, vector<16x128xf32>
    %c8_26 = arith.constant 8 : index
    %c0_27 = arith.constant 0 : index
    %24 = vector.load %arg10[%c8_26, %c0_27] : memref<32x256xf32, #tpu.memory_space<vmem>>, vector<16x128xf32>
    %c10_28 = arith.constant 10 : index
    %c0_29 = arith.constant 0 : index
    %25 = vector.load %arg10[%c10_28, %c0_29] : memref<32x256xf32, #tpu.memory_space<vmem>>, vector<16x128xf32>
    %c12_30 = arith.constant 12 : index
    %c0_31 = arith.constant 0 : index
    %26 = vector.load %arg10[%c12_30, %c0_31] : memref<32x256xf32, #tpu.memory_space<vmem>>, vector<16x128xf32>
    %c14_32 = arith.constant 14 : index
    %c0_33 = arith.constant 0 : index
    %27 = vector.load %arg10[%c14_32, %c0_33] : memref<32x256xf32, #tpu.memory_space<vmem>>, vector<16x128xf32>
    %28 = tpu.concatenate %20, %21, %22, %23, %24, %25, %26, %27 in 1 : vector<16x128xf32>, vector<16x128xf32>, vector<16x128xf32>, vector<16x128xf32>, vector<16x128xf32>, vector<16x128xf32>, vector<16x128xf32>, vector<16x128xf32> -> vector<16x1024xf32>
    %29 = arith.truncf %28 : vector<16x1024xf32> to vector<16x1024xbf16>
    %c0_34 = arith.constant 0 : index
    %c0_35 = arith.constant 0 : index
    %30 = vector.load %arg3[%c0_34, %c0_35] : memref<1024x128xbf16, #tpu.memory_space<vmem>>, vector<1024x128xbf16>
    %cst_36 = arith.constant dense<0.000000e+00> : vector<16x128xf32>
    %31 = tpu.matmul %29, %30, %cst_36 {dimension_numbers = #tpu.dot_dimension_numbers<[1], [0], [0], [1], [0, 0, 1, 1], [], []>} : vector<16x1024xbf16>, vector<1024x128xbf16>, vector<16x128xf32> -> vector<16x128xf32>
    %c0_37 = arith.constant 0 : index
    %c0_38 = arith.constant 0 : index
    %32 = vector.load %arg4[%c0_37, %c0_38] : memref<1x128xf32, #tpu.memory_space<vmem>>, vector<1x128xf32>
    %33 = vector.broadcast %32 : vector<1x128xf32> to vector<16x128xf32>
    %34 = arith.addf %31, %33 : vector<16x128xf32>
    %cst_39 = arith.constant 0.000000e+00 : f32
    %35 = vector.broadcast %cst_39 : f32 to vector<16x128xf32>
    %36 = arith.maximumf %34, %35 : vector<16x128xf32>
    %c7_40 = arith.constant 7 : index
    %c0_41 = arith.constant 0 : index
    %37 = vector.load %arg10[%c7_40, %c0_41] : memref<32x256xf32, #tpu.memory_space<vmem>>, vector<16x128xf32>
    tpu.vector_store %arg10[%c7_40, %c0_41], %36 {strides = array<i32>} : memref<32x256xf32, #tpu.memory_space<vmem>>, vector<16x128xf32>,
    %c0_42 = arith.constant 0 : index
    %c0_43 = arith.constant 0 : index
    %38 = vector.load %arg10[%c0_42, %c0_43] : memref<32x256xf32, #tpu.memory_space<vmem>>, vector<16x128xf32>
    %c2_44 = arith.constant 2 : index
    %c0_45 = arith.constant 0 : index
    %39 = vector.load %arg10[%c2_44, %c0_45] : memref<32x256xf32, #tpu.memory_space<vmem>>, vector<16x128xf32>
    %c4_46 = arith.constant 4 : index
    %c0_47 = arith.constant 0 : index
    %40 = vector.load %arg10[%c4_46, %c0_47] : memref<32x256xf32, #tpu.memory_space<vmem>>, vector<16x128xf32>
    %c6_48 = arith.constant 6 : index
    %c0_49 = arith.constant 0 : index
    %41 = vector.load %arg10[%c6_48, %c0_49] : memref<32x256xf32, #tpu.memory_space<vmem>>, vector<16x128xf32>
    %c8_50 = arith.constant 8 : index
    %c0_51 = arith.constant 0 : index
    %42 = vector.load %arg10[%c8_50, %c0_51] : memref<32x256xf32, #tpu.memory_space<vmem>>, vector<16x128xf32>
    %c10_52 = arith.constant 10 : index
    %c0_53 = arith.constant 0 : index
    %43 = vector.load %arg10[%c10_52, %c0_53] : memref<32x256xf32, #tpu.memory_space<vmem>>, vector<16x128xf32>
    %c12_54 = arith.constant 12 : index
    %c0_55 = arith.constant 0 : index
    %44 = vector.load %arg10[%c12_54, %c0_55] : memref<32x256xf32, #tpu.memory_space<vmem>>, vector<16x128xf32>
    %c14_56 = arith.constant 14 : index
    %c0_57 = arith.constant 0 : index
    %45 = vector.load %arg10[%c14_56, %c0_57] : memref<32x256xf32, #tpu.memory_space<vmem>>, vector<16x128xf32>
    %46 = tpu.concatenate %38, %39, %40, %41, %42, %43, %44, %45 in 1 : vector<16x128xf32>, vector<16x128xf32>, vector<16x128xf32>, vector<16x128xf32>, vector<16x128xf32>, vector<16x128xf32>, vector<16x128xf32>, vector<16x128xf32> -> vector<16x1024xf32>
    %47 = arith.truncf %46 : vector<16x1024xf32> to vector<16x1024xbf16>
    %c0_58 = arith.constant 0 : index
    %c0_59 = arith.constant 0 : index
    %48 = vector.load %arg5[%c0_58, %c0_59] : memref<1024x256xbf16, #tpu.memory_space<vmem>>, vector<1024x256xbf16>
    %cst_60 = arith.constant dense<0.000000e+00> : vector<16x256xf32>
    %49 = tpu.matmul %47, %48, %cst_60 {dimension_numbers = #tpu.dot_dimension_numbers<[1], [0], [0], [1], [0, 0, 1, 1], [], []>} : vector<16x1024xbf16>, vector<1024x256xbf16>, vector<16x256xf32> -> vector<16x256xf32>
    %c0_61 = arith.constant 0 : index
    %c0_62 = arith.constant 0 : index
    %50 = vector.load %arg6[%c0_61, %c0_62] : memref<1x256xf32, #tpu.memory_space<vmem>>, vector<1x256xf32>
    %51 = vector.broadcast %50 : vector<1x256xf32> to vector<16x256xf32>
    %52 = arith.addf %49, %51 : vector<16x256xf32>
    %cst_63 = arith.constant 0.000000e+00 : f32
    %53 = vector.broadcast %cst_63 : f32 to vector<16x256xf32>
    %54 = arith.maximumf %52, %53 : vector<16x256xf32>
    %c7_64 = arith.constant 7 : index
    %c0_65 = arith.constant 0 : index
    %55 = vector.load %arg10[%c7_64, %c0_65] : memref<32x256xf32, #tpu.memory_space<vmem>>, vector<16x256xf32>
    tpu.vector_store %arg10[%c7_64, %c0_65], %54 {strides = array<i32>} : memref<32x256xf32, #tpu.memory_space<vmem>>, vector<16x256xf32>,
    %c0_66 = arith.constant 0 : index
    %c0_67 = arith.constant 0 : index
    %56 = vector.load %arg10[%c0_66, %c0_67] : memref<32x256xf32, #tpu.memory_space<vmem>>, vector<16x256xf32>
    %c2_68 = arith.constant 2 : index
    %c0_69 = arith.constant 0 : index
    %57 = vector.load %arg10[%c2_68, %c0_69] : memref<32x256xf32, #tpu.memory_space<vmem>>, vector<16x256xf32>
    %c4_70 = arith.constant 4 : index
    %c0_71 = arith.constant 0 : index
    %58 = vector.load %arg10[%c4_70, %c0_71] : memref<32x256xf32, #tpu.memory_space<vmem>>, vector<16x256xf32>
    %c6_72 = arith.constant 6 : index
    %c0_73 = arith.constant 0 : index
    %59 = vector.load %arg10[%c6_72, %c0_73] : memref<32x256xf32, #tpu.memory_space<vmem>>, vector<16x256xf32>
    %c8_74 = arith.constant 8 : index
    %c0_75 = arith.constant 0 : index
    %60 = vector.load %arg10[%c8_74, %c0_75] : memref<32x256xf32, #tpu.memory_space<vmem>>, vector<16x256xf32>
    %c10_76 = arith.constant 10 : index
    %c0_77 = arith.constant 0 : index
    %61 = vector.load %arg10[%c10_76, %c0_77] : memref<32x256xf32, #tpu.memory_space<vmem>>, vector<16x256xf32>
    %c12_78 = arith.constant 12 : index
    %c0_79 = arith.constant 0 : index
    %62 = vector.load %arg10[%c12_78, %c0_79] : memref<32x256xf32, #tpu.memory_space<vmem>>, vector<16x256xf32>
    %c14_80 = arith.constant 14 : index
    %c0_81 = arith.constant 0 : index
    %63 = vector.load %arg10[%c14_80, %c0_81] : memref<32x256xf32, #tpu.memory_space<vmem>>, vector<16x256xf32>
    %64 = tpu.concatenate %56, %57, %58, %59, %60, %61, %62, %63 in 1 : vector<16x256xf32>, vector<16x256xf32>, vector<16x256xf32>, vector<16x256xf32>, vector<16x256xf32>, vector<16x256xf32>, vector<16x256xf32>, vector<16x256xf32> -> vector<16x2048xf32>
    %65 = arith.truncf %64 : vector<16x2048xf32> to vector<16x2048xbf16>
    %c0_82 = arith.constant 0 : index
    %c0_83 = arith.constant 0 : index
    %66 = vector.load %arg7[%c0_82, %c0_83] : memref<2048x256xbf16, #tpu.memory_space<vmem>>, vector<2048x256xbf16>
    %cst_84 = arith.constant dense<0.000000e+00> : vector<16x256xf32>
    %67 = tpu.matmul %65, %66, %cst_84 {dimension_numbers = #tpu.dot_dimension_numbers<[1], [0], [0], [1], [0, 0, 1, 1], [], []>} : vector<16x2048xbf16>, vector<2048x256xbf16>, vector<16x256xf32> -> vector<16x256xf32>
    %c0_85 = arith.constant 0 : index
    %c0_86 = arith.constant 0 : index
    %68 = vector.load %arg8[%c0_85, %c0_86] : memref<1x256xf32, #tpu.memory_space<vmem>>, vector<1x256xf32>
    %69 = vector.broadcast %68 : vector<1x256xf32> to vector<16x256xf32>
    %70 = arith.addf %67, %69 : vector<16x256xf32>
    %c0_87 = arith.constant 0 : index
    %c0_88 = arith.constant 0 : index
    %71 = vector.load %arg9[%c0_87, %c0_88] : memref<16x256xf32, #tpu.memory_space<vmem>>, vector<16x256xf32>
    tpu.vector_store %arg9[%c0_87, %c0_88], %70 {strides = array<i32>} : memref<16x256xf32, #tpu.memory_space<vmem>>, vector<16x256xf32>,
    return
  }
}

</mosaic_0001>

<llo_original>
// kernel: coefs_model.1
$region0: #{coefs_model.1}
  #allocation0 [shape = 'u32[]', space=smem, size = 0x4, offset = 0x4, fixed_abs, tag = 'smem constant byte address 0x4 - core index']
  #allocation1 [shape = 'u32[144,128]{1,0:T(1,128)}', space=vmem, size = 0x12000, scoped, tag = 'internal scratch']
  #allocation2 [shape = 'f32[32,256]{1,0:T(8,128)}', space=vmem, size = 0x8000, scoped, tag = 'scratch operand']
  %s0 = inlined_call_operand.vmem [shape: f32[32,256], index: 0, kind: input, shape index: {}]
  %s1 = inlined_call_operand.vmem [shape: bf16[1024,128], index: 1, kind: input, shape index: {}]
  %s2 = inlined_call_operand.vmem [shape: f32[1,128], index: 2, kind: input, shape index: {}]
  %s3 = inlined_call_operand.vmem [shape: bf16[1024,128], index: 3, kind: input, shape index: {}]
  %s4 = inlined_call_operand.vmem [shape: f32[1,128], index: 4, kind: input, shape index: {}]
  %s5 = inlined_call_operand.vmem [shape: bf16[1024,256], index: 5, kind: input, shape index: {}]
  %s6 = inlined_call_operand.vmem [shape: f32[1,256], index: 6, kind: input, shape index: {}]
  %s7 = inlined_call_operand.vmem [shape: bf16[2048,256], index: 7, kind: input, shape index: {}]
  %s8 = inlined_call_operand.vmem [shape: f32[1,256], index: 8, kind: input, shape index: {}]
  %s9 = inlined_call_operand.vmem [shape: f32[16,256], index: 9, kind: output, shape index: {}]
  %s10 = sld [smem:[#allocation0]]
  $region46: #{coefs_model.1} parent=0
    _
  %s12 = ssub.s32 1, %s10
  %s13 = scalar_select 0, %s12, %s10
  // Predicated region
  $region2: #{coefs_model.1} parent=0 // pred_check
    _
  $region3: #{coefs_model.1} parent=0 // pred_check_branch
    %15 = sbr.rel (0) target = $region5
  $region4: #{coefs_model.1} parent=0 // pred_region
    _
  $region5: #{coefs_model.1} parent=0 // pred_fallthru
    _
  // Predicated region
  $region6: #{coefs_model.1} parent=0 // pred_check
    _
  $region7: #{coefs_model.1} parent=0 // pred_check_branch
    %17 = sbr.rel (0) target = $region9
  $region8: #{coefs_model.1} parent=0 // pred_region
    _
  $region9: #{coefs_model.1} parent=0 // pred_fallthru
    _
  // Predicated region
  $region10: #{coefs_model.1} parent=0 // pred_check
    _
  $region11: #{coefs_model.1} parent=0 // pred_check_branch
    %19 = sbr.rel (0) target = $region13
  $region12: #{coefs_model.1} parent=0 // pred_region
    _
  $region13: #{coefs_model.1} parent=0 // pred_fallthru
    _
  // Predicated region
  $region14: #{coefs_model.1} parent=0 // pred_check
    _
  $region15: #{coefs_model.1} parent=0 // pred_check_branch
    %21 = sbr.rel (0) target = $region17
  $region16: #{coefs_model.1} parent=0 // pred_region
    _
  $region17: #{coefs_model.1} parent=0 // pred_fallthru
    _
  // Predicated region
  $region18: #{coefs_model.1} parent=0 // pred_check
    _
  $region19: #{coefs_model.1} parent=0 // pred_check_branch
    %23 = sbr.rel (0) target = $region21
  $region20: #{coefs_model.1} parent=0 // pred_region
    _
  $region21: #{coefs_model.1} parent=0 // pred_fallthru
    _
  // Predicated region
  $region22: #{coefs_model.1} parent=0 // pred_check
    _
  $region23: #{coefs_model.1} parent=0 // pred_check_branch
    %25 = sbr.rel (0) target = $region25
  $region24: #{coefs_model.1} parent=0 // pred_region
    _
  $region25: #{coefs_model.1} parent=0 // pred_fallthru
    _
  // Predicated region
  $region26: #{coefs_model.1} parent=0 // pred_check
    _
  $region27: #{coefs_model.1} parent=0 // pred_check_branch
    %27 = sbr.rel (0) target = $region29
  $region28: #{coefs_model.1} parent=0 // pred_region
    _
  $region29: #{coefs_model.1} parent=0 // pred_fallthru
    _
  // Predicated region
  $region30: #{coefs_model.1} parent=0 // pred_check
    _
  $region31: #{coefs_model.1} parent=0 // pred_check_branch
    %29 = sbr.rel (0) target = $region33
  $region32: #{coefs_model.1} parent=0 // pred_region
    _
  $region33: #{coefs_model.1} parent=0 // pred_fallthru
    _
  // Predicated region
  $region34: #{coefs_model.1} parent=0 // pred_check
    _
  $region35: #{coefs_model.1} parent=0 // pred_check_branch
    %31 = sbr.rel (0) target = $region37
  $region36: #{coefs_model.1} parent=0 // pred_region
    _
  $region37: #{coefs_model.1} parent=0 // pred_fallthru
    _
  %v33 = vld [vmem:[%s0] sm:$0xff]
  %v34 = vld [vmem:[%s0 + $0x8] sm:$0xff]
  %v35 = vld [vmem:[%s0 + $0x10] sm:$0xff]
  %v36 = vld [vmem:[%s0 + $0x18] sm:$0xff]
  %v37 = vld [vmem:[%s0 + $0x20] sm:$0xff]
  %v38 = vld [vmem:[%s0 + $0x28] sm:$0xff]
  %v39 = vld [vmem:[%s0 + $0x30] sm:$0xff]
  %v40 = vld [vmem:[%s0 + $0x38] sm:$0xff]
  %41 = vst [vmem:[#allocation2] sm:$0xff] %v33
  %42 = vst [vmem:[#allocation2 + $0x8] sm:$0xff] %v34
  %43 = vst [vmem:[#allocation2 + $0x10] sm:$0xff] %v35
  %44 = vst [vmem:[#allocation2 + $0x18] sm:$0xff] %v36
  %45 = vst [vmem:[#allocation2 + $0x20] sm:$0xff] %v37
  %46 = vst [vmem:[#allocation2 + $0x28] sm:$0xff] %v38
  %47 = vst [vmem:[#allocation2 + $0x30] sm:$0xff] %v39
  %48 = vst [vmem:[#allocation2 + $0x38] sm:$0xff] %v40
  %v49 = vld [vmem:[#allocation2] sm:$0xff]
  %v50 = vld [vmem:[#allocation2 + $0x10] sm:$0xff]
  %v51 = vld [vmem:[#allocation2] sm:$0xfc]
  %v52 = vld [vmem:[#allocation2 + $0x20] sm:$0x3]
  %v53 = vld [vmem:[#allocation2] sm:$0xf0]
  %v54 = vld [vmem:[#allocation2 + $0x20] sm:$0xf]
  %v55 = vld [vmem:[#allocation2] sm:$0xc0]
  %v56 = vld [vmem:[#allocation2 + $0x20] sm:$0x3f]
  %v57 = vld [vmem:[#allocation2 + $0x20] sm:$0xff]
  %v58 = vld [vmem:[#allocation2 + $0x10] sm:$0xfc]
  %v59 = vld [vmem:[#allocation2 + $0x30] sm:$0x3]
  %v60 = vld [vmem:[#allocation2 + $0x10] sm:$0xf0]
  %v61 = vld [vmem:[#allocation2 + $0x30] sm:$0xf]
  %v62 = vld [vmem:[#allocation2 + $0x10] sm:$0xc0]
  %v63 = vld [vmem:[#allocation2 + $0x30] sm:$0x3f]
  %vm67 = vcmask 1045504
  %v68 = vrot.slane %v51, 2
  %v69 = vrot.slane %v50, 2
  %v70 = vsel %vm67, %v68, %v69
  %v71 = vrot.slane %v52, 2
  %v72 = vsel %vm67, %v69, %v71
  %vm77 = vcmask 1043456
  %v78 = vrot.slane %v53, 4
  %v79 = vrot.slane %v50, 4
  %v80 = vsel %vm77, %v78, %v79
  %v81 = vrot.slane %v54, 4
  %v82 = vsel %vm77, %v79, %v81
  %vm87 = vcmask 1041408
  %v88 = vrot.slane %v55, 6
  %v89 = vrot.slane %v50, 6
  %v90 = vsel %vm87, %v88, %v89
  %v91 = vrot.slane %v56, 6
  %v92 = vsel %vm87, %v89, %v91
  %v98 = vrot.slane %v58, 2
  %v99 = vrot.slane %v57, 2
  %v100 = vsel %vm67, %v98, %v99
  %v101 = vrot.slane %v59, 2
  %v102 = vsel %vm67, %v99, %v101
  %v107 = vrot.slane %v60, 4
  %v108 = vrot.slane %v57, 4
  %v109 = vsel %vm77, %v107, %v108
  %v110 = vrot.slane %v61, 4
  %v111 = vsel %vm77, %v108, %v110
  %v116 = vrot.slane %v62, 6
  %v117 = vrot.slane %v57, 6
  %v118 = vsel %vm87, %v116, %v117
  %v119 = vrot.slane %v63, 6
  %v120 = vsel %vm87, %v117, %v119
  %v123 = vpack.c.bf16 %v50, %v49
  %v124 = vpack.c.bf16 %v72, %v70
  %v125 = vpack.c.bf16 %v82, %v80
  %v126 = vpack.c.bf16 %v92, %v90
  %v127 = vpack.c.bf16 %v57, %v50
  %v128 = vpack.c.bf16 %v102, %v100
  %v129 = vpack.c.bf16 %v111, %v109
  %v130 = vpack.c.bf16 %v120, %v118
  %v131 = vld [vmem:[%s1] sm:$0xf]
  %v132 = vld [vmem:[%s1 + $0x4] sm:$0xf]
  %v133 = vld [vmem:[%s1 + $0x8] sm:$0xf]
  %v134 = vld [vmem:[%s1 + $0xc] sm:$0xf]
  %v135 = vld [vmem:[%s1 + $0x10] sm:$0xf]
  %v136 = vld [vmem:[%s1 + $0x14] sm:$0xf]
  %v137 = vld [vmem:[%s1 + $0x18] sm:$0xf]
  %v138 = vld [vmem:[%s1 + $0x1c] sm:$0xf]
  %v139 = vld [vmem:[%s1 + $0x20] sm:$0xf]
  %v140 = vld [vmem:[%s1 + $0x24] sm:$0xf]
  %v141 = vld [vmem:[%s1 + $0x28] sm:$0xf]
  %v142 = vld [vmem:[%s1 + $0x2c] sm:$0xf]
  %v143 = vld [vmem:[%s1 + $0x30] sm:$0xf]
  %v144 = vld [vmem:[%s1 + $0x34] sm:$0xf]
  %v145 = vld [vmem:[%s1 + $0x38] sm:$0xf]
  %v146 = vld [vmem:[%s1 + $0x3c] sm:$0xf]
  %v147 = vld [vmem:[%s1 + $0x40] sm:$0xf]
  %v148 = vld [vmem:[%s1 + $0x44] sm:$0xf]
  %v149 = vld [vmem:[%s1 + $0x48] sm:$0xf]
  %v150 = vld [vmem:[%s1 + $0x4c] sm:$0xf]
  %v151 = vld [vmem:[%s1 + $0x50] sm:$0xf]
  %v152 = vld [vmem:[%s1 + $0x54] sm:$0xf]
  %v153 = vld [vmem:[%s1 + $0x58] sm:$0xf]
  %v154 = vld [vmem:[%s1 + $0x5c] sm:$0xf]
  %v155 = vld [vmem:[%s1 + $0x60] sm:$0xf]
  %v156 = vld [vmem:[%s1 + $0x64] sm:$0xf]
  %v157 = vld [vmem:[%s1 + $0x68] sm:$0xf]
  %v158 = vld [vmem:[%s1 + $0x6c] sm:$0xf]
  %v159 = vld [vmem:[%s1 + $0x70] sm:$0xf]
  %v160 = vld [vmem:[%s1 + $0x74] sm:$0xf]
  %v161 = vld [vmem:[%s1 + $0x78] sm:$0xf]
  %v162 = vld [vmem:[%s1 + $0x7c] sm:$0xf]
  %v163 = vld [vmem:[%s1 + $0x80] sm:$0xf]
  %v164 = vld [vmem:[%s1 + $0x84] sm:$0xf]
  %v165 = vld [vmem:[%s1 + $0x88] sm:$0xf]
  %v166 = vld [vmem:[%s1 + $0x8c] sm:$0xf]
  %v167 = vld [vmem:[%s1 + $0x90] sm:$0xf]
  %v168 = vld [vmem:[%s1 + $0x94] sm:$0xf]
  %v169 = vld [vmem:[%s1 + $0x98] sm:$0xf]
  %v170 = vld [vmem:[%s1 + $0x9c] sm:$0xf]
  %v171 = vld [vmem:[%s1 + $0xa0] sm:$0xf]
  %v172 = vld [vmem:[%s1 + $0xa4] sm:$0xf]
  %v173 = vld [vmem:[%s1 + $0xa8] sm:$0xf]
  %v174 = vld [vmem:[%s1 + $0xac] sm:$0xf]
  %v175 = vld [vmem:[%s1 + $0xb0] sm:$0xf]
  %v176 = vld [vmem:[%s1 + $0xb4] sm:$0xf]
  %v177 = vld [vmem:[%s1 + $0xb8] sm:$0xf]
  %v178 = vld [vmem:[%s1 + $0xbc] sm:$0xf]
  %v179 = vld [vmem:[%s1 + $0xc0] sm:$0xf]
  %v180 = vld [vmem:[%s1 + $0xc4] sm:$0xf]
  %v181 = vld [vmem:[%s1 + $0xc8] sm:$0xf]
  %v182 = vld [vmem:[%s1 + $0xcc] sm:$0xf]
  %v183 = vld [vmem:[%s1 + $0xd0] sm:$0xf]
  %v184 = vld [vmem:[%s1 + $0xd4] sm:$0xf]
  %v185 = vld [vmem:[%s1 + $0xd8] sm:$0xf]
  %v186 = vld [vmem:[%s1 + $0xdc] sm:$0xf]
  %v187 = vld [vmem:[%s1 + $0xe0] sm:$0xf]
  %v188 = vld [vmem:[%s1 + $0xe4] sm:$0xf]
  %v189 = vld [vmem:[%s1 + $0xe8] sm:$0xf]
  %v190 = vld [vmem:[%s1 + $0xec] sm:$0xf]
  %v191 = vld [vmem:[%s1 + $0xf0] sm:$0xf]
  %v192 = vld [vmem:[%s1 + $0xf4] sm:$0xf]
  %v193 = vld [vmem:[%s1 + $0xf8] sm:$0xf]
  %v194 = vld [vmem:[%s1 + $0xfc] sm:$0xf]
  %v195 = vld [vmem:[%s1 + $0x100] sm:$0xf]
  %v196 = vld [vmem:[%s1 + $0x104] sm:$0xf]
  %v197 = vld [vmem:[%s1 + $0x108] sm:$0xf]
  %v198 = vld [vmem:[%s1 + $0x10c] sm:$0xf]
  %v199 = vld [vmem:[%s1 + $0x110] sm:$0xf]
  %v200 = vld [vmem:[%s1 + $0x114] sm:$0xf]
  %v201 = vld [vmem:[%s1 + $0x118] sm:$0xf]
  %v202 = vld [vmem:[%s1 + $0x11c] sm:$0xf]
  %v203 = vld [vmem:[%s1 + $0x120] sm:$0xf]
  %v204 = vld [vmem:[%s1 + $0x124] sm:$0xf]
  %v205 = vld [vmem:[%s1 + $0x128] sm:$0xf]
  %v206 = vld [vmem:[%s1 + $0x12c] sm:$0xf]
  %v207 = vld [vmem:[%s1 + $0x130] sm:$0xf]
  %v208 = vld [vmem:[%s1 + $0x134] sm:$0xf]
  %v209 = vld [vmem:[%s1 + $0x138] sm:$0xf]
  %v210 = vld [vmem:[%s1 + $0x13c] sm:$0xf]
  %v211 = vld [vmem:[%s1 + $0x140] sm:$0xf]
  %v212 = vld [vmem:[%s1 + $0x144] sm:$0xf]
  %v213 = vld [vmem:[%s1 + $0x148] sm:$0xf]
  %v214 = vld [vmem:[%s1 + $0x14c] sm:$0xf]
  %v215 = vld [vmem:[%s1 + $0x150] sm:$0xf]
  %v216 = vld [vmem:[%s1 + $0x154] sm:$0xf]
  %v217 = vld [vmem:[%s1 + $0x158] sm:$0xf]
  %v218 = vld [vmem:[%s1 + $0x15c] sm:$0xf]
  %v219 = vld [vmem:[%s1 + $0x160] sm:$0xf]
  %v220 = vld [vmem:[%s1 + $0x164] sm:$0xf]
  %v221 = vld [vmem:[%s1 + $0x168] sm:$0xf]
  %v222 = vld [vmem:[%s1 + $0x16c] sm:$0xf]
  %v223 = vld [vmem:[%s1 + $0x170] sm:$0xf]
  %v224 = vld [vmem:[%s1 + $0x174] sm:$0xf]
  %v225 = vld [vmem:[%s1 + $0x178] sm:$0xf]
  %v226 = vld [vmem:[%s1 + $0x17c] sm:$0xf]
  %v227 = vld [vmem:[%s1 + $0x180] sm:$0xf]
  %v228 = vld [vmem:[%s1 + $0x184] sm:$0xf]
  %v229 = vld [vmem:[%s1 + $0x188] sm:$0xf]
  %v230 = vld [vmem:[%s1 + $0x18c] sm:$0xf]
  %v231 = vld [vmem:[%s1 + $0x190] sm:$0xf]
  %v232 = vld [vmem:[%s1 + $0x194] sm:$0xf]
  %v233 = vld [vmem:[%s1 + $0x198] sm:$0xf]
  %v234 = vld [vmem:[%s1 + $0x19c] sm:$0xf]
  %v235 = vld [vmem:[%s1 + $0x1a0] sm:$0xf]
  %v236 = vld [vmem:[%s1 + $0x1a4] sm:$0xf]
  %v237 = vld [vmem:[%s1 + $0x1a8] sm:$0xf]
  %v238 = vld [vmem:[%s1 + $0x1ac] sm:$0xf]
  %v239 = vld [vmem:[%s1 + $0x1b0] sm:$0xf]
  %v240 = vld [vmem:[%s1 + $0x1b4] sm:$0xf]
  %v241 = vld [vmem:[%s1 + $0x1b8] sm:$0xf]
  %v242 = vld [vmem:[%s1 + $0x1bc] sm:$0xf]
  %v243 = vld [vmem:[%s1 + $0x1c0] sm:$0xf]
  %v244 = vld [vmem:[%s1 + $0x1c4] sm:$0xf]
  %v245 = vld [vmem:[%s1 + $0x1c8] sm:$0xf]
  %v246 = vld [vmem:[%s1 + $0x1cc] sm:$0xf]
  %v247 = vld [vmem:[%s1 + $0x1d0] sm:$0xf]
  %v248 = vld [vmem:[%s1 + $0x1d4] sm:$0xf]
  %v249 = vld [vmem:[%s1 + $0x1d8] sm:$0xf]
  %v250 = vld [vmem:[%s1 + $0x1dc] sm:$0xf]
  %v251 = vld [vmem:[%s1 + $0x1e0] sm:$0xf]
  %v252 = vld [vmem:[%s1 + $0x1e4] sm:$0xf]
  %v253 = vld [vmem:[%s1 + $0x1e8] sm:$0xf]
  %v254 = vld [vmem:[%s1 + $0x1ec] sm:$0xf]
  %v255 = vld [vmem:[%s1 + $0x1f0] sm:$0xf]
  %v256 = vld [vmem:[%s1 + $0x1f4] sm:$0xf]
  %v257 = vld [vmem:[%s1 + $0x1f8] sm:$0xf]
  %v258 = vld [vmem:[%s1 + $0x1fc] sm:$0xf]
  %v259 = vld [vmem:[%s2] sm:$0x1]
  %v261 = vlaneseq
  %v262 = vshrl.u32 %v261, 7
  %v263 = vsub.s32 0, %v262
  %v264 = vrot.slane %v259, %v263
  %v394 = vunpack.c.l.b16 %v131
  %v395 = vunpack.c.l.b16 %v132
  %v396 = vunpack.c.l.b16 %v133
  %v397 = vunpack.c.l.b16 %v134
  %v398 = vunpack.c.l.b16 %v135
  %v399 = vunpack.c.l.b16 %v136
  %v400 = vunpack.c.l.b16 %v137
  %v401 = vunpack.c.l.b16 %v138
  %v402 = vunpack.c.l.b16 %v139
  %v403 = vunpack.c.l.b16 %v140
  %v404 = vunpack.c.l.b16 %v141
  %v405 = vunpack.c.l.b16 %v142
  %v406 = vunpack.c.l.b16 %v143
  %v407 = vunpack.c.l.b16 %v144
  %v408 = vunpack.c.l.b16 %v145
  %v409 = vunpack.c.l.b16 %v146
  %v410 = vunpack.c.l.b16 %v147
  %v411 = vunpack.c.l.b16 %v148
  %v412 = vunpack.c.l.b16 %v149
  %v413 = vunpack.c.l.b16 %v150
  %v414 = vunpack.c.l.b16 %v151
  %v415 = vunpack.c.l.b16 %v152
  %v416 = vunpack.c.l.b16 %v153
  %v417 = vunpack.c.l.b16 %v154
  %v418 = vunpack.c.l.b16 %v155
  %v419 = vunpack.c.l.b16 %v156
  %v420 = vunpack.c.l.b16 %v157
  %v421 = vunpack.c.l.b16 %v158
  %v422 = vunpack.c.l.b16 %v159
  %v423 = vunpack.c.l.b16 %v160
  %v424 = vunpack.c.l.b16 %v161
  %v425 = vunpack.c.l.b16 %v162
  %v426 = vunpack.c.l.b16 %v163
  %v427 = vunpack.c.l.b16 %v164
  %v428 = vunpack.c.l.b16 %v165
  %v429 = vunpack.c.l.b16 %v166
  %v430 = vunpack.c.l.b16 %v167
  %v431 = vunpack.c.l.b16 %v168
  %v432 = vunpack.c.l.b16 %v169
  %v433 = vunpack.c.l.b16 %v170
  %v434 = vunpack.c.l.b16 %v171
  %v435 = vunpack.c.l.b16 %v172
  %v436 = vunpack.c.l.b16 %v173
  %v437 = vunpack.c.l.b16 %v174
  %v438 = vunpack.c.l.b16 %v175
  %v439 = vunpack.c.l.b16 %v176
  %v440 = vunpack.c.l.b16 %v177
  %v441 = vunpack.c.l.b16 %v178
  %v442 = vunpack.c.l.b16 %v179
  %v443 = vunpack.c.l.b16 %v180
  %v444 = vunpack.c.l.b16 %v181
  %v445 = vunpack.c.l.b16 %v182
  %v446 = vunpack.c.l.b16 %v183
  %v447 = vunpack.c.l.b16 %v184
  %v448 = vunpack.c.l.b16 %v185
  %v449 = vunpack.c.l.b16 %v186
  %v450 = vunpack.c.l.b16 %v187
  %v451 = vunpack.c.l.b16 %v188
  %v452 = vunpack.c.l.b16 %v189
  %v453 = vunpack.c.l.b16 %v190
  %v454 = vunpack.c.l.b16 %v191
  %v455 = vunpack.c.l.b16 %v192
  %v456 = vunpack.c.l.b16 %v193
  %v457 = vunpack.c.l.b16 %v194
  %v458 = vunpack.c.l.b16 %v195
  %v459 = vunpack.c.l.b16 %v196
  %v460 = vunpack.c.l.b16 %v197
  %v461 = vunpack.c.l.b16 %v198
  %v462 = vunpack.c.l.b16 %v199
  %v463 = vunpack.c.l.b16 %v200
  %v464 = vunpack.c.l.b16 %v201
  %v465 = vunpack.c.l.b16 %v202
  %v466 = vunpack.c.l.b16 %v203
  %v467 = vunpack.c.l.b16 %v204
  %v468 = vunpack.c.l.b16 %v205
  %v469 = vunpack.c.l.b16 %v206
  %v470 = vunpack.c.l.b16 %v207
  %v471 = vunpack.c.l.b16 %v208
  %v472 = vunpack.c.l.b16 %v209
  %v473 = vunpack.c.l.b16 %v210
  %v474 = vunpack.c.l.b16 %v211
  %v475 = vunpack.c.l.b16 %v212
  %v476 = vunpack.c.l.b16 %v213
  %v477 = vunpack.c.l.b16 %v214
  %v478 = vunpack.c.l.b16 %v215
  %v479 = vunpack.c.l.b16 %v216
  %v480 = vunpack.c.l.b16 %v217
  %v481 = vunpack.c.l.b16 %v218
  %v482 = vunpack.c.l.b16 %v219
  %v483 = vunpack.c.l.b16 %v220
  %v484 = vunpack.c.l.b16 %v221
  %v485 = vunpack.c.l.b16 %v222
  %v486 = vunpack.c.l.b16 %v223
  %v487 = vunpack.c.l.b16 %v224
  %v488 = vunpack.c.l.b16 %v225
  %v489 = vunpack.c.l.b16 %v226
  %v490 = vunpack.c.l.b16 %v227
  %v491 = vunpack.c.l.b16 %v228
  %v492 = vunpack.c.l.b16 %v229
  %v493 = vunpack.c.l.b16 %v230
  %v494 = vunpack.c.l.b16 %v231
  %v495 = vunpack.c.l.b16 %v232
  %v496 = vunpack.c.l.b16 %v233
  %v497 = vunpack.c.l.b16 %v234
  %v498 = vunpack.c.l.b16 %v235
  %v499 = vunpack.c.l.b16 %v236
  %v500 = vunpack.c.l.b16 %v237
  %v501 = vunpack.c.l.b16 %v238
  %v502 = vunpack.c.l.b16 %v239
  %v503 = vunpack.c.l.b16 %v240
  %v504 = vunpack.c.l.b16 %v241
  %v505 = vunpack.c.l.b16 %v242
  %v506 = vunpack.c.l.b16 %v243
  %v507 = vunpack.c.l.b16 %v244
  %v508 = vunpack.c.l.b16 %v245
  %v509 = vunpack.c.l.b16 %v246
  %v510 = vunpack.c.l.b16 %v247
  %v511 = vunpack.c.l.b16 %v248
  %v512 = vunpack.c.l.b16 %v249
  %v513 = vunpack.c.l.b16 %v250
  %v514 = vunpack.c.l.b16 %v251
  %v515 = vunpack.c.l.b16 %v252
  %v516 = vunpack.c.l.b16 %v253
  %v517 = vunpack.c.l.b16 %v254
  %v518 = vunpack.c.l.b16 %v255
  %v519 = vunpack.c.l.b16 %v256
  %v520 = vunpack.c.l.b16 %v257
  %v521 = vunpack.c.l.b16 %v258
  %v522 = vpack.c.b16 %v395, %v394
  %v523 = vpack.c.b16 %v397, %v396
  %v524 = vpack.c.b16 %v399, %v398
  %v525 = vpack.c.b16 %v401, %v400
  %v526 = vpack.c.b16 %v403, %v402
  %v527 = vpack.c.b16 %v405, %v404
  %v528 = vpack.c.b16 %v407, %v406
  %v529 = vpack.c.b16 %v409, %v408
  %v530 = vpack.c.b16 %v411, %v410
  %v531 = vpack.c.b16 %v413, %v412
  %v532 = vpack.c.b16 %v415, %v414
  %v533 = vpack.c.b16 %v417, %v416
  %v534 = vpack.c.b16 %v419, %v418
  %v535 = vpack.c.b16 %v421, %v420
  %v536 = vpack.c.b16 %v423, %v422
  %v537 = vpack.c.b16 %v425, %v424
  %v538 = vpack.c.b16 %v427, %v426
  %v539 = vpack.c.b16 %v429, %v428
  %v540 = vpack.c.b16 %v431, %v430
  %v541 = vpack.c.b16 %v433, %v432
  %v542 = vpack.c.b16 %v435, %v434
  %v543 = vpack.c.b16 %v437, %v436
  %v544 = vpack.c.b16 %v439, %v438
  %v545 = vpack.c.b16 %v441, %v440
  %v546 = vpack.c.b16 %v443, %v442
  %v547 = vpack.c.b16 %v445, %v444
  %v548 = vpack.c.b16 %v447, %v446
  %v549 = vpack.c.b16 %v449, %v448
  %v550 = vpack.c.b16 %v451, %v450
  %v551 = vpack.c.b16 %v453, %v452
  %v552 = vpack.c.b16 %v455, %v454
  %v553 = vpack.c.b16 %v457, %v456
  %v554 = vpack.c.b16 %v459, %v458
  %v555 = vpack.c.b16 %v461, %v460
  %v556 = vpack.c.b16 %v463, %v462
  %v557 = vpack.c.b16 %v465, %v464
  %v558 = vpack.c.b16 %v467, %v466
  %v559 = vpack.c.b16 %v469, %v468
  %v560 = vpack.c.b16 %v471, %v470
  %v561 = vpack.c.b16 %v473, %v472
  %v562 = vpack.c.b16 %v475, %v474
  %v563 = vpack.c.b16 %v477, %v476
  %v564 = vpack.c.b16 %v479, %v478
  %v565 = vpack.c.b16 %v481, %v480
  %v566 = vpack.c.b16 %v483, %v482
  %v567 = vpack.c.b16 %v485, %v484
  %v568 = vpack.c.b16 %v487, %v486
  %v569 = vpack.c.b16 %v489, %v488
  %v570 = vpack.c.b16 %v491, %v490
  %v571 = vpack.c.b16 %v493, %v492
  %v572 = vpack.c.b16 %v495, %v494
  %v573 = vpack.c.b16 %v497, %v496
  %v574 = vpack.c.b16 %v499, %v498
  %v575 = vpack.c.b16 %v501, %v500
  %v576 = vpack.c.b16 %v503, %v502
  %v577 = vpack.c.b16 %v505, %v504
  %v578 = vpack.c.b16 %v507, %v506
  %v579 = vpack.c.b16 %v509, %v508
  %v580 = vpack.c.b16 %v511, %v510
  %v581 = vpack.c.b16 %v513, %v512
  %v582 = vpack.c.b16 %v515, %v514
  %v583 = vpack.c.b16 %v517, %v516
  %v584 = vpack.c.b16 %v519, %v518
  %v585 = vpack.c.b16 %v521, %v520
  %650 = vmatprep.subr.bf16.mxu0 0
  %651 = vmatpush1.bf16.msra.mxu0 %v522
  %652 = vmatprep.subr.bf16.mxu0 0
  %653 = vmatpush1.bf16.msra.mxu0 %v523
  %654 = vmatprep.subr.bf16.mxu0 0
  %655 = vmatpush1.bf16.msra.mxu0 %v524
  %656 = vmatprep.subr.bf16.mxu0 0
  %657 = vmatpush1.bf16.msra.mxu0 %v525
  %658 = vmatprep.subr.bf16.mxu0 0
  %659 = vmatpush1.bf16.msra.mxu0 %v526
  %660 = vmatprep.subr.bf16.mxu0 0
  %661 = vmatpush1.bf16.msra.mxu0 %v527
  %662 = vmatprep.subr.bf16.mxu0 0
  %663 = vmatpush1.bf16.msra.mxu0 %v528
  %664 = vmatprep.subr.bf16.mxu0 0
  %665 = vmatpush1.bf16.msra.mxu0 %v529
  %666 = vmatprep.subr.bf16.mxu0 0
  %667 = vmatpush1.bf16.msra.mxu0 %v530
  %668 = vmatprep.subr.bf16.mxu0 0
  %669 = vmatpush1.bf16.msra.mxu0 %v531
  %670 = vmatprep.subr.bf16.mxu0 0
  %671 = vmatpush1.bf16.msra.mxu0 %v532
  %672 = vmatprep.subr.bf16.mxu0 0
  %673 = vmatpush1.bf16.msra.mxu0 %v533
  %674 = vmatprep.subr.bf16.mxu0 0
  %675 = vmatpush1.bf16.msra.mxu0 %v534
  %676 = vmatprep.subr.bf16.mxu0 0
  %677 = vmatpush1.bf16.msra.mxu0 %v535
  %678 = vmatprep.subr.bf16.mxu0 0
  %679 = vmatpush1.bf16.msra.mxu0 %v536
  %680 = vmatprep.subr.bf16.mxu0 0
  %681 = vmatpush1.bf16.msra.mxu0 %v537
  %682 = vmatprep.mubr.bf16.mxu0 %v124
  %683 = vmatmul.mubr.bf16.gmra.mrb[0].mxu0 %v123
  %v684 = vpop.f32.mrb[0].mxu0
  %v685 = vadd.f32 %v264, %v684
  %v686 = vpop.f32.mrb[0].mxu0
  %v687 = vpop.f32.mrb[0].mxu0
  %v688 = vadd.f32 %v264, %v687
  %v689 = vpop.f32.mrb[0].mxu0
  %690 = vdwg.mxu0
  %691 = vmatprep.subr.bf16.mxu0 0
  %692 = vmatpush1.bf16.msra.mxu0 %v538
  %693 = vmatprep.subr.bf16.mxu0 0
  %694 = vmatpush1.bf16.msra.mxu0 %v539
  %695 = vmatprep.subr.bf16.mxu0 0
  %696 = vmatpush1.bf16.msra.mxu0 %v540
  %697 = vmatprep.subr.bf16.mxu0 0
  %698 = vmatpush1.bf16.msra.mxu0 %v541
  %699 = vmatprep.subr.bf16.mxu0 0
  %700 = vmatpush1.bf16.msra.mxu0 %v542
  %701 = vmatprep.subr.bf16.mxu0 0
  %702 = vmatpush1.bf16.msra.mxu0 %v543
  %703 = vmatprep.subr.bf16.mxu0 0
  %704 = vmatpush1.bf16.msra.mxu0 %v544
  %705 = vmatprep.subr.bf16.mxu0 0
  %706 = vmatpush1.bf16.msra.mxu0 %v545
  %707 = vmatprep.subr.bf16.mxu0 0
  %708 = vmatpush1.bf16.msra.mxu0 %v546
  %709 = vmatprep.subr.bf16.mxu0 0
  %710 = vmatpush1.bf16.msra.mxu0 %v547
  %711 = vmatprep.subr.bf16.mxu0 0
  %712 = vmatpush1.bf16.msra.mxu0 %v548
  %713 = vmatprep.subr.bf16.mxu0 0
  %714 = vmatpush1.bf16.msra.mxu0 %v549
  %715 = vmatprep.subr.bf16.mxu0 0
  %716 = vmatpush1.bf16.msra.mxu0 %v550
  %717 = vmatprep.subr.bf16.mxu0 0
  %718 = vmatpush1.bf16.msra.mxu0 %v551
  %719 = vmatprep.subr.bf16.mxu0 0
  %720 = vmatpush1.bf16.msra.mxu0 %v552
  %721 = vmatprep.subr.bf16.mxu0 0
  %722 = vmatpush1.bf16.msra.mxu0 %v553
  %723 = vmatprep.mubr.bf16.mxu0 %v126
  %724 = vmatmul.mubr.bf16.gmra.mrb[0].mxu0 %v125
  %v725 = vpop.f32.mrb[0].mxu0
  %v726 = vadd.f32 %v685, %v725
  %v727 = vpop.f32.mrb[0].mxu0
  %v728 = vpop.f32.mrb[0].mxu0
  %v729 = vadd.f32 %v688, %v728
  %v730 = vpop.f32.mrb[0].mxu0
  %731 = vdwg.mxu0
  %732 = vmatprep.subr.bf16.mxu0 0
  %733 = vmatpush1.bf16.msra.mxu0 %v554
  %734 = vmatprep.subr.bf16.mxu0 0
  %735 = vmatpush1.bf16.msra.mxu0 %v555
  %736 = vmatprep.subr.bf16.mxu0 0
  %737 = vmatpush1.bf16.msra.mxu0 %v556
  %738 = vmatprep.subr.bf16.mxu0 0
  %739 = vmatpush1.bf16.msra.mxu0 %v557
  %740 = vmatprep.subr.bf16.mxu0 0
  %741 = vmatpush1.bf16.msra.mxu0 %v558
  %742 = vmatprep.subr.bf16.mxu0 0
  %743 = vmatpush1.bf16.msra.mxu0 %v559
  %744 = vmatprep.subr.bf16.mxu0 0
  %745 = vmatpush1.bf16.msra.mxu0 %v560
  %746 = vmatprep.subr.bf16.mxu0 0
  %747 = vmatpush1.bf16.msra.mxu0 %v561
  %748 = vmatprep.subr.bf16.mxu0 0
  %749 = vmatpush1.bf16.msra.mxu0 %v562
  %750 = vmatprep.subr.bf16.mxu0 0
  %751 = vmatpush1.bf16.msra.mxu0 %v563
  %752 = vmatprep.subr.bf16.mxu0 0
  %753 = vmatpush1.bf16.msra.mxu0 %v564
  %754 = vmatprep.subr.bf16.mxu0 0
  %755 = vmatpush1.bf16.msra.mxu0 %v565
  %756 = vmatprep.subr.bf16.mxu0 0
  %757 = vmatpush1.bf16.msra.mxu0 %v566
  %758 = vmatprep.subr.bf16.mxu0 0
  %759 = vmatpush1.bf16.msra.mxu0 %v567
  %760 = vmatprep.subr.bf16.mxu0 0
  %761 = vmatpush1.bf16.msra.mxu0 %v568
  %762 = vmatprep.subr.bf16.mxu0 0
  %763 = vmatpush1.bf16.msra.mxu0 %v569
  %764 = vmatprep.mubr.bf16.mxu0 %v128
  %765 = vmatmul.mubr.bf16.gmra.mrb[0].mxu0 %v127
  %v766 = vpop.f32.mrb[0].mxu0
  %v767 = vadd.f32 %v726, %v766
  %v768 = vpop.f32.mrb[0].mxu0
  %v769 = vpop.f32.mrb[0].mxu0
  %v770 = vadd.f32 %v729, %v769
  %v771 = vpop.f32.mrb[0].mxu0
  %772 = vdwg.mxu0
  %773 = vmatprep.subr.bf16.mxu0 0
  %774 = vmatpush1.bf16.msra.mxu0 %v570
  %775 = vmatprep.subr.bf16.mxu0 0
  %776 = vmatpush1.bf16.msra.mxu0 %v571
  %777 = vmatprep.subr.bf16.mxu0 0
  %778 = vmatpush1.bf16.msra.mxu0 %v572
  %779 = vmatprep.subr.bf16.mxu0 0
  %780 = vmatpush1.bf16.msra.mxu0 %v573
  %781 = vmatprep.subr.bf16.mxu0 0
  %782 = vmatpush1.bf16.msra.mxu0 %v574
  %783 = vmatprep.subr.bf16.mxu0 0
  %784 = vmatpush1.bf16.msra.mxu0 %v575
  %785 = vmatprep.subr.bf16.mxu0 0
  %786 = vmatpush1.bf16.msra.mxu0 %v576
  %787 = vmatprep.subr.bf16.mxu0 0
  %788 = vmatpush1.bf16.msra.mxu0 %v577
  %789 = vmatprep.subr.bf16.mxu0 0
  %790 = vmatpush1.bf16.msra.mxu0 %v578
  %791 = vmatprep.subr.bf16.mxu0 0
  %792 = vmatpush1.bf16.msra.mxu0 %v579
  %793 = vmatprep.subr.bf16.mxu0 0
  %794 = vmatpush1.bf16.msra.mxu0 %v580
  %795 = vmatprep.subr.bf16.mxu0 0
  %796 = vmatpush1.bf16.msra.mxu0 %v581
  %797 = vmatprep.subr.bf16.mxu0 0
  %798 = vmatpush1.bf16.msra.mxu0 %v582
  %799 = vmatprep.subr.bf16.mxu0 0
  %800 = vmatpush1.bf16.msra.mxu0 %v583
  %801 = vmatprep.subr.bf16.mxu0 0
  %802 = vmatpush1.bf16.msra.mxu0 %v584
  %803 = vmatprep.subr.bf16.mxu0 0
  %804 = vmatpush1.bf16.msra.mxu0 %v585
  %805 = vmatprep.mubr.bf16.mxu0 %v130
  %806 = vmatmul.mubr.bf16.gmra.mrb[0].mxu0 %v129
  %v807 = vpop.f32.mrb[0].mxu0
  %v808 = vadd.f32 %v767, %v807
  %v809 = vpop.f32.mrb[0].mxu0
  %v810 = vpop.f32.mrb[0].mxu0
  %v811 = vadd.f32 %v770, %v810
  %v812 = vpop.f32.mrb[0].mxu0
  %813 = vdwg.mxu0
  %v814 = vmax.f32 %v808, 0.0
  %v815 = vmax.f32 %v811, 0.0
  %vm818 = vcmask 1046528
  %v819 = vrot.slane %v814, 1
  %v820 = vrot.slane %v815, 1
  %v821 = vsel %vm818, %v819, %v820
  %825 = vst [vmem:[#allocation2] sm:$0x80] %v819
  %826 = vst [vmem:[#allocation2 + $0x10] sm:$0xff] %v821
  %827 = vst [vmem:[#allocation2 + $0x20] sm:$0x7f] %v820
  %v828 = vld [vmem:[#allocation2] sm:$0xff]
  %v829 = vld [vmem:[#allocation2 + $0x10] sm:$0xff]
  %v830 = vld [vmem:[#allocation2] sm:$0xfc]
  %v831 = vld [vmem:[#allocation2 + $0x20] sm:$0x3]
  %v832 = vld [vmem:[#allocation2] sm:$0xf0]
  %v833 = vld [vmem:[#allocation2 + $0x20] sm:$0xf]
  %v834 = vld [vmem:[#allocation2] sm:$0xc0]
  %v835 = vld [vmem:[#allocation2 + $0x20] sm:$0x3f]
  %v836 = vld [vmem:[#allocation2 + $0x20] sm:$0xff]
  %v837 = vld [vmem:[#allocation2 + $0x10] sm:$0xfc]
  %v838 = vld [vmem:[#allocation2 + $0x30] sm:$0x3]
  %v839 = vld [vmem:[#allocation2 + $0x10] sm:$0xf0]
  %v840 = vld [vmem:[#allocation2 + $0x30] sm:$0xf]
  %v841 = vld [vmem:[#allocation2 + $0x10] sm:$0xc0]
  %v842 = vld [vmem:[#allocation2 + $0x30] sm:$0x3f]
  %v846 = vrot.slane %v830, 2
  %v847 = vrot.slane %v829, 2
  %v848 = vsel %vm67, %v846, %v847
  %v849 = vrot.slane %v831, 2
  %v850 = vsel %vm67, %v847, %v849
  %v855 = vrot.slane %v832, 4
  %v856 = vrot.slane %v829, 4
  %v857 = vsel %vm77, %v855, %v856
  %v858 = vrot.slane %v833, 4
  %v859 = vsel %vm77, %v856, %v858
  %v864 = vrot.slane %v834, 6
  %v865 = vrot.slane %v829, 6
  %v866 = vsel %vm87, %v864, %v865
  %v867 = vrot.slane %v835, 6
  %v868 = vsel %vm87, %v865, %v867
  %v874 = vrot.slane %v837, 2
  %v875 = vrot.slane %v836, 2
  %v876 = vsel %vm67, %v874, %v875
  %v877 = vrot.slane %v838, 2
  %v878 = vsel %vm67, %v875, %v877
  %v883 = vrot.slane %v839, 4
  %v884 = vrot.slane %v836, 4
  %v885 = vsel %vm77, %v883, %v884
  %v886 = vrot.slane %v840, 4
  %v887 = vsel %vm77, %v884, %v886
  %v892 = vrot.slane %v841, 6
  %v893 = vrot.slane %v836, 6
  %v894 = vsel %vm87, %v892, %v893
  %v895 = vrot.slane %v842, 6
  %v896 = vsel %vm87, %v893, %v895
  %v899 = vpack.c.bf16 %v829, %v828
  %v900 = vpack.c.bf16 %v850, %v848
  %v901 = vpack.c.bf16 %v859, %v857
  %v902 = vpack.c.bf16 %v868, %v866
  %v903 = vpack.c.bf16 %v836, %v829
  %v904 = vpack.c.bf16 %v878, %v876
  %v905 = vpack.c.bf16 %v887, %v885
  %v906 = vpack.c.bf16 %v896, %v894
  %v907 = vld [vmem:[%s3] sm:$0xf]
  %v908 = vld [vmem:[%s3 + $0x4] sm:$0xf]
  %v909 = vld [vmem:[%s3 + $0x8] sm:$0xf]
  %v910 = vld [vmem:[%s3 + $0xc] sm:$0xf]
  %v911 = vld [vmem:[%s3 + $0x10] sm:$0xf]
  %v912 = vld [vmem:[%s3 + $0x14] sm:$0xf]
  %v913 = vld [vmem:[%s3 + $0x18] sm:$0xf]
  %v914 = vld [vmem:[%s3 + $0x1c] sm:$0xf]
  %v915 = vld [vmem:[%s3 + $0x20] sm:$0xf]
  %v916 = vld [vmem:[%s3 + $0x24] sm:$0xf]
  %v917 = vld [vmem:[%s3 + $0x28] sm:$0xf]
  %v918 = vld [vmem:[%s3 + $0x2c] sm:$0xf]
  %v919 = vld [vmem:[%s3 + $0x30] sm:$0xf]
  %v920 = vld [vmem:[%s3 + $0x34] sm:$0xf]
  %v921 = vld [vmem:[%s3 + $0x38] sm:$0xf]
  %v922 = vld [vmem:[%s3 + $0x3c] sm:$0xf]
  %v923 = vld [vmem:[%s3 + $0x40] sm:$0xf]
  %v924 = vld [vmem:[%s3 + $0x44] sm:$0xf]
  %v925 = vld [vmem:[%s3 + $0x48] sm:$0xf]
  %v926 = vld [vmem:[%s3 + $0x4c] sm:$0xf]
  %v927 = vld [vmem:[%s3 + $0x50] sm:$0xf]
  %v928 = vld [vmem:[%s3 + $0x54] sm:$0xf]
  %v929 = vld [vmem:[%s3 + $0x58] sm:$0xf]
  %v930 = vld [vmem:[%s3 + $0x5c] sm:$0xf]
  %v931 = vld [vmem:[%s3 + $0x60] sm:$0xf]
  %v932 = vld [vmem:[%s3 + $0x64] sm:$0xf]
  %v933 = vld [vmem:[%s3 + $0x68] sm:$0xf]
  %v934 = vld [vmem:[%s3 + $0x6c] sm:$0xf]
  %v935 = vld [vmem:[%s3 + $0x70] sm:$0xf]
  %v936 = vld [vmem:[%s3 + $0x74] sm:$0xf]
  %v937 = vld [vmem:[%s3 + $0x78] sm:$0xf]
  %v938 = vld [vmem:[%s3 + $0x7c] sm:$0xf]
  %v939 = vld [vmem:[%s3 + $0x80] sm:$0xf]
  %v940 = vld [vmem:[%s3 + $0x84] sm:$0xf]
  %v941 = vld [vmem:[%s3 + $0x88] sm:$0xf]
  %v942 = vld [vmem:[%s3 + $0x8c] sm:$0xf]
  %v943 = vld [vmem:[%s3 + $0x90] sm:$0xf]
  %v944 = vld [vmem:[%s3 + $0x94] sm:$0xf]
  %v945 = vld [vmem:[%s3 + $0x98] sm:$0xf]
  %v946 = vld [vmem:[%s3 + $0x9c] sm:$0xf]
  %v947 = vld [vmem:[%s3 + $0xa0] sm:$0xf]
  %v948 = vld [vmem:[%s3 + $0xa4] sm:$0xf]
  %v949 = vld [vmem:[%s3 + $0xa8] sm:$0xf]
  %v950 = vld [vmem:[%s3 + $0xac] sm:$0xf]
  %v951 = vld [vmem:[%s3 + $0xb0] sm:$0xf]
  %v952 = vld [vmem:[%s3 + $0xb4] sm:$0xf]
  %v953 = vld [vmem:[%s3 + $0xb8] sm:$0xf]
  %v954 = vld [vmem:[%s3 + $0xbc] sm:$0xf]
  %v955 = vld [vmem:[%s3 + $0xc0] sm:$0xf]
  %v956 = vld [vmem:[%s3 + $0xc4] sm:$0xf]
  %v957 = vld [vmem:[%s3 + $0xc8] sm:$0xf]
  %v958 = vld [vmem:[%s3 + $0xcc] sm:$0xf]
  %v959 = vld [vmem:[%s3 + $0xd0] sm:$0xf]
  %v960 = vld [vmem:[%s3 + $0xd4] sm:$0xf]
  %v961 = vld [vmem:[%s3 + $0xd8] sm:$0xf]
  %v962 = vld [vmem:[%s3 + $0xdc] sm:$0xf]
  %v963 = vld [vmem:[%s3 + $0xe0] sm:$0xf]
  %v964 = vld [vmem:[%s3 + $0xe4] sm:$0xf]
  %v965 = vld [vmem:[%s3 + $0xe8] sm:$0xf]
  %v966 = vld [vmem:[%s3 + $0xec] sm:$0xf]
  %v967 = vld [vmem:[%s3 + $0xf0] sm:$0xf]
  %v968 = vld [vmem:[%s3 + $0xf4] sm:$0xf]
  %v969 = vld [vmem:[%s3 + $0xf8] sm:$0xf]
  %v970 = vld [vmem:[%s3 + $0xfc] sm:$0xf]
  %v971 = vld [vmem:[%s3 + $0x100] sm:$0xf]
  %v972 = vld [vmem:[%s3 + $0x104] sm:$0xf]
  %v973 = vld [vmem:[%s3 + $0x108] sm:$0xf]
  %v974 = vld [vmem:[%s3 + $0x10c] sm:$0xf]
  %v975 = vld [vmem:[%s3 + $0x110] sm:$0xf]
  %v976 = vld [vmem:[%s3 + $0x114] sm:$0xf]
  %v977 = vld [vmem:[%s3 + $0x118] sm:$0xf]
  %v978 = vld [vmem:[%s3 + $0x11c] sm:$0xf]
  %v979 = vld [vmem:[%s3 + $0x120] sm:$0xf]
  %v980 = vld [vmem:[%s3 + $0x124] sm:$0xf]
  %v981 = vld [vmem:[%s3 + $0x128] sm:$0xf]
  %v982 = vld [vmem:[%s3 + $0x12c] sm:$0xf]
  %v983 = vld [vmem:[%s3 + $0x130] sm:$0xf]
  %v984 = vld [vmem:[%s3 + $0x134] sm:$0xf]
  %v985 = vld [vmem:[%s3 + $0x138] sm:$0xf]
  %v986 = vld [vmem:[%s3 + $0x13c] sm:$0xf]
  %v987 = vld [vmem:[%s3 + $0x140] sm:$0xf]
  %v988 = vld [vmem:[%s3 + $0x144] sm:$0xf]
  %v989 = vld [vmem:[%s3 + $0x148] sm:$0xf]
  %v990 = vld [vmem:[%s3 + $0x14c] sm:$0xf]
  %v991 = vld [vmem:[%s3 + $0x150] sm:$0xf]
  %v992 = vld [vmem:[%s3 + $0x154] sm:$0xf]
  %v993 = vld [vmem:[%s3 + $0x158] sm:$0xf]
  %v994 = vld [vmem:[%s3 + $0x15c] sm:$0xf]
  %v995 = vld [vmem:[%s3 + $0x160] sm:$0xf]
  %v996 = vld [vmem:[%s3 + $0x164] sm:$0xf]
  %v997 = vld [vmem:[%s3 + $0x168] sm:$0xf]
  %v998 = vld [vmem:[%s3 + $0x16c] sm:$0xf]
  %v999 = vld [vmem:[%s3 + $0x170] sm:$0xf]
  %v1000 = vld [vmem:[%s3 + $0x174] sm:$0xf]
  %v1001 = vld [vmem:[%s3 + $0x178] sm:$0xf]
  %v1002 = vld [vmem:[%s3 + $0x17c] sm:$0xf]
  %v1003 = vld [vmem:[%s3 + $0x180] sm:$0xf]
  %v1004 = vld [vmem:[%s3 + $0x184] sm:$0xf]
  %v1005 = vld [vmem:[%s3 + $0x188] sm:$0xf]
  %v1006 = vld [vmem:[%s3 + $0x18c] sm:$0xf]
  %v1007 = vld [vmem:[%s3 + $0x190] sm:$0xf]
  %v1008 = vld [vmem:[%s3 + $0x194] sm:$0xf]
  %v1009 = vld [vmem:[%s3 + $0x198] sm:$0xf]
  %v1010 = vld [vmem:[%s3 + $0x19c] sm:$0xf]
  %v1011 = vld [vmem:[%s3 + $0x1a0] sm:$0xf]
  %v1012 = vld [vmem:[%s3 + $0x1a4] sm:$0xf]
  %v1013 = vld [vmem:[%s3 + $0x1a8] sm:$0xf]
  %v1014 = vld [vmem:[%s3 + $0x1ac] sm:$0xf]
  %v1015 = vld [vmem:[%s3 + $0x1b0] sm:$0xf]
  %v1016 = vld [vmem:[%s3 + $0x1b4] sm:$0xf]
  %v1017 = vld [vmem:[%s3 + $0x1b8] sm:$0xf]
  %v1018 = vld [vmem:[%s3 + $0x1bc] sm:$0xf]
  %v1019 = vld [vmem:[%s3 + $0x1c0] sm:$0xf]
  %v1020 = vld [vmem:[%s3 + $0x1c4] sm:$0xf]
  %v1021 = vld [vmem:[%s3 + $0x1c8] sm:$0xf]
  %v1022 = vld [vmem:[%s3 + $0x1cc] sm:$0xf]
  %v1023 = vld [vmem:[%s3 + $0x1d0] sm:$0xf]
  %v1024 = vld [vmem:[%s3 + $0x1d4] sm:$0xf]
  %v1025 = vld [vmem:[%s3 + $0x1d8] sm:$0xf]
  %v1026 = vld [vmem:[%s3 + $0x1dc] sm:$0xf]
  %v1027 = vld [vmem:[%s3 + $0x1e0] sm:$0xf]
  %v1028 = vld [vmem:[%s3 + $0x1e4] sm:$0xf]
  %v1029 = vld [vmem:[%s3 + $0x1e8] sm:$0xf]
  %v1030 = vld [vmem:[%s3 + $0x1ec] sm:$0xf]
  %v1031 = vld [vmem:[%s3 + $0x1f0] sm:$0xf]
  %v1032 = vld [vmem:[%s3 + $0x1f4] sm:$0xf]
  %v1033 = vld [vmem:[%s3 + $0x1f8] sm:$0xf]
  %v1034 = vld [vmem:[%s3 + $0x1fc] sm:$0xf]
  %v1035 = vld [vmem:[%s4] sm:$0x1]
  %v1037 = vlaneseq
  %v1038 = vshrl.u32 %v1037, 7
  %v1039 = vsub.s32 0, %v1038
  %v1040 = vrot.slane %v1035, %v1039
  %v1170 = vunpack.c.l.b16 %v907
  %v1171 = vunpack.c.l.b16 %v908
  %v1172 = vunpack.c.l.b16 %v909
  %v1173 = vunpack.c.l.b16 %v910
  %v1174 = vunpack.c.l.b16 %v911
  %v1175 = vunpack.c.l.b16 %v912
  %v1176 = vunpack.c.l.b16 %v913
  %v1177 = vunpack.c.l.b16 %v914
  %v1178 = vunpack.c.l.b16 %v915
  %v1179 = vunpack.c.l.b16 %v916
  %v1180 = vunpack.c.l.b16 %v917
  %v1181 = vunpack.c.l.b16 %v918
  %v1182 = vunpack.c.l.b16 %v919
  %v1183 = vunpack.c.l.b16 %v920
  %v1184 = vunpack.c.l.b16 %v921
  %v1185 = vunpack.c.l.b16 %v922
  %v1186 = vunpack.c.l.b16 %v923
  %v1187 = vunpack.c.l.b16 %v924
  %v1188 = vunpack.c.l.b16 %v925
  %v1189 = vunpack.c.l.b16 %v926
  %v1190 = vunpack.c.l.b16 %v927
  %v1191 = vunpack.c.l.b16 %v928
  %v1192 = vunpack.c.l.b16 %v929
  %v1193 = vunpack.c.l.b16 %v930
  %v1194 = vunpack.c.l.b16 %v931
  %v1195 = vunpack.c.l.b16 %v932
  %v1196 = vunpack.c.l.b16 %v933
  %v1197 = vunpack.c.l.b16 %v934
  %v1198 = vunpack.c.l.b16 %v935
  %v1199 = vunpack.c.l.b16 %v936
  %v1200 = vunpack.c.l.b16 %v937
  %v1201 = vunpack.c.l.b16 %v938
  %v1202 = vunpack.c.l.b16 %v939
  %v1203 = vunpack.c.l.b16 %v940
  %v1204 = vunpack.c.l.b16 %v941
  %v1205 = vunpack.c.l.b16 %v942
  %v1206 = vunpack.c.l.b16 %v943
  %v1207 = vunpack.c.l.b16 %v944
  %v1208 = vunpack.c.l.b16 %v945
  %v1209 = vunpack.c.l.b16 %v946
  %v1210 = vunpack.c.l.b16 %v947
  %v1211 = vunpack.c.l.b16 %v948
  %v1212 = vunpack.c.l.b16 %v949
  %v1213 = vunpack.c.l.b16 %v950
  %v1214 = vunpack.c.l.b16 %v951
  %v1215 = vunpack.c.l.b16 %v952
  %v1216 = vunpack.c.l.b16 %v953
  %v1217 = vunpack.c.l.b16 %v954
  %v1218 = vunpack.c.l.b16 %v955
  %v1219 = vunpack.c.l.b16 %v956
  %v1220 = vunpack.c.l.b16 %v957
  %v1221 = vunpack.c.l.b16 %v958
  %v1222 = vunpack.c.l.b16 %v959
  %v1223 = vunpack.c.l.b16 %v960
  %v1224 = vunpack.c.l.b16 %v961
  %v1225 = vunpack.c.l.b16 %v962
  %v1226 = vunpack.c.l.b16 %v963
  %v1227 = vunpack.c.l.b16 %v964
  %v1228 = vunpack.c.l.b16 %v965
  %v1229 = vunpack.c.l.b16 %v966
  %v1230 = vunpack.c.l.b16 %v967
  %v1231 = vunpack.c.l.b16 %v968
  %v1232 = vunpack.c.l.b16 %v969
  %v1233 = vunpack.c.l.b16 %v970
  %v1234 = vunpack.c.l.b16 %v971
  %v1235 = vunpack.c.l.b16 %v972
  %v1236 = vunpack.c.l.b16 %v973
  %v1237 = vunpack.c.l.b16 %v974
  %v1238 = vunpack.c.l.b16 %v975
  %v1239 = vunpack.c.l.b16 %v976
  %v1240 = vunpack.c.l.b16 %v977
  %v1241 = vunpack.c.l.b16 %v978
  %v1242 = vunpack.c.l.b16 %v979
  %v1243 = vunpack.c.l.b16 %v980
  %v1244 = vunpack.c.l.b16 %v981
  %v1245 = vunpack.c.l.b16 %v982
  %v1246 = vunpack.c.l.b16 %v983
  %v1247 = vunpack.c.l.b16 %v984
  %v1248 = vunpack.c.l.b16 %v985
  %v1249 = vunpack.c.l.b16 %v986
  %v1250 = vunpack.c.l.b16 %v987
  %v1251 = vunpack.c.l.b16 %v988
  %v1252 = vunpack.c.l.b16 %v989
  %v1253 = vunpack.c.l.b16 %v990
  %v1254 = vunpack.c.l.b16 %v991
  %v1255 = vunpack.c.l.b16 %v992
  %v1256 = vunpack.c.l.b16 %v993
  %v1257 = vunpack.c.l.b16 %v994
  %v1258 = vunpack.c.l.b16 %v995
  %v1259 = vunpack.c.l.b16 %v996
  %v1260 = vunpack.c.l.b16 %v997
  %v1261 = vunpack.c.l.b16 %v998
  %v1262 = vunpack.c.l.b16 %v999
  %v1263 = vunpack.c.l.b16 %v1000
  %v1264 = vunpack.c.l.b16 %v1001
  %v1265 = vunpack.c.l.b16 %v1002
  %v1266 = vunpack.c.l.b16 %v1003
  %v1267 = vunpack.c.l.b16 %v1004
  %v1268 = vunpack.c.l.b16 %v1005
  %v1269 = vunpack.c.l.b16 %v1006
  %v1270 = vunpack.c.l.b16 %v1007
  %v1271 = vunpack.c.l.b16 %v1008
  %v1272 = vunpack.c.l.b16 %v1009
  %v1273 = vunpack.c.l.b16 %v1010
  %v1274 = vunpack.c.l.b16 %v1011
  %v1275 = vunpack.c.l.b16 %v1012
  %v1276 = vunpack.c.l.b16 %v1013
  %v1277 = vunpack.c.l.b16 %v1014
  %v1278 = vunpack.c.l.b16 %v1015
  %v1279 = vunpack.c.l.b16 %v1016
  %v1280 = vunpack.c.l.b16 %v1017
  %v1281 = vunpack.c.l.b16 %v1018
  %v1282 = vunpack.c.l.b16 %v1019
  %v1283 = vunpack.c.l.b16 %v1020
  %v1284 = vunpack.c.l.b16 %v1021
  %v1285 = vunpack.c.l.b16 %v1022
  %v1286 = vunpack.c.l.b16 %v1023
  %v1287 = vunpack.c.l.b16 %v1024
  %v1288 = vunpack.c.l.b16 %v1025
  %v1289 = vunpack.c.l.b16 %v1026
  %v1290 = vunpack.c.l.b16 %v1027
  %v1291 = vunpack.c.l.b16 %v1028
  %v1292 = vunpack.c.l.b16 %v1029
  %v1293 = vunpack.c.l.b16 %v1030
  %v1294 = vunpack.c.l.b16 %v1031
  %v1295 = vunpack.c.l.b16 %v1032
  %v1296 = vunpack.c.l.b16 %v1033
  %v1297 = vunpack.c.l.b16 %v1034
  %v1298 = vpack.c.b16 %v1171, %v1170
  %v1299 = vpack.c.b16 %v1173, %v1172
  %v1300 = vpack.c.b16 %v1175, %v1174
  %v1301 = vpack.c.b16 %v1177, %v1176
  %v1302 = vpack.c.b16 %v1179, %v1178
  %v1303 = vpack.c.b16 %v1181, %v1180
  %v1304 = vpack.c.b16 %v1183, %v1182
  %v1305 = vpack.c.b16 %v1185, %v1184
  %v1306 = vpack.c.b16 %v1187, %v1186
  %v1307 = vpack.c.b16 %v1189, %v1188
  %v1308 = vpack.c.b16 %v1191, %v1190
  %v1309 = vpack.c.b16 %v1193, %v1192
  %v1310 = vpack.c.b16 %v1195, %v1194
  %v1311 = vpack.c.b16 %v1197, %v1196
  %v1312 = vpack.c.b16 %v1199, %v1198
  %v1313 = vpack.c.b16 %v1201, %v1200
  %v1314 = vpack.c.b16 %v1203, %v1202
  %v1315 = vpack.c.b16 %v1205, %v1204
  %v1316 = vpack.c.b16 %v1207, %v1206
  %v1317 = vpack.c.b16 %v1209, %v1208
  %v1318 = vpack.c.b16 %v1211, %v1210
  %v1319 = vpack.c.b16 %v1213, %v1212
  %v1320 = vpack.c.b16 %v1215, %v1214
  %v1321 = vpack.c.b16 %v1217, %v1216
  %v1322 = vpack.c.b16 %v1219, %v1218
  %v1323 = vpack.c.b16 %v1221, %v1220
  %v1324 = vpack.c.b16 %v1223, %v1222
  %v1325 = vpack.c.b16 %v1225, %v1224
  %v1326 = vpack.c.b16 %v1227, %v1226
  %v1327 = vpack.c.b16 %v1229, %v1228
  %v1328 = vpack.c.b16 %v1231, %v1230
  %v1329 = vpack.c.b16 %v1233, %v1232
  %v1330 = vpack.c.b16 %v1235, %v1234
  %v1331 = vpack.c.b16 %v1237, %v1236
  %v1332 = vpack.c.b16 %v1239, %v1238
  %v1333 = vpack.c.b16 %v1241, %v1240
  %v1334 = vpack.c.b16 %v1243, %v1242
  %v1335 = vpack.c.b16 %v1245, %v1244
  %v1336 = vpack.c.b16 %v1247, %v1246
  %v1337 = vpack.c.b16 %v1249, %v1248
  %v1338 = vpack.c.b16 %v1251, %v1250
  %v1339 = vpack.c.b16 %v1253, %v1252
  %v1340 = vpack.c.b16 %v1255, %v1254
  %v1341 = vpack.c.b16 %v1257, %v1256
  %v1342 = vpack.c.b16 %v1259, %v1258
  %v1343 = vpack.c.b16 %v1261, %v1260
  %v1344 = vpack.c.b16 %v1263, %v1262
  %v1345 = vpack.c.b16 %v1265, %v1264
  %v1346 = vpack.c.b16 %v1267, %v1266
  %v1347 = vpack.c.b16 %v1269, %v1268
  %v1348 = vpack.c.b16 %v1271, %v1270
  %v1349 = vpack.c.b16 %v1273, %v1272
  %v1350 = vpack.c.b16 %v1275, %v1274
  %v1351 = vpack.c.b16 %v1277, %v1276
  %v1352 = vpack.c.b16 %v1279, %v1278
  %v1353 = vpack.c.b16 %v1281, %v1280
  %v1354 = vpack.c.b16 %v1283, %v1282
  %v1355 = vpack.c.b16 %v1285, %v1284
  %v1356 = vpack.c.b16 %v1287, %v1286
  %v1357 = vpack.c.b16 %v1289, %v1288
  %v1358 = vpack.c.b16 %v1291, %v1290
  %v1359 = vpack.c.b16 %v1293, %v1292
  %v1360 = vpack.c.b16 %v1295, %v1294
  %v1361 = vpack.c.b16 %v1297, %v1296
  %1426 = vmatprep.subr.bf16.mxu0 0
  %1427 = vmatpush1.bf16.msra.mxu0 %v1298
  %1428 = vmatprep.subr.bf16.mxu0 0
  %1429 = vmatpush1.bf16.msra.mxu0 %v1299
  %1430 = vmatprep.subr.bf16.mxu0 0
  %1431 = vmatpush1.bf16.msra.mxu0 %v1300
  %1432 = vmatprep.subr.bf16.mxu0 0
  %1433 = vmatpush1.bf16.msra.mxu0 %v1301
  %1434 = vmatprep.subr.bf16.mxu0 0
  %1435 = vmatpush1.bf16.msra.mxu0 %v1302
  %1436 = vmatprep.subr.bf16.mxu0 0
  %1437 = vmatpush1.bf16.msra.mxu0 %v1303
  %1438 = vmatprep.subr.bf16.mxu0 0
  %1439 = vmatpush1.bf16.msra.mxu0 %v1304
  %1440 = vmatprep.subr.bf16.mxu0 0
  %1441 = vmatpush1.bf16.msra.mxu0 %v1305
  %1442 = vmatprep.subr.bf16.mxu0 0
  %1443 = vmatpush1.bf16.msra.mxu0 %v1306
  %1444 = vmatprep.subr.bf16.mxu0 0
  %1445 = vmatpush1.bf16.msra.mxu0 %v1307
  %1446 = vmatprep.subr.bf16.mxu0 0
  %1447 = vmatpush1.bf16.msra.mxu0 %v1308
  %1448 = vmatprep.subr.bf16.mxu0 0
  %1449 = vmatpush1.bf16.msra.mxu0 %v1309
  %1450 = vmatprep.subr.bf16.mxu0 0
  %1451 = vmatpush1.bf16.msra.mxu0 %v1310
  %1452 = vmatprep.subr.bf16.mxu0 0
  %1453 = vmatpush1.bf16.msra.mxu0 %v1311
  %1454 = vmatprep.subr.bf16.mxu0 0
  %1455 = vmatpush1.bf16.msra.mxu0 %v1312
  %1456 = vmatprep.subr.bf16.mxu0 0
  %1457 = vmatpush1.bf16.msra.mxu0 %v1313
  %1458 = vmatprep.mubr.bf16.mxu0 %v900
  %1459 = vmatmul.mubr.bf16.gmra.mrb[0].mxu0 %v899
  %v1460 = vpop.f32.mrb[0].mxu0
  %v1461 = vadd.f32 %v1040, %v1460
  %v1462 = vpop.f32.mrb[0].mxu0
  %v1463 = vpop.f32.mrb[0].mxu0
  %v1464 = vadd.f32 %v1040, %v1463
  %v1465 = vpop.f32.mrb[0].mxu0
  %1466 = vdwg.mxu0
  %1467 = vmatprep.subr.bf16.mxu0 0
  %1468 = vmatpush1.bf16.msra.mxu0 %v1314
  %1469 = vmatprep.subr.bf16.mxu0 0
  %1470 = vmatpush1.bf16.msra.mxu0 %v1315
  %1471 = vmatprep.subr.bf16.mxu0 0
  %1472 = vmatpush1.bf16.msra.mxu0 %v1316
  %1473 = vmatprep.subr.bf16.mxu0 0
  %1474 = vmatpush1.bf16.msra.mxu0 %v1317
  %1475 = vmatprep.subr.bf16.mxu0 0
  %1476 = vmatpush1.bf16.msra.mxu0 %v1318
  %1477 = vmatprep.subr.bf16.mxu0 0
  %1478 = vmatpush1.bf16.msra.mxu0 %v1319
  %1479 = vmatprep.subr.bf16.mxu0 0
  %1480 = vmatpush1.bf16.msra.mxu0 %v1320
  %1481 = vmatprep.subr.bf16.mxu0 0
  %1482 = vmatpush1.bf16.msra.mxu0 %v1321
  %1483 = vmatprep.subr.bf16.mxu0 0
  %1484 = vmatpush1.bf16.msra.mxu0 %v1322
  %1485 = vmatprep.subr.bf16.mxu0 0
  %1486 = vmatpush1.bf16.msra.mxu0 %v1323
  %1487 = vmatprep.subr.bf16.mxu0 0
  %1488 = vmatpush1.bf16.msra.mxu0 %v1324
  %1489 = vmatprep.subr.bf16.mxu0 0
  %1490 = vmatpush1.bf16.msra.mxu0 %v1325
  %1491 = vmatprep.subr.bf16.mxu0 0
  %1492 = vmatpush1.bf16.msra.mxu0 %v1326
  %1493 = vmatprep.subr.bf16.mxu0 0
  %1494 = vmatpush1.bf16.msra.mxu0 %v1327
  %1495 = vmatprep.subr.bf16.mxu0 0
  %1496 = vmatpush1.bf16.msra.mxu0 %v1328
  %1497 = vmatprep.subr.bf16.mxu0 0
  %1498 = vmatpush1.bf16.msra.mxu0 %v1329
  %1499 = vmatprep.mubr.bf16.mxu0 %v902
  %1500 = vmatmul.mubr.bf16.gmra.mrb[0].mxu0 %v901
  %v1501 = vpop.f32.mrb[0].mxu0
  %v1502 = vadd.f32 %v1461, %v1501
  %v1503 = vpop.f32.mrb[0].mxu0
  %v1504 = vpop.f32.mrb[0].mxu0
  %v1505 = vadd.f32 %v1464, %v1504
  %v1506 = vpop.f32.mrb[0].mxu0
  %1507 = vdwg.mxu0
  %1508 = vmatprep.subr.bf16.mxu0 0
  %1509 = vmatpush1.bf16.msra.mxu0 %v1330
  %1510 = vmatprep.subr.bf16.mxu0 0
  %1511 = vmatpush1.bf16.msra.mxu0 %v1331
  %1512 = vmatprep.subr.bf16.mxu0 0
  %1513 = vmatpush1.bf16.msra.mxu0 %v1332
  %1514 = vmatprep.subr.bf16.mxu0 0
  %1515 = vmatpush1.bf16.msra.mxu0 %v1333
  %1516 = vmatprep.subr.bf16.mxu0 0
  %1517 = vmatpush1.bf16.msra.mxu0 %v1334
  %1518 = vmatprep.subr.bf16.mxu0 0
  %1519 = vmatpush1.bf16.msra.mxu0 %v1335
  %1520 = vmatprep.subr.bf16.mxu0 0
  %1521 = vmatpush1.bf16.msra.mxu0 %v1336
  %1522 = vmatprep.subr.bf16.mxu0 0
  %1523 = vmatpush1.bf16.msra.mxu0 %v1337
  %1524 = vmatprep.subr.bf16.mxu0 0
  %1525 = vmatpush1.bf16.msra.mxu0 %v1338
  %1526 = vmatprep.subr.bf16.mxu0 0
  %1527 = vmatpush1.bf16.msra.mxu0 %v1339
  %1528 = vmatprep.subr.bf16.mxu0 0
  %1529 = vmatpush1.bf16.msra.mxu0 %v1340
  %1530 = vmatprep.subr.bf16.mxu0 0
  %1531 = vmatpush1.bf16.msra.mxu0 %v1341
  %1532 = vmatprep.subr.bf16.mxu0 0
  %1533 = vmatpush1.bf16.msra.mxu0 %v1342
  %1534 = vmatprep.subr.bf16.mxu0 0
  %1535 = vmatpush1.bf16.msra.mxu0 %v1343
  %1536 = vmatprep.subr.bf16.mxu0 0
  %1537 = vmatpush1.bf16.msra.mxu0 %v1344
  %1538 = vmatprep.subr.bf16.mxu0 0
  %1539 = vmatpush1.bf16.msra.mxu0 %v1345
  %1540 = vmatprep.mubr.bf16.mxu0 %v904
  %1541 = vmatmul.mubr.bf16.gmra.mrb[0].mxu0 %v903
  %v1542 = vpop.f32.mrb[0].mxu0
  %v1543 = vadd.f32 %v1502, %v1542
  %v1544 = vpop.f32.mrb[0].mxu0
  %v1545 = vpop.f32.mrb[0].mxu0
  %v1546 = vadd.f32 %v1505, %v1545
  %v1547 = vpop.f32.mrb[0].mxu0
  %1548 = vdwg.mxu0
  %1549 = vmatprep.subr.bf16.mxu0 0
  %1550 = vmatpush1.bf16.msra.mxu0 %v1346
  %1551 = vmatprep.subr.bf16.mxu0 0
  %1552 = vmatpush1.bf16.msra.mxu0 %v1347
  %1553 = vmatprep.subr.bf16.mxu0 0
  %1554 = vmatpush1.bf16.msra.mxu0 %v1348
  %1555 = vmatprep.subr.bf16.mxu0 0
  %1556 = vmatpush1.bf16.msra.mxu0 %v1349
  %1557 = vmatprep.subr.bf16.mxu0 0
  %1558 = vmatpush1.bf16.msra.mxu0 %v1350
  %1559 = vmatprep.subr.bf16.mxu0 0
  %1560 = vmatpush1.bf16.msra.mxu0 %v1351
  %1561 = vmatprep.subr.bf16.mxu0 0
  %1562 = vmatpush1.bf16.msra.mxu0 %v1352
  %1563 = vmatprep.subr.bf16.mxu0 0
  %1564 = vmatpush1.bf16.msra.mxu0 %v1353
  %1565 = vmatprep.subr.bf16.mxu0 0
  %1566 = vmatpush1.bf16.msra.mxu0 %v1354
  %1567 = vmatprep.subr.bf16.mxu0 0
  %1568 = vmatpush1.bf16.msra.mxu0 %v1355
  %1569 = vmatprep.subr.bf16.mxu0 0
  %1570 = vmatpush1.bf16.msra.mxu0 %v1356
  %1571 = vmatprep.subr.bf16.mxu0 0
  %1572 = vmatpush1.bf16.msra.mxu0 %v1357
  %1573 = vmatprep.subr.bf16.mxu0 0
  %1574 = vmatpush1.bf16.msra.mxu0 %v1358
  %1575 = vmatprep.subr.bf16.mxu0 0
  %1576 = vmatpush1.bf16.msra.mxu0 %v1359
  %1577 = vmatprep.subr.bf16.mxu0 0
  %1578 = vmatpush1.bf16.msra.mxu0 %v1360
  %1579 = vmatprep.subr.bf16.mxu0 0
  %1580 = vmatpush1.bf16.msra.mxu0 %v1361
  %1581 = vmatprep.mubr.bf16.mxu0 %v906
  %1582 = vmatmul.mubr.bf16.gmra.mrb[0].mxu0 %v905
  %v1583 = vpop.f32.mrb[0].mxu0
  %v1584 = vadd.f32 %v1543, %v1583
  %v1585 = vpop.f32.mrb[0].mxu0
  %v1586 = vpop.f32.mrb[0].mxu0
  %v1587 = vadd.f32 %v1546, %v1586
  %v1588 = vpop.f32.mrb[0].mxu0
  %1589 = vdwg.mxu0
  %v1590 = vmax.f32 %v1584, 0.0
  %v1591 = vmax.f32 %v1587, 0.0
  %v1594 = vrot.slane %v1590, 1
  %v1595 = vrot.slane %v1591, 1
  %v1596 = vsel %vm818, %v1594, %v1595
  %1600 = vst [vmem:[#allocation2] sm:$0x80] %v1594
  %1601 = vst [vmem:[#allocation2 + $0x10] sm:$0xff] %v1596
  %1602 = vst [vmem:[#allocation2 + $0x20] sm:$0x7f] %v1595
  %v1603 = vld [vmem:[#allocation2] sm:$0xff]
  %v1604 = vld [vmem:[#allocation2 + $0x10] sm:$0xff]
  %v1605 = vld [vmem:[#allocation2] sm:$0xfc]
  %v1606 = vld [vmem:[#allocation2 + $0x20] sm:$0x3]
  %v1607 = vld [vmem:[#allocation2] sm:$0xf0]
  %v1608 = vld [vmem:[#allocation2 + $0x20] sm:$0xf]
  %v1609 = vld [vmem:[#allocation2] sm:$0xc0]
  %v1610 = vld [vmem:[#allocation2 + $0x20] sm:$0x3f]
  %v1611 = vld [vmem:[#allocation2 + $0x20] sm:$0xff]
  %v1612 = vld [vmem:[#allocation2 + $0x10] sm:$0xfc]
  %v1613 = vld [vmem:[#allocation2 + $0x30] sm:$0x3]
  %v1614 = vld [vmem:[#allocation2 + $0x10] sm:$0xf0]
  %v1615 = vld [vmem:[#allocation2 + $0x30] sm:$0xf]
  %v1616 = vld [vmem:[#allocation2 + $0x10] sm:$0xc0]
  %v1617 = vld [vmem:[#allocation2 + $0x30] sm:$0x3f]
  %v1621 = vrot.slane %v1605, 2
  %v1622 = vrot.slane %v1604, 2
  %v1623 = vsel %vm67, %v1621, %v1622
  %v1624 = vrot.slane %v1606, 2
  %v1625 = vsel %vm67, %v1622, %v1624
  %v1630 = vrot.slane %v1607, 4
  %v1631 = vrot.slane %v1604, 4
  %v1632 = vsel %vm77, %v1630, %v1631
  %v1633 = vrot.slane %v1608, 4
  %v1634 = vsel %vm77, %v1631, %v1633
  %v1639 = vrot.slane %v1609, 6
  %v1640 = vrot.slane %v1604, 6
  %v1641 = vsel %vm87, %v1639, %v1640
  %v1642 = vrot.slane %v1610, 6
  %v1643 = vsel %vm87, %v1640, %v1642
  %v1649 = vrot.slane %v1612, 2
  %v1650 = vrot.slane %v1611, 2
  %v1651 = vsel %vm67, %v1649, %v1650
  %v1652 = vrot.slane %v1613, 2
  %v1653 = vsel %vm67, %v1650, %v1652
  %v1658 = vrot.slane %v1614, 4
  %v1659 = vrot.slane %v1611, 4
  %v1660 = vsel %vm77, %v1658, %v1659
  %v1661 = vrot.slane %v1615, 4
  %v1662 = vsel %vm77, %v1659, %v1661
  %v1667 = vrot.slane %v1616, 6
  %v1668 = vrot.slane %v1611, 6
  %v1669 = vsel %vm87, %v1667, %v1668
  %v1670 = vrot.slane %v1617, 6
  %v1671 = vsel %vm87, %v1668, %v1670
  %v1674 = vpack.c.bf16 %v1604, %v1603
  %v1675 = vpack.c.bf16 %v1625, %v1623
  %v1676 = vpack.c.bf16 %v1634, %v1632
  %v1677 = vpack.c.bf16 %v1643, %v1641
  %v1678 = vpack.c.bf16 %v1611, %v1604
  %v1679 = vpack.c.bf16 %v1653, %v1651
  %v1680 = vpack.c.bf16 %v1662, %v1660
  %v1681 = vpack.c.bf16 %v1671, %v1669
  %v1682 = vld [vmem:[%s5] sm:$0xff]
  %v1683 = vld [vmem:[%s5 + $0x8] sm:$0xff]
  %v1684 = vld [vmem:[%s5 + $0x10] sm:$0xff]
  %v1685 = vld [vmem:[%s5 + $0x18] sm:$0xff]
  %v1686 = vld [vmem:[%s5 + $0x20] sm:$0xff]
  %v1687 = vld [vmem:[%s5 + $0x28] sm:$0xff]
  %v1688 = vld [vmem:[%s5 + $0x30] sm:$0xff]
  %v1689 = vld [vmem:[%s5 + $0x38] sm:$0xff]
  %v1690 = vld [vmem:[%s5 + $0x40] sm:$0xff]
  %v1691 = vld [vmem:[%s5 + $0x48] sm:$0xff]
  %v1692 = vld [vmem:[%s5 + $0x50] sm:$0xff]
  %v1693 = vld [vmem:[%s5 + $0x58] sm:$0xff]
  %v1694 = vld [vmem:[%s5 + $0x60] sm:$0xff]
  %v1695 = vld [vmem:[%s5 + $0x68] sm:$0xff]
  %v1696 = vld [vmem:[%s5 + $0x70] sm:$0xff]
  %v1697 = vld [vmem:[%s5 + $0x78] sm:$0xff]
  %v1698 = vld [vmem:[%s5 + $0x80] sm:$0xff]
  %v1699 = vld [vmem:[%s5 + $0x88] sm:$0xff]
  %v1700 = vld [vmem:[%s5 + $0x90] sm:$0xff]
  %v1701 = vld [vmem:[%s5 + $0x98] sm:$0xff]
  %v1702 = vld [vmem:[%s5 + $0xa0] sm:$0xff]
  %v1703 = vld [vmem:[%s5 + $0xa8] sm:$0xff]
  %v1704 = vld [vmem:[%s5 + $0xb0] sm:$0xff]
  %v1705 = vld [vmem:[%s5 + $0xb8] sm:$0xff]
  %v1706 = vld [vmem:[%s5 + $0xc0] sm:$0xff]
  %v1707 = vld [vmem:[%s5 + $0xc8] sm:$0xff]
  %v1708 = vld [vmem:[%s5 + $0xd0] sm:$0xff]
  %v1709 = vld [vmem:[%s5 + $0xd8] sm:$0xff]
  %v1710 = vld [vmem:[%s5 + $0xe0] sm:$0xff]
  %v1711 = vld [vmem:[%s5 + $0xe8] sm:$0xff]
  %v1712 = vld [vmem:[%s5 + $0xf0] sm:$0xff]
  %v1713 = vld [vmem:[%s5 + $0xf8] sm:$0xff]
  %v1714 = vld [vmem:[%s5 + $0x100] sm:$0xff]
  %v1715 = vld [vmem:[%s5 + $0x108] sm:$0xff]
  %v1716 = vld [vmem:[%s5 + $0x110] sm:$0xff]
  %v1717 = vld [vmem:[%s5 + $0x118] sm:$0xff]
  %v1718 = vld [vmem:[%s5 + $0x120] sm:$0xff]
  %v1719 = vld [vmem:[%s5 + $0x128] sm:$0xff]
  %v1720 = vld [vmem:[%s5 + $0x130] sm:$0xff]
  %v1721 = vld [vmem:[%s5 + $0x138] sm:$0xff]
  %v1722 = vld [vmem:[%s5 + $0x140] sm:$0xff]
  %v1723 = vld [vmem:[%s5 + $0x148] sm:$0xff]
  %v1724 = vld [vmem:[%s5 + $0x150] sm:$0xff]
  %v1725 = vld [vmem:[%s5 + $0x158] sm:$0xff]
  %v1726 = vld [vmem:[%s5 + $0x160] sm:$0xff]
  %v1727 = vld [vmem:[%s5 + $0x168] sm:$0xff]
  %v1728 = vld [vmem:[%s5 + $0x170] sm:$0xff]
  %v1729 = vld [vmem:[%s5 + $0x178] sm:$0xff]
  %v1730 = vld [vmem:[%s5 + $0x180] sm:$0xff]
  %v1731 = vld [vmem:[%s5 + $0x188] sm:$0xff]
  %v1732 = vld [vmem:[%s5 + $0x190] sm:$0xff]
  %v1733 = vld [vmem:[%s5 + $0x198] sm:$0xff]
  %v1734 = vld [vmem:[%s5 + $0x1a0] sm:$0xff]
  %v1735 = vld [vmem:[%s5 + $0x1a8] sm:$0xff]
  %v1736 = vld [vmem:[%s5 + $0x1b0] sm:$0xff]
  %v1737 = vld [vmem:[%s5 + $0x1b8] sm:$0xff]
  %v1738 = vld [vmem:[%s5 + $0x1c0] sm:$0xff]
  %v1739 = vld [vmem:[%s5 + $0x1c8] sm:$0xff]
  %v1740 = vld [vmem:[%s5 + $0x1d0] sm:$0xff]
  %v1741 = vld [vmem:[%s5 + $0x1d8] sm:$0xff]
  %v1742 = vld [vmem:[%s5 + $0x1e0] sm:$0xff]
  %v1743 = vld [vmem:[%s5 + $0x1e8] sm:$0xff]
  %v1744 = vld [vmem:[%s5 + $0x1f0] sm:$0xff]
  %v1745 = vld [vmem:[%s5 + $0x1f8] sm:$0xff]
  %v1746 = vld [vmem:[%s5 + $0x200] sm:$0xff]
  %v1747 = vld [vmem:[%s5 + $0x208] sm:$0xff]
  %v1748 = vld [vmem:[%s5 + $0x210] sm:$0xff]
  %v1749 = vld [vmem:[%s5 + $0x218] sm:$0xff]
  %v1750 = vld [vmem:[%s5 + $0x220] sm:$0xff]
  %v1751 = vld [vmem:[%s5 + $0x228] sm:$0xff]
  %v1752 = vld [vmem:[%s5 + $0x230] sm:$0xff]
  %v1753 = vld [vmem:[%s5 + $0x238] sm:$0xff]
  %v1754 = vld [vmem:[%s5 + $0x240] sm:$0xff]
  %v1755 = vld [vmem:[%s5 + $0x248] sm:$0xff]
  %v1756 = vld [vmem:[%s5 + $0x250] sm:$0xff]
  %v1757 = vld [vmem:[%s5 + $0x258] sm:$0xff]
  %v1758 = vld [vmem:[%s5 + $0x260] sm:$0xff]
  %v1759 = vld [vmem:[%s5 + $0x268] sm:$0xff]
  %v1760 = vld [vmem:[%s5 + $0x270] sm:$0xff]
  %v1761 = vld [vmem:[%s5 + $0x278] sm:$0xff]
  %v1762 = vld [vmem:[%s5 + $0x280] sm:$0xff]
  %v1763 = vld [vmem:[%s5 + $0x288] sm:$0xff]
  %v1764 = vld [vmem:[%s5 + $0x290] sm:$0xff]
  %v1765 = vld [vmem:[%s5 + $0x298] sm:$0xff]
  %v1766 = vld [vmem:[%s5 + $0x2a0] sm:$0xff]
  %v1767 = vld [vmem:[%s5 + $0x2a8] sm:$0xff]
  %v1768 = vld [vmem:[%s5 + $0x2b0] sm:$0xff]
  %v1769 = vld [vmem:[%s5 + $0x2b8] sm:$0xff]
  %v1770 = vld [vmem:[%s5 + $0x2c0] sm:$0xff]
  %v1771 = vld [vmem:[%s5 + $0x2c8] sm:$0xff]
  %v1772 = vld [vmem:[%s5 + $0x2d0] sm:$0xff]
  %v1773 = vld [vmem:[%s5 + $0x2d8] sm:$0xff]
  %v1774 = vld [vmem:[%s5 + $0x2e0] sm:$0xff]
  %v1775 = vld [vmem:[%s5 + $0x2e8] sm:$0xff]
  %v1776 = vld [vmem:[%s5 + $0x2f0] sm:$0xff]
  %v1777 = vld [vmem:[%s5 + $0x2f8] sm:$0xff]
  %v1778 = vld [vmem:[%s5 + $0x300] sm:$0xff]
  %v1779 = vld [vmem:[%s5 + $0x308] sm:$0xff]
  %v1780 = vld [vmem:[%s5 + $0x310] sm:$0xff]
  %v1781 = vld [vmem:[%s5 + $0x318] sm:$0xff]
  %v1782 = vld [vmem:[%s5 + $0x320] sm:$0xff]
  %v1783 = vld [vmem:[%s5 + $0x328] sm:$0xff]
  %v1784 = vld [vmem:[%s5 + $0x330] sm:$0xff]
  %v1785 = vld [vmem:[%s5 + $0x338] sm:$0xff]
  %v1786 = vld [vmem:[%s5 + $0x340] sm:$0xff]
  %v1787 = vld [vmem:[%s5 + $0x348] sm:$0xff]
  %v1788 = vld [vmem:[%s5 + $0x350] sm:$0xff]
  %v1789 = vld [vmem:[%s5 + $0x358] sm:$0xff]
  %v1790 = vld [vmem:[%s5 + $0x360] sm:$0xff]
  %v1791 = vld [vmem:[%s5 + $0x368] sm:$0xff]
  %v1792 = vld [vmem:[%s5 + $0x370] sm:$0xff]
  %v1793 = vld [vmem:[%s5 + $0x378] sm:$0xff]
  %v1794 = vld [vmem:[%s5 + $0x380] sm:$0xff]
  %v1795 = vld [vmem:[%s5 + $0x388] sm:$0xff]
  %v1796 = vld [vmem:[%s5 + $0x390] sm:$0xff]
  %v1797 = vld [vmem:[%s5 + $0x398] sm:$0xff]
  %v1798 = vld [vmem:[%s5 + $0x3a0] sm:$0xff]
  %v1799 = vld [vmem:[%s5 + $0x3a8] sm:$0xff]
  %v1800 = vld [vmem:[%s5 + $0x3b0] sm:$0xff]
  %v1801 = vld [vmem:[%s5 + $0x3b8] sm:$0xff]
  %v1802 = vld [vmem:[%s5 + $0x3c0] sm:$0xff]
  %v1803 = vld [vmem:[%s5 + $0x3c8] sm:$0xff]
  %v1804 = vld [vmem:[%s5 + $0x3d0] sm:$0xff]
  %v1805 = vld [vmem:[%s5 + $0x3d8] sm:$0xff]
  %v1806 = vld [vmem:[%s5 + $0x3e0] sm:$0xff]
  %v1807 = vld [vmem:[%s5 + $0x3e8] sm:$0xff]
  %v1808 = vld [vmem:[%s5 + $0x3f0] sm:$0xff]
  %v1809 = vld [vmem:[%s5 + $0x3f8] sm:$0xff]
  %v1810 = vld [vmem:[%s6] sm:$0x3]
  %v1812 = vlaneseq
  %v1813 = vshrl.u32 %v1812, 7
  %v1814 = vsub.s32 0, %v1813
  %v1815 = vrot.slane %v1810, %v1814
  %v1816 = vlaneseq
  %v1817 = vshrl.u32 %v1816, 7
  %v1818 = vsub.s32 1, %v1817
  %v1819 = vrot.slane %v1810, %v1818
  %v1950 = vunpack.c.l.b16 %v1682
  %v1951 = vunpack.c.h.b16 %v1682
  %v1952 = vunpack.c.l.b16 %v1683
  %v1953 = vunpack.c.h.b16 %v1683
  %v1954 = vunpack.c.l.b16 %v1684
  %v1955 = vunpack.c.h.b16 %v1684
  %v1956 = vunpack.c.l.b16 %v1685
  %v1957 = vunpack.c.h.b16 %v1685
  %v1958 = vunpack.c.l.b16 %v1686
  %v1959 = vunpack.c.h.b16 %v1686
  %v1960 = vunpack.c.l.b16 %v1687
  %v1961 = vunpack.c.h.b16 %v1687
  %v1962 = vunpack.c.l.b16 %v1688
  %v1963 = vunpack.c.h.b16 %v1688
  %v1964 = vunpack.c.l.b16 %v1689
  %v1965 = vunpack.c.h.b16 %v1689
  %v1966 = vunpack.c.l.b16 %v1690
  %v1967 = vunpack.c.h.b16 %v1690
  %v1968 = vunpack.c.l.b16 %v1691
  %v1969 = vunpack.c.h.b16 %v1691
  %v1970 = vunpack.c.l.b16 %v1692
  %v1971 = vunpack.c.h.b16 %v1692
  %v1972 = vunpack.c.l.b16 %v1693
  %v1973 = vunpack.c.h.b16 %v1693
  %v1974 = vunpack.c.l.b16 %v1694
  %v1975 = vunpack.c.h.b16 %v1694
  %v1976 = vunpack.c.l.b16 %v1695
  %v1977 = vunpack.c.h.b16 %v1695
  %v1978 = vunpack.c.l.b16 %v1696
  %v1979 = vunpack.c.h.b16 %v1696
  %v1980 = vunpack.c.l.b16 %v1697
  %v1981 = vunpack.c.h.b16 %v1697
  %v1982 = vunpack.c.l.b16 %v1698
  %v1983 = vunpack.c.h.b16 %v1698
  %v1984 = vunpack.c.l.b16 %v1699
  %v1985 = vunpack.c.h.b16 %v1699
  %v1986 = vunpack.c.l.b16 %v1700
  %v1987 = vunpack.c.h.b16 %v1700
  %v1988 = vunpack.c.l.b16 %v1701
  %v1989 = vunpack.c.h.b16 %v1701
  %v1990 = vunpack.c.l.b16 %v1702
  %v1991 = vunpack.c.h.b16 %v1702
  %v1992 = vunpack.c.l.b16 %v1703
  %v1993 = vunpack.c.h.b16 %v1703
  %v1994 = vunpack.c.l.b16 %v1704
  %v1995 = vunpack.c.h.b16 %v1704
  %v1996 = vunpack.c.l.b16 %v1705
  %v1997 = vunpack.c.h.b16 %v1705
  %v1998 = vunpack.c.l.b16 %v1706
  %v1999 = vunpack.c.h.b16 %v1706
  %v2000 = vunpack.c.l.b16 %v1707
  %v2001 = vunpack.c.h.b16 %v1707
  %v2002 = vunpack.c.l.b16 %v1708
  %v2003 = vunpack.c.h.b16 %v1708
  %v2004 = vunpack.c.l.b16 %v1709
  %v2005 = vunpack.c.h.b16 %v1709
  %v2006 = vunpack.c.l.b16 %v1710
  %v2007 = vunpack.c.h.b16 %v1710
  %v2008 = vunpack.c.l.b16 %v1711
  %v2009 = vunpack.c.h.b16 %v1711
  %v2010 = vunpack.c.l.b16 %v1712
  %v2011 = vunpack.c.h.b16 %v1712
  %v2012 = vunpack.c.l.b16 %v1713
  %v2013 = vunpack.c.h.b16 %v1713
  %v2014 = vunpack.c.l.b16 %v1714
  %v2015 = vunpack.c.h.b16 %v1714
  %v2016 = vunpack.c.l.b16 %v1715
  %v2017 = vunpack.c.h.b16 %v1715
  %v2018 = vunpack.c.l.b16 %v1716
  %v2019 = vunpack.c.h.b16 %v1716
  %v2020 = vunpack.c.l.b16 %v1717
  %v2021 = vunpack.c.h.b16 %v1717
  %v2022 = vunpack.c.l.b16 %v1718
  %v2023 = vunpack.c.h.b16 %v1718
  %v2024 = vunpack.c.l.b16 %v1719
  %v2025 = vunpack.c.h.b16 %v1719
  %v2026 = vunpack.c.l.b16 %v1720
  %v2027 = vunpack.c.h.b16 %v1720
  %v2028 = vunpack.c.l.b16 %v1721
  %v2029 = vunpack.c.h.b16 %v1721
  %v2030 = vunpack.c.l.b16 %v1722
  %v2031 = vunpack.c.h.b16 %v1722
  %v2032 = vunpack.c.l.b16 %v1723
  %v2033 = vunpack.c.h.b16 %v1723
  %v2034 = vunpack.c.l.b16 %v1724
  %v2035 = vunpack.c.h.b16 %v1724
  %v2036 = vunpack.c.l.b16 %v1725
  %v2037 = vunpack.c.h.b16 %v1725
  %v2038 = vunpack.c.l.b16 %v1726
  %v2039 = vunpack.c.h.b16 %v1726
  %v2040 = vunpack.c.l.b16 %v1727
  %v2041 = vunpack.c.h.b16 %v1727
  %v2042 = vunpack.c.l.b16 %v1728
  %v2043 = vunpack.c.h.b16 %v1728
  %v2044 = vunpack.c.l.b16 %v1729
  %v2045 = vunpack.c.h.b16 %v1729
  %v2046 = vunpack.c.l.b16 %v1730
  %v2047 = vunpack.c.h.b16 %v1730
  %v2048 = vunpack.c.l.b16 %v1731
  %v2049 = vunpack.c.h.b16 %v1731
  %v2050 = vunpack.c.l.b16 %v1732
  %v2051 = vunpack.c.h.b16 %v1732
  %v2052 = vunpack.c.l.b16 %v1733
  %v2053 = vunpack.c.h.b16 %v1733
  %v2054 = vunpack.c.l.b16 %v1734
  %v2055 = vunpack.c.h.b16 %v1734
  %v2056 = vunpack.c.l.b16 %v1735
  %v2057 = vunpack.c.h.b16 %v1735
  %v2058 = vunpack.c.l.b16 %v1736
  %v2059 = vunpack.c.h.b16 %v1736
  %v2060 = vunpack.c.l.b16 %v1737
  %v2061 = vunpack.c.h.b16 %v1737
  %v2062 = vunpack.c.l.b16 %v1738
  %v2063 = vunpack.c.h.b16 %v1738
  %v2064 = vunpack.c.l.b16 %v1739
  %v2065 = vunpack.c.h.b16 %v1739
  %v2066 = vunpack.c.l.b16 %v1740
  %v2067 = vunpack.c.h.b16 %v1740
  %v2068 = vunpack.c.l.b16 %v1741
  %v2069 = vunpack.c.h.b16 %v1741
  %v2070 = vunpack.c.l.b16 %v1742
  %v2071 = vunpack.c.h.b16 %v1742
  %v2072 = vunpack.c.l.b16 %v1743
  %v2073 = vunpack.c.h.b16 %v1743
  %v2074 = vunpack.c.l.b16 %v1744
  %v2075 = vunpack.c.h.b16 %v1744
  %v2076 = vunpack.c.l.b16 %v1745
  %v2077 = vunpack.c.h.b16 %v1745
  %v2078 = vunpack.c.l.b16 %v1746
  %v2079 = vunpack.c.h.b16 %v1746
  %v2080 = vunpack.c.l.b16 %v1747
  %v2081 = vunpack.c.h.b16 %v1747
  %v2082 = vunpack.c.l.b16 %v1748
  %v2083 = vunpack.c.h.b16 %v1748
  %v2084 = vunpack.c.l.b16 %v1749
  %v2085 = vunpack.c.h.b16 %v1749
  %v2086 = vunpack.c.l.b16 %v1750
  %v2087 = vunpack.c.h.b16 %v1750
  %v2088 = vunpack.c.l.b16 %v1751
  %v2089 = vunpack.c.h.b16 %v1751
  %v2090 = vunpack.c.l.b16 %v1752
  %v2091 = vunpack.c.h.b16 %v1752
  %v2092 = vunpack.c.l.b16 %v1753
  %v2093 = vunpack.c.h.b16 %v1753
  %v2094 = vunpack.c.l.b16 %v1754
  %v2095 = vunpack.c.h.b16 %v1754
  %v2096 = vunpack.c.l.b16 %v1755
  %v2097 = vunpack.c.h.b16 %v1755
  %v2098 = vunpack.c.l.b16 %v1756
  %v2099 = vunpack.c.h.b16 %v1756
  %v2100 = vunpack.c.l.b16 %v1757
  %v2101 = vunpack.c.h.b16 %v1757
  %v2102 = vunpack.c.l.b16 %v1758
  %v2103 = vunpack.c.h.b16 %v1758
  %v2104 = vunpack.c.l.b16 %v1759
  %v2105 = vunpack.c.h.b16 %v1759
  %v2106 = vunpack.c.l.b16 %v1760
  %v2107 = vunpack.c.h.b16 %v1760
  %v2108 = vunpack.c.l.b16 %v1761
  %v2109 = vunpack.c.h.b16 %v1761
  %v2110 = vunpack.c.l.b16 %v1762
  %v2111 = vunpack.c.h.b16 %v1762
  %v2112 = vunpack.c.l.b16 %v1763
  %v2113 = vunpack.c.h.b16 %v1763
  %v2114 = vunpack.c.l.b16 %v1764
  %v2115 = vunpack.c.h.b16 %v1764
  %v2116 = vunpack.c.l.b16 %v1765
  %v2117 = vunpack.c.h.b16 %v1765
  %v2118 = vunpack.c.l.b16 %v1766
  %v2119 = vunpack.c.h.b16 %v1766
  %v2120 = vunpack.c.l.b16 %v1767
  %v2121 = vunpack.c.h.b16 %v1767
  %v2122 = vunpack.c.l.b16 %v1768
  %v2123 = vunpack.c.h.b16 %v1768
  %v2124 = vunpack.c.l.b16 %v1769
  %v2125 = vunpack.c.h.b16 %v1769
  %v2126 = vunpack.c.l.b16 %v1770
  %v2127 = vunpack.c.h.b16 %v1770
  %v2128 = vunpack.c.l.b16 %v1771
  %v2129 = vunpack.c.h.b16 %v1771
  %v2130 = vunpack.c.l.b16 %v1772
  %v2131 = vunpack.c.h.b16 %v1772
  %v2132 = vunpack.c.l.b16 %v1773
  %v2133 = vunpack.c.h.b16 %v1773
  %v2134 = vunpack.c.l.b16 %v1774
  %v2135 = vunpack.c.h.b16 %v1774
  %v2136 = vunpack.c.l.b16 %v1775
  %v2137 = vunpack.c.h.b16 %v1775
  %v2138 = vunpack.c.l.b16 %v1776
  %v2139 = vunpack.c.h.b16 %v1776
  %v2140 = vunpack.c.l.b16 %v1777
  %v2141 = vunpack.c.h.b16 %v1777
  %v2142 = vunpack.c.l.b16 %v1778
  %v2143 = vunpack.c.h.b16 %v1778
  %v2144 = vunpack.c.l.b16 %v1779
  %v2145 = vunpack.c.h.b16 %v1779
  %v2146 = vunpack.c.l.b16 %v1780
  %v2147 = vunpack.c.h.b16 %v1780
  %v2148 = vunpack.c.l.b16 %v1781
  %v2149 = vunpack.c.h.b16 %v1781
  %v2150 = vunpack.c.l.b16 %v1782
  %v2151 = vunpack.c.h.b16 %v1782
  %v2152 = vunpack.c.l.b16 %v1783
  %v2153 = vunpack.c.h.b16 %v1783
  %v2154 = vunpack.c.l.b16 %v1784
  %v2155 = vunpack.c.h.b16 %v1784
  %v2156 = vunpack.c.l.b16 %v1785
  %v2157 = vunpack.c.h.b16 %v1785
  %v2158 = vunpack.c.l.b16 %v1786
  %v2159 = vunpack.c.h.b16 %v1786
  %v2160 = vunpack.c.l.b16 %v1787
  %v2161 = vunpack.c.h.b16 %v1787
  %v2162 = vunpack.c.l.b16 %v1788
  %v2163 = vunpack.c.h.b16 %v1788
  %v2164 = vunpack.c.l.b16 %v1789
  %v2165 = vunpack.c.h.b16 %v1789
  %v2166 = vunpack.c.l.b16 %v1790
  %v2167 = vunpack.c.h.b16 %v1790
  %v2168 = vunpack.c.l.b16 %v1791
  %v2169 = vunpack.c.h.b16 %v1791
  %v2170 = vunpack.c.l.b16 %v1792
  %v2171 = vunpack.c.h.b16 %v1792
  %v2172 = vunpack.c.l.b16 %v1793
  %v2173 = vunpack.c.h.b16 %v1793
  %v2174 = vunpack.c.l.b16 %v1794
  %v2175 = vunpack.c.h.b16 %v1794
  %v2176 = vunpack.c.l.b16 %v1795
  %v2177 = vunpack.c.h.b16 %v1795
  %v2178 = vunpack.c.l.b16 %v1796
  %v2179 = vunpack.c.h.b16 %v1796
  %v2180 = vunpack.c.l.b16 %v1797
  %v2181 = vunpack.c.h.b16 %v1797
  %v2182 = vunpack.c.l.b16 %v1798
  %v2183 = vunpack.c.h.b16 %v1798
  %v2184 = vunpack.c.l.b16 %v1799
  %v2185 = vunpack.c.h.b16 %v1799
  %v2186 = vunpack.c.l.b16 %v1800
  %v2187 = vunpack.c.h.b16 %v1800
  %v2188 = vunpack.c.l.b16 %v1801
  %v2189 = vunpack.c.h.b16 %v1801
  %v2190 = vunpack.c.l.b16 %v1802
  %v2191 = vunpack.c.h.b16 %v1802
  %v2192 = vunpack.c.l.b16 %v1803
  %v2193 = vunpack.c.h.b16 %v1803
  %v2194 = vunpack.c.l.b16 %v1804
  %v2195 = vunpack.c.h.b16 %v1804
  %v2196 = vunpack.c.l.b16 %v1805
  %v2197 = vunpack.c.h.b16 %v1805
  %v2198 = vunpack.c.l.b16 %v1806
  %v2199 = vunpack.c.h.b16 %v1806
  %v2200 = vunpack.c.l.b16 %v1807
  %v2201 = vunpack.c.h.b16 %v1807
  %v2202 = vunpack.c.l.b16 %v1808
  %v2203 = vunpack.c.h.b16 %v1808
  %v2204 = vunpack.c.l.b16 %v1809
  %v2205 = vunpack.c.h.b16 %v1809
  %v2206 = vpack.c.b16 %v1952, %v1950
  %v2207 = vpack.c.b16 %v1953, %v1951
  %v2208 = vpack.c.b16 %v1956, %v1954
  %v2209 = vpack.c.b16 %v1957, %v1955
  %v2210 = vpack.c.b16 %v1960, %v1958
  %v2211 = vpack.c.b16 %v1961, %v1959
  %v2212 = vpack.c.b16 %v1964, %v1962
  %v2213 = vpack.c.b16 %v1965, %v1963
  %v2214 = vpack.c.b16 %v1968, %v1966
  %v2215 = vpack.c.b16 %v1969, %v1967
  %v2216 = vpack.c.b16 %v1972, %v1970
  %v2217 = vpack.c.b16 %v1973, %v1971
  %v2218 = vpack.c.b16 %v1976, %v1974
  %v2219 = vpack.c.b16 %v1977, %v1975
  %v2220 = vpack.c.b16 %v1980, %v1978
  %v2221 = vpack.c.b16 %v1981, %v1979
  %v2222 = vpack.c.b16 %v1984, %v1982
  %v2223 = vpack.c.b16 %v1985, %v1983
  %v2224 = vpack.c.b16 %v1988, %v1986
  %v2225 = vpack.c.b16 %v1989, %v1987
  %v2226 = vpack.c.b16 %v1992, %v1990
  %v2227 = vpack.c.b16 %v1993, %v1991
  %v2228 = vpack.c.b16 %v1996, %v1994
  %v2229 = vpack.c.b16 %v1997, %v1995
  %v2230 = vpack.c.b16 %v2000, %v1998
  %v2231 = vpack.c.b16 %v2001, %v1999
  %v2232 = vpack.c.b16 %v2004, %v2002
  %v2233 = vpack.c.b16 %v2005, %v2003
  %v2234 = vpack.c.b16 %v2008, %v2006
  %v2235 = vpack.c.b16 %v2009, %v2007
  %v2236 = vpack.c.b16 %v2012, %v2010
  %v2237 = vpack.c.b16 %v2013, %v2011
  %v2238 = vpack.c.b16 %v2016, %v2014
  %v2239 = vpack.c.b16 %v2017, %v2015
  %v2240 = vpack.c.b16 %v2020, %v2018
  %v2241 = vpack.c.b16 %v2021, %v2019
  %v2242 = vpack.c.b16 %v2024, %v2022
  %v2243 = vpack.c.b16 %v2025, %v2023
  %v2244 = vpack.c.b16 %v2028, %v2026
  %v2245 = vpack.c.b16 %v2029, %v2027
  %v2246 = vpack.c.b16 %v2032, %v2030
  %v2247 = vpack.c.b16 %v2033, %v2031
  %v2248 = vpack.c.b16 %v2036, %v2034
  %v2249 = vpack.c.b16 %v2037, %v2035
  %v2250 = vpack.c.b16 %v2040, %v2038
  %v2251 = vpack.c.b16 %v2041, %v2039
  %v2252 = vpack.c.b16 %v2044, %v2042
  %v2253 = vpack.c.b16 %v2045, %v2043
  %v2254 = vpack.c.b16 %v2048, %v2046
  %v2255 = vpack.c.b16 %v2049, %v2047
  %v2256 = vpack.c.b16 %v2052, %v2050
  %v2257 = vpack.c.b16 %v2053, %v2051
  %v2258 = vpack.c.b16 %v2056, %v2054
  %v2259 = vpack.c.b16 %v2057, %v2055
  %v2260 = vpack.c.b16 %v2060, %v2058
  %v2261 = vpack.c.b16 %v2061, %v2059
  %v2262 = vpack.c.b16 %v2064, %v2062
  %v2263 = vpack.c.b16 %v2065, %v2063
  %v2264 = vpack.c.b16 %v2068, %v2066
  %v2265 = vpack.c.b16 %v2069, %v2067
  %v2266 = vpack.c.b16 %v2072, %v2070
  %v2267 = vpack.c.b16 %v2073, %v2071
  %v2268 = vpack.c.b16 %v2076, %v2074
  %v2269 = vpack.c.b16 %v2077, %v2075
  %v2270 = vpack.c.b16 %v2080, %v2078
  %v2271 = vpack.c.b16 %v2081, %v2079
  %v2272 = vpack.c.b16 %v2084, %v2082
  %v2273 = vpack.c.b16 %v2085, %v2083
  %v2274 = vpack.c.b16 %v2088, %v2086
  %v2275 = vpack.c.b16 %v2089, %v2087
  %v2276 = vpack.c.b16 %v2092, %v2090
  %v2277 = vpack.c.b16 %v2093, %v2091
  %v2278 = vpack.c.b16 %v2096, %v2094
  %v2279 = vpack.c.b16 %v2097, %v2095
  %v2280 = vpack.c.b16 %v2100, %v2098
  %v2281 = vpack.c.b16 %v2101, %v2099
  %v2282 = vpack.c.b16 %v2104, %v2102
  %v2283 = vpack.c.b16 %v2105, %v2103
  %v2284 = vpack.c.b16 %v2108, %v2106
  %v2285 = vpack.c.b16 %v2109, %v2107
  %v2286 = vpack.c.b16 %v2112, %v2110
  %v2287 = vpack.c.b16 %v2113, %v2111
  %v2288 = vpack.c.b16 %v2116, %v2114
  %v2289 = vpack.c.b16 %v2117, %v2115
  %v2290 = vpack.c.b16 %v2120, %v2118
  %v2291 = vpack.c.b16 %v2121, %v2119
  %v2292 = vpack.c.b16 %v2124, %v2122
  %v2293 = vpack.c.b16 %v2125, %v2123
  %v2294 = vpack.c.b16 %v2128, %v2126
  %v2295 = vpack.c.b16 %v2129, %v2127
  %v2296 = vpack.c.b16 %v2132, %v2130
  %v2297 = vpack.c.b16 %v2133, %v2131
  %v2298 = vpack.c.b16 %v2136, %v2134
  %v2299 = vpack.c.b16 %v2137, %v2135
  %v2300 = vpack.c.b16 %v2140, %v2138
  %v2301 = vpack.c.b16 %v2141, %v2139
  %v2302 = vpack.c.b16 %v2144, %v2142
  %v2303 = vpack.c.b16 %v2145, %v2143
  %v2304 = vpack.c.b16 %v2148, %v2146
  %v2305 = vpack.c.b16 %v2149, %v2147
  %v2306 = vpack.c.b16 %v2152, %v2150
  %v2307 = vpack.c.b16 %v2153, %v2151
  %v2308 = vpack.c.b16 %v2156, %v2154
  %v2309 = vpack.c.b16 %v2157, %v2155
  %v2310 = vpack.c.b16 %v2160, %v2158
  %v2311 = vpack.c.b16 %v2161, %v2159
  %v2312 = vpack.c.b16 %v2164, %v2162
  %v2313 = vpack.c.b16 %v2165, %v2163
  %v2314 = vpack.c.b16 %v2168, %v2166
  %v2315 = vpack.c.b16 %v2169, %v2167
  %v2316 = vpack.c.b16 %v2172, %v2170
  %v2317 = vpack.c.b16 %v2173, %v2171
  %v2318 = vpack.c.b16 %v2176, %v2174
  %v2319 = vpack.c.b16 %v2177, %v2175
  %v2320 = vpack.c.b16 %v2180, %v2178
  %v2321 = vpack.c.b16 %v2181, %v2179
  %v2322 = vpack.c.b16 %v2184, %v2182
  %v2323 = vpack.c.b16 %v2185, %v2183
  %v2324 = vpack.c.b16 %v2188, %v2186
  %v2325 = vpack.c.b16 %v2189, %v2187
  %v2326 = vpack.c.b16 %v2192, %v2190
  %v2327 = vpack.c.b16 %v2193, %v2191
  %v2328 = vpack.c.b16 %v2196, %v2194
  %v2329 = vpack.c.b16 %v2197, %v2195
  %v2330 = vpack.c.b16 %v2200, %v2198
  %v2331 = vpack.c.b16 %v2201, %v2199
  %v2332 = vpack.c.b16 %v2204, %v2202
  %v2333 = vpack.c.b16 %v2205, %v2203
  %2462 = vmatprep.subr.bf16.mxu0 %v2207
  %2463 = vmatpush1.bf16.msra.mxu0 %v2206
  %2464 = vmatprep.subr.bf16.mxu0 %v2209
  %2465 = vmatpush1.bf16.msra.mxu0 %v2208
  %2466 = vmatprep.subr.bf16.mxu0 %v2211
  %2467 = vmatpush1.bf16.msra.mxu0 %v2210
  %2468 = vmatprep.subr.bf16.mxu0 %v2213
  %2469 = vmatpush1.bf16.msra.mxu0 %v2212
  %2470 = vmatprep.subr.bf16.mxu0 %v2215
  %2471 = vmatpush1.bf16.msra.mxu0 %v2214
  %2472 = vmatprep.subr.bf16.mxu0 %v2217
  %2473 = vmatpush1.bf16.msra.mxu0 %v2216
  %2474 = vmatprep.subr.bf16.mxu0 %v2219
  %2475 = vmatpush1.bf16.msra.mxu0 %v2218
  %2476 = vmatprep.subr.bf16.mxu0 %v2221
  %2477 = vmatpush1.bf16.msra.mxu0 %v2220
  %2478 = vmatprep.subr.bf16.mxu0 %v2223
  %2479 = vmatpush1.bf16.msra.mxu0 %v2222
  %2480 = vmatprep.subr.bf16.mxu0 %v2225
  %2481 = vmatpush1.bf16.msra.mxu0 %v2224
  %2482 = vmatprep.subr.bf16.mxu0 %v2227
  %2483 = vmatpush1.bf16.msra.mxu0 %v2226
  %2484 = vmatprep.subr.bf16.mxu0 %v2229
  %2485 = vmatpush1.bf16.msra.mxu0 %v2228
  %2486 = vmatprep.subr.bf16.mxu0 %v2231
  %2487 = vmatpush1.bf16.msra.mxu0 %v2230
  %2488 = vmatprep.subr.bf16.mxu0 %v2233
  %2489 = vmatpush1.bf16.msra.mxu0 %v2232
  %2490 = vmatprep.subr.bf16.mxu0 %v2235
  %2491 = vmatpush1.bf16.msra.mxu0 %v2234
  %2492 = vmatprep.subr.bf16.mxu0 %v2237
  %2493 = vmatpush1.bf16.msra.mxu0 %v2236
  %2494 = vmatprep.mubr.bf16.mxu0 %v1675
  %2495 = vmatmul.mubr.bf16.gmra.mrb[0].mxu0 %v1674
  %v2496 = vpop.f32.mrb[0].mxu0
  %v2497 = vadd.f32 %v1815, %v2496
  %v2498 = vpop.f32.mrb[0].mxu0
  %v2499 = vadd.f32 %v1819, %v2498
  %v2500 = vpop.f32.mrb[0].mxu0
  %v2501 = vadd.f32 %v1815, %v2500
  %v2502 = vpop.f32.mrb[0].mxu0
  %v2503 = vadd.f32 %v1819, %v2502
  %2504 = vdwg.mxu0
  %2505 = vmatprep.subr.bf16.mxu0 %v2239
  %2506 = vmatpush1.bf16.msra.mxu0 %v2238
  %2507 = vmatprep.subr.bf16.mxu0 %v2241
  %2508 = vmatpush1.bf16.msra.mxu0 %v2240
  %2509 = vmatprep.subr.bf16.mxu0 %v2243
  %2510 = vmatpush1.bf16.msra.mxu0 %v2242
  %2511 = vmatprep.subr.bf16.mxu0 %v2245
  %2512 = vmatpush1.bf16.msra.mxu0 %v2244
  %2513 = vmatprep.subr.bf16.mxu0 %v2247
  %2514 = vmatpush1.bf16.msra.mxu0 %v2246
  %2515 = vmatprep.subr.bf16.mxu0 %v2249
  %2516 = vmatpush1.bf16.msra.mxu0 %v2248
  %2517 = vmatprep.subr.bf16.mxu0 %v2251
  %2518 = vmatpush1.bf16.msra.mxu0 %v2250
  %2519 = vmatprep.subr.bf16.mxu0 %v2253
  %2520 = vmatpush1.bf16.msra.mxu0 %v2252
  %2521 = vmatprep.subr.bf16.mxu0 %v2255
  %2522 = vmatpush1.bf16.msra.mxu0 %v2254
  %2523 = vmatprep.subr.bf16.mxu0 %v2257
  %2524 = vmatpush1.bf16.msra.mxu0 %v2256
  %2525 = vmatprep.subr.bf16.mxu0 %v2259
  %2526 = vmatpush1.bf16.msra.mxu0 %v2258
  %2527 = vmatprep.subr.bf16.mxu0 %v2261
  %2528 = vmatpush1.bf16.msra.mxu0 %v2260
  %2529 = vmatprep.subr.bf16.mxu0 %v2263
  %2530 = vmatpush1.bf16.msra.mxu0 %v2262
  %2531 = vmatprep.subr.bf16.mxu0 %v2265
  %2532 = vmatpush1.bf16.msra.mxu0 %v2264
  %2533 = vmatprep.subr.bf16.mxu0 %v2267
  %2534 = vmatpush1.bf16.msra.mxu0 %v2266
  %2535 = vmatprep.subr.bf16.mxu0 %v2269
  %2536 = vmatpush1.bf16.msra.mxu0 %v2268
  %2537 = vmatprep.mubr.bf16.mxu0 %v1677
  %2538 = vmatmul.mubr.bf16.gmra.mrb[0].mxu0 %v1676
  %v2539 = vpop.f32.mrb[0].mxu0
  %v2540 = vadd.f32 %v2497, %v2539
  %v2541 = vpop.f32.mrb[0].mxu0
  %v2542 = vadd.f32 %v2499, %v2541
  %v2543 = vpop.f32.mrb[0].mxu0
  %v2544 = vadd.f32 %v2501, %v2543
  %v2545 = vpop.f32.mrb[0].mxu0
  %v2546 = vadd.f32 %v2503, %v2545
  %2547 = vdwg.mxu0
  %2548 = vmatprep.subr.bf16.mxu0 %v2271
  %2549 = vmatpush1.bf16.msra.mxu0 %v2270
  %2550 = vmatprep.subr.bf16.mxu0 %v2273
  %2551 = vmatpush1.bf16.msra.mxu0 %v2272
  %2552 = vmatprep.subr.bf16.mxu0 %v2275
  %2553 = vmatpush1.bf16.msra.mxu0 %v2274
  %2554 = vmatprep.subr.bf16.mxu0 %v2277
  %2555 = vmatpush1.bf16.msra.mxu0 %v2276
  %2556 = vmatprep.subr.bf16.mxu0 %v2279
  %2557 = vmatpush1.bf16.msra.mxu0 %v2278
  %2558 = vmatprep.subr.bf16.mxu0 %v2281
  %2559 = vmatpush1.bf16.msra.mxu0 %v2280
  %2560 = vmatprep.subr.bf16.mxu0 %v2283
  %2561 = vmatpush1.bf16.msra.mxu0 %v2282
  %2562 = vmatprep.subr.bf16.mxu0 %v2285
  %2563 = vmatpush1.bf16.msra.mxu0 %v2284
  %2564 = vmatprep.subr.bf16.mxu0 %v2287
  %2565 = vmatpush1.bf16.msra.mxu0 %v2286
  %2566 = vmatprep.subr.bf16.mxu0 %v2289
  %2567 = vmatpush1.bf16.msra.mxu0 %v2288
  %2568 = vmatprep.subr.bf16.mxu0 %v2291
  %2569 = vmatpush1.bf16.msra.mxu0 %v2290
  %2570 = vmatprep.subr.bf16.mxu0 %v2293
  %2571 = vmatpush1.bf16.msra.mxu0 %v2292
  %2572 = vmatprep.subr.bf16.mxu0 %v2295
  %2573 = vmatpush1.bf16.msra.mxu0 %v2294
  %2574 = vmatprep.subr.bf16.mxu0 %v2297
  %2575 = vmatpush1.bf16.msra.mxu0 %v2296
  %2576 = vmatprep.subr.bf16.mxu0 %v2299
  %2577 = vmatpush1.bf16.msra.mxu0 %v2298
  %2578 = vmatprep.subr.bf16.mxu0 %v2301
  %2579 = vmatpush1.bf16.msra.mxu0 %v2300
  %2580 = vmatprep.mubr.bf16.mxu0 %v1679
  %2581 = vmatmul.mubr.bf16.gmra.mrb[0].mxu0 %v1678
  %v2582 = vpop.f32.mrb[0].mxu0
  %v2583 = vadd.f32 %v2540, %v2582
  %v2584 = vpop.f32.mrb[0].mxu0
  %v2585 = vadd.f32 %v2542, %v2584
  %v2586 = vpop.f32.mrb[0].mxu0
  %v2587 = vadd.f32 %v2544, %v2586
  %v2588 = vpop.f32.mrb[0].mxu0
  %v2589 = vadd.f32 %v2546, %v2588
  %2590 = vdwg.mxu0
  %2591 = vmatprep.subr.bf16.mxu0 %v2303
  %2592 = vmatpush1.bf16.msra.mxu0 %v2302
  %2593 = vmatprep.subr.bf16.mxu0 %v2305
  %2594 = vmatpush1.bf16.msra.mxu0 %v2304
  %2595 = vmatprep.subr.bf16.mxu0 %v2307
  %2596 = vmatpush1.bf16.msra.mxu0 %v2306
  %2597 = vmatprep.subr.bf16.mxu0 %v2309
  %2598 = vmatpush1.bf16.msra.mxu0 %v2308
  %2599 = vmatprep.subr.bf16.mxu0 %v2311
  %2600 = vmatpush1.bf16.msra.mxu0 %v2310
  %2601 = vmatprep.subr.bf16.mxu0 %v2313
  %2602 = vmatpush1.bf16.msra.mxu0 %v2312
  %2603 = vmatprep.subr.bf16.mxu0 %v2315
  %2604 = vmatpush1.bf16.msra.mxu0 %v2314
  %2605 = vmatprep.subr.bf16.mxu0 %v2317
  %2606 = vmatpush1.bf16.msra.mxu0 %v2316
  %2607 = vmatprep.subr.bf16.mxu0 %v2319
  %2608 = vmatpush1.bf16.msra.mxu0 %v2318
  %2609 = vmatprep.subr.bf16.mxu0 %v2321
  %2610 = vmatpush1.bf16.msra.mxu0 %v2320
  %2611 = vmatprep.subr.bf16.mxu0 %v2323
  %2612 = vmatpush1.bf16.msra.mxu0 %v2322
  %2613 = vmatprep.subr.bf16.mxu0 %v2325
  %2614 = vmatpush1.bf16.msra.mxu0 %v2324
  %2615 = vmatprep.subr.bf16.mxu0 %v2327
  %2616 = vmatpush1.bf16.msra.mxu0 %v2326
  %2617 = vmatprep.subr.bf16.mxu0 %v2329
  %2618 = vmatpush1.bf16.msra.mxu0 %v2328
  %2619 = vmatprep.subr.bf16.mxu0 %v2331
  %2620 = vmatpush1.bf16.msra.mxu0 %v2330
  %2621 = vmatprep.subr.bf16.mxu0 %v2333
  %2622 = vmatpush1.bf16.msra.mxu0 %v2332
  %2623 = vmatprep.mubr.bf16.mxu0 %v1681
  %2624 = vmatmul.mubr.bf16.gmra.mrb[0].mxu0 %v1680
  %v2625 = vpop.f32.mrb[0].mxu0
  %v2626 = vadd.f32 %v2583, %v2625
  %v2627 = vpop.f32.mrb[0].mxu0
  %v2628 = vadd.f32 %v2585, %v2627
  %v2629 = vpop.f32.mrb[0].mxu0
  %v2630 = vadd.f32 %v2587, %v2629
  %v2631 = vpop.f32.mrb[0].mxu0
  %v2632 = vadd.f32 %v2589, %v2631
  %2633 = vdwg.mxu0
  %v2634 = vmax.f32 %v2626, 0.0
  %v2635 = vmax.f32 %v2628, 0.0
  %v2636 = vmax.f32 %v2630, 0.0
  %v2637 = vmax.f32 %v2632, 0.0
  %v2642 = vrot.slane %v2634, 1
  %v2643 = vrot.slane %v2635, 1
  %v2644 = vrot.slane %v2636, 1
  %v2645 = vsel %vm818, %v2642, %v2644
  %v2646 = vrot.slane %v2637, 1
  %v2647 = vsel %vm818, %v2643, %v2646
  %2654 = vst [vmem:[#allocation2] sm:$0x80] %v2642
  %2655 = vst [vmem:[#allocation2 + $0x8] sm:$0x80] %v2643
  %2656 = vst [vmem:[#allocation2 + $0x10] sm:$0xff] %v2645
  %2657 = vst [vmem:[#allocation2 + $0x18] sm:$0xff] %v2647
  %2658 = vst [vmem:[#allocation2 + $0x20] sm:$0x7f] %v2644
  %2659 = vst [vmem:[#allocation2 + $0x28] sm:$0x7f] %v2646
  %v2660 = vld [vmem:[#allocation2] sm:$0xff]
  %v2661 = vld [vmem:[#allocation2 + $0x8] sm:$0xff]
  %v2662 = vld [vmem:[#allocation2 + $0x10] sm:$0xff]
  %v2663 = vld [vmem:[#allocation2 + $0x18] sm:$0xff]
  %v2664 = vld [vmem:[#allocation2] sm:$0xfc]
  %v2665 = vld [vmem:[#allocation2 + $0x8] sm:$0xfc]
  %v2666 = vld [vmem:[#allocation2 + $0x20] sm:$0x3]
  %v2667 = vld [vmem:[#allocation2 + $0x28] sm:$0x3]
  %v2668 = vld [vmem:[#allocation2] sm:$0xf0]
  %v2669 = vld [vmem:[#allocation2 + $0x8] sm:$0xf0]
  %v2670 = vld [vmem:[#allocation2 + $0x20] sm:$0xf]
  %v2671 = vld [vmem:[#allocation2 + $0x28] sm:$0xf]
  %v2672 = vld [vmem:[#allocation2] sm:$0xc0]
  %v2673 = vld [vmem:[#allocation2 + $0x8] sm:$0xc0]
  %v2674 = vld [vmem:[#allocation2 + $0x20] sm:$0x3f]
  %v2675 = vld [vmem:[#allocation2 + $0x28] sm:$0x3f]
  %v2676 = vld [vmem:[#allocation2 + $0x20] sm:$0xff]
  %v2677 = vld [vmem:[#allocation2 + $0x28] sm:$0xff]
  %v2678 = vld [vmem:[#allocation2 + $0x10] sm:$0xfc]
  %v2679 = vld [vmem:[#allocation2 + $0x18] sm:$0xfc]
  %v2680 = vld [vmem:[#allocation2 + $0x20] sm:$0xff]
  %v2681 = vld [vmem:[#allocation2 + $0x28] sm:$0xff]
  %v2682 = vld [vmem:[#allocation2 + $0x30] sm:$0x3]
  %v2683 = vld [vmem:[#allocation2 + $0x38] sm:$0x3]
  %v2684 = vld [vmem:[#allocation2 + $0x10] sm:$0xf0]
  %v2685 = vld [vmem:[#allocation2 + $0x18] sm:$0xf0]
  %v2686 = vld [vmem:[#allocation2 + $0x30] sm:$0xf]
  %v2687 = vld [vmem:[#allocation2 + $0x38] sm:$0xf]
  %v2688 = vld [vmem:[#allocation2 + $0x10] sm:$0xc0]
  %v2689 = vld [vmem:[#allocation2 + $0x18] sm:$0xc0]
  %v2690 = vld [vmem:[#allocation2 + $0x30] sm:$0x3f]
  %v2691 = vld [vmem:[#allocation2 + $0x38] sm:$0x3f]
  %v2698 = vrot.slane %v2664, 2
  %v2699 = vrot.slane %v2662, 2
  %v2700 = vsel %vm67, %v2698, %v2699
  %v2701 = vrot.slane %v2665, 2
  %v2702 = vrot.slane %v2663, 2
  %v2703 = vsel %vm67, %v2701, %v2702
  %v2704 = vrot.slane %v2666, 2
  %v2705 = vsel %vm67, %v2699, %v2704
  %v2706 = vrot.slane %v2667, 2
  %v2707 = vsel %vm67, %v2702, %v2706
  %v2716 = vrot.slane %v2668, 4
  %v2717 = vrot.slane %v2662, 4
  %v2718 = vsel %vm77, %v2716, %v2717
  %v2719 = vrot.slane %v2669, 4
  %v2720 = vrot.slane %v2663, 4
  %v2721 = vsel %vm77, %v2719, %v2720
  %v2722 = vrot.slane %v2670, 4
  %v2723 = vsel %vm77, %v2717, %v2722
  %v2724 = vrot.slane %v2671, 4
  %v2725 = vsel %vm77, %v2720, %v2724
  %v2734 = vrot.slane %v2672, 6
  %v2735 = vrot.slane %v2662, 6
  %v2736 = vsel %vm87, %v2734, %v2735
  %v2737 = vrot.slane %v2673, 6
  %v2738 = vrot.slane %v2663, 6
  %v2739 = vsel %vm87, %v2737, %v2738
  %v2740 = vrot.slane %v2674, 6
  %v2741 = vsel %vm87, %v2735, %v2740
  %v2742 = vrot.slane %v2675, 6
  %v2743 = vsel %vm87, %v2738, %v2742
  %v2754 = vrot.slane %v2678, 2
  %v2755 = vrot.slane %v2680, 2
  %v2756 = vsel %vm67, %v2754, %v2755
  %v2757 = vrot.slane %v2679, 2
  %v2758 = vrot.slane %v2681, 2
  %v2759 = vsel %vm67, %v2757, %v2758
  %v2760 = vrot.slane %v2682, 2
  %v2761 = vsel %vm67, %v2755, %v2760
  %v2762 = vrot.slane %v2683, 2
  %v2763 = vsel %vm67, %v2758, %v2762
  %v2772 = vrot.slane %v2684, 4
  %v2773 = vrot.slane %v2680, 4
  %v2774 = vsel %vm77, %v2772, %v2773
  %v2775 = vrot.slane %v2685, 4
  %v2776 = vrot.slane %v2681, 4
  %v2777 = vsel %vm77, %v2775, %v2776
  %v2778 = vrot.slane %v2686, 4
  %v2779 = vsel %vm77, %v2773, %v2778
  %v2780 = vrot.slane %v2687, 4
  %v2781 = vsel %vm77, %v2776, %v2780
  %v2790 = vrot.slane %v2688, 6
  %v2791 = vrot.slane %v2680, 6
  %v2792 = vsel %vm87, %v2790, %v2791
  %v2793 = vrot.slane %v2689, 6
  %v2794 = vrot.slane %v2681, 6
  %v2795 = vsel %vm87, %v2793, %v2794
  %v2796 = vrot.slane %v2690, 6
  %v2797 = vsel %vm87, %v2791, %v2796
  %v2798 = vrot.slane %v2691, 6
  %v2799 = vsel %vm87, %v2794, %v2798
  %v2804 = vpack.c.bf16 %v2662, %v2660
  %v2805 = vpack.c.bf16 %v2663, %v2661
  %v2806 = vpack.c.bf16 %v2705, %v2700
  %v2807 = vpack.c.bf16 %v2707, %v2703
  %v2808 = vpack.c.bf16 %v2723, %v2718
  %v2809 = vpack.c.bf16 %v2725, %v2721
  %v2810 = vpack.c.bf16 %v2741, %v2736
  %v2811 = vpack.c.bf16 %v2743, %v2739
  %v2812 = vpack.c.bf16 %v2676, %v2662
  %v2813 = vpack.c.bf16 %v2677, %v2663
  %v2814 = vpack.c.bf16 %v2761, %v2756
  %v2815 = vpack.c.bf16 %v2763, %v2759
  %v2816 = vpack.c.bf16 %v2779, %v2774
  %v2817 = vpack.c.bf16 %v2781, %v2777
  %v2818 = vpack.c.bf16 %v2797, %v2792
  %v2819 = vpack.c.bf16 %v2799, %v2795
  %v2820 = vld [vmem:[%s7] sm:$0xff]
  %v2821 = vld [vmem:[%s7 + $0x8] sm:$0xff]
  %v2822 = vld [vmem:[%s7 + $0x10] sm:$0xff]
  %v2823 = vld [vmem:[%s7 + $0x18] sm:$0xff]
  %v2824 = vld [vmem:[%s7 + $0x20] sm:$0xff]
  %v2825 = vld [vmem:[%s7 + $0x28] sm:$0xff]
  %v2826 = vld [vmem:[%s7 + $0x30] sm:$0xff]
  %v2827 = vld [vmem:[%s7 + $0x38] sm:$0xff]
  %v2828 = vld [vmem:[%s7 + $0x40] sm:$0xff]
  %v2829 = vld [vmem:[%s7 + $0x48] sm:$0xff]
  %v2830 = vld [vmem:[%s7 + $0x50] sm:$0xff]
  %v2831 = vld [vmem:[%s7 + $0x58] sm:$0xff]
  %v2832 = vld [vmem:[%s7 + $0x60] sm:$0xff]
  %v2833 = vld [vmem:[%s7 + $0x68] sm:$0xff]
  %v2834 = vld [vmem:[%s7 + $0x70] sm:$0xff]
  %v2835 = vld [vmem:[%s7 + $0x78] sm:$0xff]
  %v2836 = vld [vmem:[%s7 + $0x80] sm:$0xff]
  %v2837 = vld [vmem:[%s7 + $0x88] sm:$0xff]
  %v2838 = vld [vmem:[%s7 + $0x90] sm:$0xff]
  %v2839 = vld [vmem:[%s7 + $0x98] sm:$0xff]
  %v2840 = vld [vmem:[%s7 + $0xa0] sm:$0xff]
  %v2841 = vld [vmem:[%s7 + $0xa8] sm:$0xff]
  %v2842 = vld [vmem:[%s7 + $0xb0] sm:$0xff]
  %v2843 = vld [vmem:[%s7 + $0xb8] sm:$0xff]
  %v2844 = vld [vmem:[%s7 + $0xc0] sm:$0xff]
  %v2845 = vld [vmem:[%s7 + $0xc8] sm:$0xff]
  %v2846 = vld [vmem:[%s7 + $0xd0] sm:$0xff]
  %v2847 = vld [vmem:[%s7 + $0xd8] sm:$0xff]
  %v2848 = vld [vmem:[%s7 + $0xe0] sm:$0xff]
  %v2849 = vld [vmem:[%s7 + $0xe8] sm:$0xff]
  %v2850 = vld [vmem:[%s7 + $0xf0] sm:$0xff]
  %v2851 = vld [vmem:[%s7 + $0xf8] sm:$0xff]
  %v2852 = vld [vmem:[%s7 + $0x100] sm:$0xff]
  %v2853 = vld [vmem:[%s7 + $0x108] sm:$0xff]
  %v2854 = vld [vmem:[%s7 + $0x110] sm:$0xff]
  %v2855 = vld [vmem:[%s7 + $0x118] sm:$0xff]
  %v2856 = vld [vmem:[%s7 + $0x120] sm:$0xff]
  %v2857 = vld [vmem:[%s7 + $0x128] sm:$0xff]
  %v2858 = vld [vmem:[%s7 + $0x130] sm:$0xff]
  %v2859 = vld [vmem:[%s7 + $0x138] sm:$0xff]
  %v2860 = vld [vmem:[%s7 + $0x140] sm:$0xff]
  %v2861 = vld [vmem:[%s7 + $0x148] sm:$0xff]
  %v2862 = vld [vmem:[%s7 + $0x150] sm:$0xff]
  %v2863 = vld [vmem:[%s7 + $0x158] sm:$0xff]
  %v2864 = vld [vmem:[%s7 + $0x160] sm:$0xff]
  %v2865 = vld [vmem:[%s7 + $0x168] sm:$0xff]
  %v2866 = vld [vmem:[%s7 + $0x170] sm:$0xff]
  %v2867 = vld [vmem:[%s7 + $0x178] sm:$0xff]
  %v2868 = vld [vmem:[%s7 + $0x180] sm:$0xff]
  %v2869 = vld [vmem:[%s7 + $0x188] sm:$0xff]
  %v2870 = vld [vmem:[%s7 + $0x190] sm:$0xff]
  %v2871 = vld [vmem:[%s7 + $0x198] sm:$0xff]
  %v2872 = vld [vmem:[%s7 + $0x1a0] sm:$0xff]
  %v2873 = vld [vmem:[%s7 + $0x1a8] sm:$0xff]
  %v2874 = vld [vmem:[%s7 + $0x1b0] sm:$0xff]
  %v2875 = vld [vmem:[%s7 + $0x1b8] sm:$0xff]
  %v2876 = vld [vmem:[%s7 + $0x1c0] sm:$0xff]
  %v2877 = vld [vmem:[%s7 + $0x1c8] sm:$0xff]
  %v2878 = vld [vmem:[%s7 + $0x1d0] sm:$0xff]
  %v2879 = vld [vmem:[%s7 + $0x1d8] sm:$0xff]
  %v2880 = vld [vmem:[%s7 + $0x1e0] sm:$0xff]
  %v2881 = vld [vmem:[%s7 + $0x1e8] sm:$0xff]
  %v2882 = vld [vmem:[%s7 + $0x1f0] sm:$0xff]
  %v2883 = vld [vmem:[%s7 + $0x1f8] sm:$0xff]
  %v2884 = vld [vmem:[%s7 + $0x200] sm:$0xff]
  %v2885 = vld [vmem:[%s7 + $0x208] sm:$0xff]
  %v2886 = vld [vmem:[%s7 + $0x210] sm:$0xff]
  %v2887 = vld [vmem:[%s7 + $0x218] sm:$0xff]
  %v2888 = vld [vmem:[%s7 + $0x220] sm:$0xff]
  %v2889 = vld [vmem:[%s7 + $0x228] sm:$0xff]
  %v2890 = vld [vmem:[%s7 + $0x230] sm:$0xff]
  %v2891 = vld [vmem:[%s7 + $0x238] sm:$0xff]
  %v2892 = vld [vmem:[%s7 + $0x240] sm:$0xff]
  %v2893 = vld [vmem:[%s7 + $0x248] sm:$0xff]
  %v2894 = vld [vmem:[%s7 + $0x250] sm:$0xff]
  %v2895 = vld [vmem:[%s7 + $0x258] sm:$0xff]
  %v2896 = vld [vmem:[%s7 + $0x260] sm:$0xff]
  %v2897 = vld [vmem:[%s7 + $0x268] sm:$0xff]
  %v2898 = vld [vmem:[%s7 + $0x270] sm:$0xff]
  %v2899 = vld [vmem:[%s7 + $0x278] sm:$0xff]
  %v2900 = vld [vmem:[%s7 + $0x280] sm:$0xff]
  %v2901 = vld [vmem:[%s7 + $0x288] sm:$0xff]
  %v2902 = vld [vmem:[%s7 + $0x290] sm:$0xff]
  %v2903 = vld [vmem:[%s7 + $0x298] sm:$0xff]
  %v2904 = vld [vmem:[%s7 + $0x2a0] sm:$0xff]
  %v2905 = vld [vmem:[%s7 + $0x2a8] sm:$0xff]
  %v2906 = vld [vmem:[%s7 + $0x2b0] sm:$0xff]
  %v2907 = vld [vmem:[%s7 + $0x2b8] sm:$0xff]
  %v2908 = vld [vmem:[%s7 + $0x2c0] sm:$0xff]
  %v2909 = vld [vmem:[%s7 + $0x2c8] sm:$0xff]
  %v2910 = vld [vmem:[%s7 + $0x2d0] sm:$0xff]
  %v2911 = vld [vmem:[%s7 + $0x2d8] sm:$0xff]
  %v2912 = vld [vmem:[%s7 + $0x2e0] sm:$0xff]
  %v2913 = vld [vmem:[%s7 + $0x2e8] sm:$0xff]
  %v2914 = vld [vmem:[%s7 + $0x2f0] sm:$0xff]
  %v2915 = vld [vmem:[%s7 + $0x2f8] sm:$0xff]
  %v2916 = vld [vmem:[%s7 + $0x300] sm:$0xff]
  %v2917 = vld [vmem:[%s7 + $0x308] sm:$0xff]
  %v2918 = vld [vmem:[%s7 + $0x310] sm:$0xff]
  %v2919 = vld [vmem:[%s7 + $0x318] sm:$0xff]
  %v2920 = vld [vmem:[%s7 + $0x320] sm:$0xff]
  %v2921 = vld [vmem:[%s7 + $0x328] sm:$0xff]
  %v2922 = vld [vmem:[%s7 + $0x330] sm:$0xff]
  %v2923 = vld [vmem:[%s7 + $0x338] sm:$0xff]
  %v2924 = vld [vmem:[%s7 + $0x340] sm:$0xff]
  %v2925 = vld [vmem:[%s7 + $0x348] sm:$0xff]
  %v2926 = vld [vmem:[%s7 + $0x350] sm:$0xff]
  %v2927 = vld [vmem:[%s7 + $0x358] sm:$0xff]
  %v2928 = vld [vmem:[%s7 + $0x360] sm:$0xff]
  %v2929 = vld [vmem:[%s7 + $0x368] sm:$0xff]
  %v2930 = vld [vmem:[%s7 + $0x370] sm:$0xff]
  %v2931 = vld [vmem:[%s7 + $0x378] sm:$0xff]
  %v2932 = vld [vmem:[%s7 + $0x380] sm:$0xff]
  %v2933 = vld [vmem:[%s7 + $0x388] sm:$0xff]
  %v2934 = vld [vmem:[%s7 + $0x390] sm:$0xff]
  %v2935 = vld [vmem:[%s7 + $0x398] sm:$0xff]
  %v2936 = vld [vmem:[%s7 + $0x3a0] sm:$0xff]
  %v2937 = vld [vmem:[%s7 + $0x3a8] sm:$0xff]
  %v2938 = vld [vmem:[%s7 + $0x3b0] sm:$0xff]
  %v2939 = vld [vmem:[%s7 + $0x3b8] sm:$0xff]
  %v2940 = vld [vmem:[%s7 + $0x3c0] sm:$0xff]
  %v2941 = vld [vmem:[%s7 + $0x3c8] sm:$0xff]
  %v2942 = vld [vmem:[%s7 + $0x3d0] sm:$0xff]
  %v2943 = vld [vmem:[%s7 + $0x3d8] sm:$0xff]
  %v2944 = vld [vmem:[%s7 + $0x3e0] sm:$0xff]
  %v2945 = vld [vmem:[%s7 + $0x3e8] sm:$0xff]
  %v2946 = vld [vmem:[%s7 + $0x3f0] sm:$0xff]
  %v2947 = vld [vmem:[%s7 + $0x3f8] sm:$0xff]
  %v2948 = vld [vmem:[%s7 + $0x400] sm:$0xff]
  %v2949 = vld [vmem:[%s7 + $0x408] sm:$0xff]
  %v2950 = vld [vmem:[%s7 + $0x410] sm:$0xff]
  %v2951 = vld [vmem:[%s7 + $0x418] sm:$0xff]
  %v2952 = vld [vmem:[%s7 + $0x420] sm:$0xff]
  %v2953 = vld [vmem:[%s7 + $0x428] sm:$0xff]
  %v2954 = vld [vmem:[%s7 + $0x430] sm:$0xff]
  %v2955 = vld [vmem:[%s7 + $0x438] sm:$0xff]
  %v2956 = vld [vmem:[%s7 + $0x440] sm:$0xff]
  %v2957 = vld [vmem:[%s7 + $0x448] sm:$0xff]
  %v2958 = vld [vmem:[%s7 + $0x450] sm:$0xff]
  %v2959 = vld [vmem:[%s7 + $0x458] sm:$0xff]
  %v2960 = vld [vmem:[%s7 + $0x460] sm:$0xff]
  %v2961 = vld [vmem:[%s7 + $0x468] sm:$0xff]
  %v2962 = vld [vmem:[%s7 + $0x470] sm:$0xff]
  %v2963 = vld [vmem:[%s7 + $0x478] sm:$0xff]
  %v2964 = vld [vmem:[%s7 + $0x480] sm:$0xff]
  %v2965 = vld [vmem:[%s7 + $0x488] sm:$0xff]
  %v2966 = vld [vmem:[%s7 + $0x490] sm:$0xff]
  %v2967 = vld [vmem:[%s7 + $0x498] sm:$0xff]
  %v2968 = vld [vmem:[%s7 + $0x4a0] sm:$0xff]
  %v2969 = vld [vmem:[%s7 + $0x4a8] sm:$0xff]
  %v2970 = vld [vmem:[%s7 + $0x4b0] sm:$0xff]
  %v2971 = vld [vmem:[%s7 + $0x4b8] sm:$0xff]
  %v2972 = vld [vmem:[%s7 + $0x4c0] sm:$0xff]
  %v2973 = vld [vmem:[%s7 + $0x4c8] sm:$0xff]
  %v2974 = vld [vmem:[%s7 + $0x4d0] sm:$0xff]
  %v2975 = vld [vmem:[%s7 + $0x4d8] sm:$0xff]
  %v2976 = vld [vmem:[%s7 + $0x4e0] sm:$0xff]
  %v2977 = vld [vmem:[%s7 + $0x4e8] sm:$0xff]
  %v2978 = vld [vmem:[%s7 + $0x4f0] sm:$0xff]
  %v2979 = vld [vmem:[%s7 + $0x4f8] sm:$0xff]
  %v2980 = vld [vmem:[%s7 + $0x500] sm:$0xff]
  %v2981 = vld [vmem:[%s7 + $0x508] sm:$0xff]
  %v2982 = vld [vmem:[%s7 + $0x510] sm:$0xff]
  %v2983 = vld [vmem:[%s7 + $0x518] sm:$0xff]
  %v2984 = vld [vmem:[%s7 + $0x520] sm:$0xff]
  %v2985 = vld [vmem:[%s7 + $0x528] sm:$0xff]
  %v2986 = vld [vmem:[%s7 + $0x530] sm:$0xff]
  %v2987 = vld [vmem:[%s7 + $0x538] sm:$0xff]
  %v2988 = vld [vmem:[%s7 + $0x540] sm:$0xff]
  %v2989 = vld [vmem:[%s7 + $0x548] sm:$0xff]
  %v2990 = vld [vmem:[%s7 + $0x550] sm:$0xff]
  %v2991 = vld [vmem:[%s7 + $0x558] sm:$0xff]
  %v2992 = vld [vmem:[%s7 + $0x560] sm:$0xff]
  %v2993 = vld [vmem:[%s7 + $0x568] sm:$0xff]
  %v2994 = vld [vmem:[%s7 + $0x570] sm:$0xff]
  %v2995 = vld [vmem:[%s7 + $0x578] sm:$0xff]
  %v2996 = vld [vmem:[%s7 + $0x580] sm:$0xff]
  %v2997 = vld [vmem:[%s7 + $0x588] sm:$0xff]
  %v2998 = vld [vmem:[%s7 + $0x590] sm:$0xff]
  %v2999 = vld [vmem:[%s7 + $0x598] sm:$0xff]
  %v3000 = vld [vmem:[%s7 + $0x5a0] sm:$0xff]
  %v3001 = vld [vmem:[%s7 + $0x5a8] sm:$0xff]
  %v3002 = vld [vmem:[%s7 + $0x5b0] sm:$0xff]
  %v3003 = vld [vmem:[%s7 + $0x5b8] sm:$0xff]
  %v3004 = vld [vmem:[%s7 + $0x5c0] sm:$0xff]
  %v3005 = vld [vmem:[%s7 + $0x5c8] sm:$0xff]
  %v3006 = vld [vmem:[%s7 + $0x5d0] sm:$0xff]
  %v3007 = vld [vmem:[%s7 + $0x5d8] sm:$0xff]
  %v3008 = vld [vmem:[%s7 + $0x5e0] sm:$0xff]
  %v3009 = vld [vmem:[%s7 + $0x5e8] sm:$0xff]
  %v3010 = vld [vmem:[%s7 + $0x5f0] sm:$0xff]
  %v3011 = vld [vmem:[%s7 + $0x5f8] sm:$0xff]
  %v3012 = vld [vmem:[%s7 + $0x600] sm:$0xff]
  %v3013 = vld [vmem:[%s7 + $0x608] sm:$0xff]
  %v3014 = vld [vmem:[%s7 + $0x610] sm:$0xff]
  %v3015 = vld [vmem:[%s7 + $0x618] sm:$0xff]
  %v3016 = vld [vmem:[%s7 + $0x620] sm:$0xff]
  %v3017 = vld [vmem:[%s7 + $0x628] sm:$0xff]
  %v3018 = vld [vmem:[%s7 + $0x630] sm:$0xff]
  %v3019 = vld [vmem:[%s7 + $0x638] sm:$0xff]
  %v3020 = vld [vmem:[%s7 + $0x640] sm:$0xff]
  %v3021 = vld [vmem:[%s7 + $0x648] sm:$0xff]
  %v3022 = vld [vmem:[%s7 + $0x650] sm:$0xff]
  %v3023 = vld [vmem:[%s7 + $0x658] sm:$0xff]
  %v3024 = vld [vmem:[%s7 + $0x660] sm:$0xff]
  %v3025 = vld [vmem:[%s7 + $0x668] sm:$0xff]
  %v3026 = vld [vmem:[%s7 + $0x670] sm:$0xff]
  %v3027 = vld [vmem:[%s7 + $0x678] sm:$0xff]
  %v3028 = vld [vmem:[%s7 + $0x680] sm:$0xff]
  %v3029 = vld [vmem:[%s7 + $0x688] sm:$0xff]
  %v3030 = vld [vmem:[%s7 + $0x690] sm:$0xff]
  %v3031 = vld [vmem:[%s7 + $0x698] sm:$0xff]
  %v3032 = vld [vmem:[%s7 + $0x6a0] sm:$0xff]
  %v3033 = vld [vmem:[%s7 + $0x6a8] sm:$0xff]
  %v3034 = vld [vmem:[%s7 + $0x6b0] sm:$0xff]
  %v3035 = vld [vmem:[%s7 + $0x6b8] sm:$0xff]
  %v3036 = vld [vmem:[%s7 + $0x6c0] sm:$0xff]
  %v3037 = vld [vmem:[%s7 + $0x6c8] sm:$0xff]
  %v3038 = vld [vmem:[%s7 + $0x6d0] sm:$0xff]
  %v3039 = vld [vmem:[%s7 + $0x6d8] sm:$0xff]
  %v3040 = vld [vmem:[%s7 + $0x6e0] sm:$0xff]
  %v3041 = vld [vmem:[%s7 + $0x6e8] sm:$0xff]
  %v3042 = vld [vmem:[%s7 + $0x6f0] sm:$0xff]
  %v3043 = vld [vmem:[%s7 + $0x6f8] sm:$0xff]
  %v3044 = vld [vmem:[%s7 + $0x700] sm:$0xff]
  %v3045 = vld [vmem:[%s7 + $0x708] sm:$0xff]
  %v3046 = vld [vmem:[%s7 + $0x710] sm:$0xff]
  %v3047 = vld [vmem:[%s7 + $0x718] sm:$0xff]
  %v3048 = vld [vmem:[%s7 + $0x720] sm:$0xff]
  %v3049 = vld [vmem:[%s7 + $0x728] sm:$0xff]
  %v3050 = vld [vmem:[%s7 + $0x730] sm:$0xff]
  %v3051 = vld [vmem:[%s7 + $0x738] sm:$0xff]
  %v3052 = vld [vmem:[%s7 + $0x740] sm:$0xff]
  %v3053 = vld [vmem:[%s7 + $0x748] sm:$0xff]
  %v3054 = vld [vmem:[%s7 + $0x750] sm:$0xff]
  %v3055 = vld [vmem:[%s7 + $0x758] sm:$0xff]
  %v3056 = vld [vmem:[%s7 + $0x760] sm:$0xff]
  %v3057 = vld [vmem:[%s7 + $0x768] sm:$0xff]
  %v3058 = vld [vmem:[%s7 + $0x770] sm:$0xff]
  %v3059 = vld [vmem:[%s7 + $0x778] sm:$0xff]
  %v3060 = vld [vmem:[%s7 + $0x780] sm:$0xff]
  %v3061 = vld [vmem:[%s7 + $0x788] sm:$0xff]
  %v3062 = vld [vmem:[%s7 + $0x790] sm:$0xff]
  %v3063 = vld [vmem:[%s7 + $0x798] sm:$0xff]
  %v3064 = vld [vmem:[%s7 + $0x7a0] sm:$0xff]
  %v3065 = vld [vmem:[%s7 + $0x7a8] sm:$0xff]
  %v3066 = vld [vmem:[%s7 + $0x7b0] sm:$0xff]
  %v3067 = vld [vmem:[%s7 + $0x7b8] sm:$0xff]
  %v3068 = vld [vmem:[%s7 + $0x7c0] sm:$0xff]
  %v3069 = vld [vmem:[%s7 + $0x7c8] sm:$0xff]
  %v3070 = vld [vmem:[%s7 + $0x7d0] sm:$0xff]
  %v3071 = vld [vmem:[%s7 + $0x7d8] sm:$0xff]
  %v3072 = vld [vmem:[%s7 + $0x7e0] sm:$0xff]
  %v3073 = vld [vmem:[%s7 + $0x7e8] sm:$0xff]
  %v3074 = vld [vmem:[%s7 + $0x7f0] sm:$0xff]
  %v3075 = vld [vmem:[%s7 + $0x7f8] sm:$0xff]
  %v3076 = vld [vmem:[%s8] sm:$0x3]
  %v3078 = vlaneseq
  %v3079 = vshrl.u32 %v3078, 7
  %v3080 = vsub.s32 0, %v3079
  %v3081 = vrot.slane %v3076, %v3080
  %v3082 = vlaneseq
  %v3083 = vshrl.u32 %v3082, 7
  %v3084 = vsub.s32 1, %v3083
  %v3085 = vrot.slane %v3076, %v3084
  %v3344 = vunpack.c.l.b16 %v2820
  %v3345 = vunpack.c.h.b16 %v2820
  %v3346 = vunpack.c.l.b16 %v2821
  %v3347 = vunpack.c.h.b16 %v2821
  %v3348 = vunpack.c.l.b16 %v2822
  %v3349 = vunpack.c.h.b16 %v2822
  %v3350 = vunpack.c.l.b16 %v2823
  %v3351 = vunpack.c.h.b16 %v2823
  %v3352 = vunpack.c.l.b16 %v2824
  %v3353 = vunpack.c.h.b16 %v2824
  %v3354 = vunpack.c.l.b16 %v2825
  %v3355 = vunpack.c.h.b16 %v2825
  %v3356 = vunpack.c.l.b16 %v2826
  %v3357 = vunpack.c.h.b16 %v2826
  %v3358 = vunpack.c.l.b16 %v2827
  %v3359 = vunpack.c.h.b16 %v2827
  %v3360 = vunpack.c.l.b16 %v2828
  %v3361 = vunpack.c.h.b16 %v2828
  %v3362 = vunpack.c.l.b16 %v2829
  %v3363 = vunpack.c.h.b16 %v2829
  %v3364 = vunpack.c.l.b16 %v2830
  %v3365 = vunpack.c.h.b16 %v2830
  %v3366 = vunpack.c.l.b16 %v2831
  %v3367 = vunpack.c.h.b16 %v2831
  %v3368 = vunpack.c.l.b16 %v2832
  %v3369 = vunpack.c.h.b16 %v2832
  %v3370 = vunpack.c.l.b16 %v2833
  %v3371 = vunpack.c.h.b16 %v2833
  %v3372 = vunpack.c.l.b16 %v2834
  %v3373 = vunpack.c.h.b16 %v2834
  %v3374 = vunpack.c.l.b16 %v2835
  %v3375 = vunpack.c.h.b16 %v2835
  %v3376 = vunpack.c.l.b16 %v2836
  %v3377 = vunpack.c.h.b16 %v2836
  %v3378 = vunpack.c.l.b16 %v2837
  %v3379 = vunpack.c.h.b16 %v2837
  %v3380 = vunpack.c.l.b16 %v2838
  %v3381 = vunpack.c.h.b16 %v2838
  %v3382 = vunpack.c.l.b16 %v2839
  %v3383 = vunpack.c.h.b16 %v2839
  %v3384 = vunpack.c.l.b16 %v2840
  %v3385 = vunpack.c.h.b16 %v2840
  %v3386 = vunpack.c.l.b16 %v2841
  %v3387 = vunpack.c.h.b16 %v2841
  %v3388 = vunpack.c.l.b16 %v2842
  %v3389 = vunpack.c.h.b16 %v2842
  %v3390 = vunpack.c.l.b16 %v2843
  %v3391 = vunpack.c.h.b16 %v2843
  %v3392 = vunpack.c.l.b16 %v2844
  %v3393 = vunpack.c.h.b16 %v2844
  %v3394 = vunpack.c.l.b16 %v2845
  %v3395 = vunpack.c.h.b16 %v2845
  %v3396 = vunpack.c.l.b16 %v2846
  %v3397 = vunpack.c.h.b16 %v2846
  %v3398 = vunpack.c.l.b16 %v2847
  %v3399 = vunpack.c.h.b16 %v2847
  %v3400 = vunpack.c.l.b16 %v2848
  %v3401 = vunpack.c.h.b16 %v2848
  %v3402 = vunpack.c.l.b16 %v2849
  %v3403 = vunpack.c.h.b16 %v2849
  %v3404 = vunpack.c.l.b16 %v2850
  %v3405 = vunpack.c.h.b16 %v2850
  %v3406 = vunpack.c.l.b16 %v2851
  %v3407 = vunpack.c.h.b16 %v2851
  %v3408 = vunpack.c.l.b16 %v2852
  %v3409 = vunpack.c.h.b16 %v2852
  %v3410 = vunpack.c.l.b16 %v2853
  %v3411 = vunpack.c.h.b16 %v2853
  %v3412 = vunpack.c.l.b16 %v2854
  %v3413 = vunpack.c.h.b16 %v2854
  %v3414 = vunpack.c.l.b16 %v2855
  %v3415 = vunpack.c.h.b16 %v2855
  %v3416 = vunpack.c.l.b16 %v2856
  %v3417 = vunpack.c.h.b16 %v2856
  %v3418 = vunpack.c.l.b16 %v2857
  %v3419 = vunpack.c.h.b16 %v2857
  %v3420 = vunpack.c.l.b16 %v2858
  %v3421 = vunpack.c.h.b16 %v2858
  %v3422 = vunpack.c.l.b16 %v2859
  %v3423 = vunpack.c.h.b16 %v2859
  %v3424 = vunpack.c.l.b16 %v2860
  %v3425 = vunpack.c.h.b16 %v2860
  %v3426 = vunpack.c.l.b16 %v2861
  %v3427 = vunpack.c.h.b16 %v2861
  %v3428 = vunpack.c.l.b16 %v2862
  %v3429 = vunpack.c.h.b16 %v2862
  %v3430 = vunpack.c.l.b16 %v2863
  %v3431 = vunpack.c.h.b16 %v2863
  %v3432 = vunpack.c.l.b16 %v2864
  %v3433 = vunpack.c.h.b16 %v2864
  %v3434 = vunpack.c.l.b16 %v2865
  %v3435 = vunpack.c.h.b16 %v2865
  %v3436 = vunpack.c.l.b16 %v2866
  %v3437 = vunpack.c.h.b16 %v2866
  %v3438 = vunpack.c.l.b16 %v2867
  %v3439 = vunpack.c.h.b16 %v2867
  %v3440 = vunpack.c.l.b16 %v2868
  %v3441 = vunpack.c.h.b16 %v2868
  %v3442 = vunpack.c.l.b16 %v2869
  %v3443 = vunpack.c.h.b16 %v2869
  %v3444 = vunpack.c.l.b16 %v2870
  %v3445 = vunpack.c.h.b16 %v2870
  %v3446 = vunpack.c.l.b16 %v2871
  %v3447 = vunpack.c.h.b16 %v2871
  %v3448 = vunpack.c.l.b16 %v2872
  %v3449 = vunpack.c.h.b16 %v2872
  %v3450 = vunpack.c.l.b16 %v2873
  %v3451 = vunpack.c.h.b16 %v2873
  %v3452 = vunpack.c.l.b16 %v2874
  %v3453 = vunpack.c.h.b16 %v2874
  %v3454 = vunpack.c.l.b16 %v2875
  %v3455 = vunpack.c.h.b16 %v2875
  %v3456 = vunpack.c.l.b16 %v2876
  %v3457 = vunpack.c.h.b16 %v2876
  %v3458 = vunpack.c.l.b16 %v2877
  %v3459 = vunpack.c.h.b16 %v2877
  %v3460 = vunpack.c.l.b16 %v2878
  %v3461 = vunpack.c.h.b16 %v2878
  %v3462 = vunpack.c.l.b16 %v2879
  %v3463 = vunpack.c.h.b16 %v2879
  %v3464 = vunpack.c.l.b16 %v2880
  %v3465 = vunpack.c.h.b16 %v2880
  %v3466 = vunpack.c.l.b16 %v2881
  %v3467 = vunpack.c.h.b16 %v2881
  %v3468 = vunpack.c.l.b16 %v2882
  %v3469 = vunpack.c.h.b16 %v2882
  %v3470 = vunpack.c.l.b16 %v2883
  %v3471 = vunpack.c.h.b16 %v2883
  %v3472 = vunpack.c.l.b16 %v2884
  %v3473 = vunpack.c.h.b16 %v2884
  %v3474 = vunpack.c.l.b16 %v2885
  %v3475 = vunpack.c.h.b16 %v2885
  %v3476 = vunpack.c.l.b16 %v2886
  %v3477 = vunpack.c.h.b16 %v2886
  %v3478 = vunpack.c.l.b16 %v2887
  %v3479 = vunpack.c.h.b16 %v2887
  %v3480 = vunpack.c.l.b16 %v2888
  %v3481 = vunpack.c.h.b16 %v2888
  %v3482 = vunpack.c.l.b16 %v2889
  %v3483 = vunpack.c.h.b16 %v2889
  %v3484 = vunpack.c.l.b16 %v2890
  %v3485 = vunpack.c.h.b16 %v2890
  %v3486 = vunpack.c.l.b16 %v2891
  %v3487 = vunpack.c.h.b16 %v2891
  %v3488 = vunpack.c.l.b16 %v2892
  %v3489 = vunpack.c.h.b16 %v2892
  %v3490 = vunpack.c.l.b16 %v2893
  %v3491 = vunpack.c.h.b16 %v2893
  %v3492 = vunpack.c.l.b16 %v2894
  %v3493 = vunpack.c.h.b16 %v2894
  %v3494 = vunpack.c.l.b16 %v2895
  %v3495 = vunpack.c.h.b16 %v2895
  %v3496 = vunpack.c.l.b16 %v2896
  %v3497 = vunpack.c.h.b16 %v2896
  %v3498 = vunpack.c.l.b16 %v2897
  %v3499 = vunpack.c.h.b16 %v2897
  %v3500 = vunpack.c.l.b16 %v2898
  %v3501 = vunpack.c.h.b16 %v2898
  %v3502 = vunpack.c.l.b16 %v2899
  %v3503 = vunpack.c.h.b16 %v2899
  %v3504 = vunpack.c.l.b16 %v2900
  %v3505 = vunpack.c.h.b16 %v2900
  %v3506 = vunpack.c.l.b16 %v2901
  %v3507 = vunpack.c.h.b16 %v2901
  %v3508 = vunpack.c.l.b16 %v2902
  %v3509 = vunpack.c.h.b16 %v2902
  %v3510 = vunpack.c.l.b16 %v2903
  %v3511 = vunpack.c.h.b16 %v2903
  %v3512 = vunpack.c.l.b16 %v2904
  %v3513 = vunpack.c.h.b16 %v2904
  %v3514 = vunpack.c.l.b16 %v2905
  %v3515 = vunpack.c.h.b16 %v2905
  %v3516 = vunpack.c.l.b16 %v2906
  %v3517 = vunpack.c.h.b16 %v2906
  %v3518 = vunpack.c.l.b16 %v2907
  %v3519 = vunpack.c.h.b16 %v2907
  %v3520 = vunpack.c.l.b16 %v2908
  %v3521 = vunpack.c.h.b16 %v2908
  %v3522 = vunpack.c.l.b16 %v2909
  %v3523 = vunpack.c.h.b16 %v2909
  %v3524 = vunpack.c.l.b16 %v2910
  %v3525 = vunpack.c.h.b16 %v2910
  %v3526 = vunpack.c.l.b16 %v2911
  %v3527 = vunpack.c.h.b16 %v2911
  %v3528 = vunpack.c.l.b16 %v2912
  %v3529 = vunpack.c.h.b16 %v2912
  %v3530 = vunpack.c.l.b16 %v2913
  %v3531 = vunpack.c.h.b16 %v2913
  %v3532 = vunpack.c.l.b16 %v2914
  %v3533 = vunpack.c.h.b16 %v2914
  %v3534 = vunpack.c.l.b16 %v2915
  %v3535 = vunpack.c.h.b16 %v2915
  %v3536 = vunpack.c.l.b16 %v2916
  %v3537 = vunpack.c.h.b16 %v2916
  %v3538 = vunpack.c.l.b16 %v2917
  %v3539 = vunpack.c.h.b16 %v2917
  %v3540 = vunpack.c.l.b16 %v2918
  %v3541 = vunpack.c.h.b16 %v2918
  %v3542 = vunpack.c.l.b16 %v2919
  %v3543 = vunpack.c.h.b16 %v2919
  %v3544 = vunpack.c.l.b16 %v2920
  %v3545 = vunpack.c.h.b16 %v2920
  %v3546 = vunpack.c.l.b16 %v2921
  %v3547 = vunpack.c.h.b16 %v2921
  %v3548 = vunpack.c.l.b16 %v2922
  %v3549 = vunpack.c.h.b16 %v2922
  %v3550 = vunpack.c.l.b16 %v2923
  %v3551 = vunpack.c.h.b16 %v2923
  %v3552 = vunpack.c.l.b16 %v2924
  %v3553 = vunpack.c.h.b16 %v2924
  %v3554 = vunpack.c.l.b16 %v2925
  %v3555 = vunpack.c.h.b16 %v2925
  %v3556 = vunpack.c.l.b16 %v2926
  %v3557 = vunpack.c.h.b16 %v2926
  %v3558 = vunpack.c.l.b16 %v2927
  %v3559 = vunpack.c.h.b16 %v2927
  %v3560 = vunpack.c.l.b16 %v2928
  %v3561 = vunpack.c.h.b16 %v2928
  %v3562 = vunpack.c.l.b16 %v2929
  %v3563 = vunpack.c.h.b16 %v2929
  %v3564 = vunpack.c.l.b16 %v2930
  %v3565 = vunpack.c.h.b16 %v2930
  %v3566 = vunpack.c.l.b16 %v2931
  %v3567 = vunpack.c.h.b16 %v2931
  %v3568 = vunpack.c.l.b16 %v2932
  %v3569 = vunpack.c.h.b16 %v2932
  %v3570 = vunpack.c.l.b16 %v2933
  %v3571 = vunpack.c.h.b16 %v2933
  %v3572 = vunpack.c.l.b16 %v2934
  %v3573 = vunpack.c.h.b16 %v2934
  %v3574 = vunpack.c.l.b16 %v2935
  %v3575 = vunpack.c.h.b16 %v2935
  %v3576 = vunpack.c.l.b16 %v2936
  %v3577 = vunpack.c.h.b16 %v2936
  %v3578 = vunpack.c.l.b16 %v2937
  %v3579 = vunpack.c.h.b16 %v2937
  %v3580 = vunpack.c.l.b16 %v2938
  %v3581 = vunpack.c.h.b16 %v2938
  %v3582 = vunpack.c.l.b16 %v2939
  %v3583 = vunpack.c.h.b16 %v2939
  %v3584 = vunpack.c.l.b16 %v2940
  %v3585 = vunpack.c.h.b16 %v2940
  %v3586 = vunpack.c.l.b16 %v2941
  %v3587 = vunpack.c.h.b16 %v2941
  %v3588 = vunpack.c.l.b16 %v2942
  %v3589 = vunpack.c.h.b16 %v2942
  %v3590 = vunpack.c.l.b16 %v2943
  %v3591 = vunpack.c.h.b16 %v2943
  %v3592 = vunpack.c.l.b16 %v2944
  %v3593 = vunpack.c.h.b16 %v2944
  %v3594 = vunpack.c.l.b16 %v2945
  %v3595 = vunpack.c.h.b16 %v2945
  %v3596 = vunpack.c.l.b16 %v2946
  %v3597 = vunpack.c.h.b16 %v2946
  %v3598 = vunpack.c.l.b16 %v2947
  %v3599 = vunpack.c.h.b16 %v2947
  %v3600 = vunpack.c.l.b16 %v2948
  %v3601 = vunpack.c.h.b16 %v2948
  %v3602 = vunpack.c.l.b16 %v2949
  %v3603 = vunpack.c.h.b16 %v2949
  %v3604 = vunpack.c.l.b16 %v2950
  %v3605 = vunpack.c.h.b16 %v2950
  %v3606 = vunpack.c.l.b16 %v2951
  %v3607 = vunpack.c.h.b16 %v2951
  %v3608 = vunpack.c.l.b16 %v2952
  %v3609 = vunpack.c.h.b16 %v2952
  %v3610 = vunpack.c.l.b16 %v2953
  %v3611 = vunpack.c.h.b16 %v2953
  %v3612 = vunpack.c.l.b16 %v2954
  %v3613 = vunpack.c.h.b16 %v2954
  %v3614 = vunpack.c.l.b16 %v2955
  %v3615 = vunpack.c.h.b16 %v2955
  %v3616 = vunpack.c.l.b16 %v2956
  %v3617 = vunpack.c.h.b16 %v2956
  %v3618 = vunpack.c.l.b16 %v2957
  %v3619 = vunpack.c.h.b16 %v2957
  %v3620 = vunpack.c.l.b16 %v2958
  %v3621 = vunpack.c.h.b16 %v2958
  %v3622 = vunpack.c.l.b16 %v2959
  %v3623 = vunpack.c.h.b16 %v2959
  %v3624 = vunpack.c.l.b16 %v2960
  %v3625 = vunpack.c.h.b16 %v2960
  %v3626 = vunpack.c.l.b16 %v2961
  %v3627 = vunpack.c.h.b16 %v2961
  %v3628 = vunpack.c.l.b16 %v2962
  %v3629 = vunpack.c.h.b16 %v2962
  %v3630 = vunpack.c.l.b16 %v2963
  %v3631 = vunpack.c.h.b16 %v2963
  %v3632 = vunpack.c.l.b16 %v2964
  %v3633 = vunpack.c.h.b16 %v2964
  %v3634 = vunpack.c.l.b16 %v2965
  %v3635 = vunpack.c.h.b16 %v2965
  %v3636 = vunpack.c.l.b16 %v2966
  %v3637 = vunpack.c.h.b16 %v2966
  %v3638 = vunpack.c.l.b16 %v2967
  %v3639 = vunpack.c.h.b16 %v2967
  %v3640 = vunpack.c.l.b16 %v2968
  %v3641 = vunpack.c.h.b16 %v2968
  %v3642 = vunpack.c.l.b16 %v2969
  %v3643 = vunpack.c.h.b16 %v2969
  %v3644 = vunpack.c.l.b16 %v2970
  %v3645 = vunpack.c.h.b16 %v2970
  %v3646 = vunpack.c.l.b16 %v2971
  %v3647 = vunpack.c.h.b16 %v2971
  %v3648 = vunpack.c.l.b16 %v2972
  %v3649 = vunpack.c.h.b16 %v2972
  %v3650 = vunpack.c.l.b16 %v2973
  %v3651 = vunpack.c.h.b16 %v2973
  %v3652 = vunpack.c.l.b16 %v2974
  %v3653 = vunpack.c.h.b16 %v2974
  %v3654 = vunpack.c.l.b16 %v2975
  %v3655 = vunpack.c.h.b16 %v2975
  %v3656 = vunpack.c.l.b16 %v2976
  %v3657 = vunpack.c.h.b16 %v2976
  %v3658 = vunpack.c.l.b16 %v2977
  %v3659 = vunpack.c.h.b16 %v2977
  %v3660 = vunpack.c.l.b16 %v2978
  %v3661 = vunpack.c.h.b16 %v2978
  %v3662 = vunpack.c.l.b16 %v2979
  %v3663 = vunpack.c.h.b16 %v2979
  %v3664 = vunpack.c.l.b16 %v2980
  %v3665 = vunpack.c.h.b16 %v2980
  %v3666 = vunpack.c.l.b16 %v2981
  %v3667 = vunpack.c.h.b16 %v2981
  %v3668 = vunpack.c.l.b16 %v2982
  %v3669 = vunpack.c.h.b16 %v2982
  %v3670 = vunpack.c.l.b16 %v2983
  %v3671 = vunpack.c.h.b16 %v2983
  %v3672 = vunpack.c.l.b16 %v2984
  %v3673 = vunpack.c.h.b16 %v2984
  %v3674 = vunpack.c.l.b16 %v2985
  %v3675 = vunpack.c.h.b16 %v2985
  %v3676 = vunpack.c.l.b16 %v2986
  %v3677 = vunpack.c.h.b16 %v2986
  %v3678 = vunpack.c.l.b16 %v2987
  %v3679 = vunpack.c.h.b16 %v2987
  %v3680 = vunpack.c.l.b16 %v2988
  %v3681 = vunpack.c.h.b16 %v2988
  %v3682 = vunpack.c.l.b16 %v2989
  %v3683 = vunpack.c.h.b16 %v2989
  %v3684 = vunpack.c.l.b16 %v2990
  %v3685 = vunpack.c.h.b16 %v2990
  %v3686 = vunpack.c.l.b16 %v2991
  %v3687 = vunpack.c.h.b16 %v2991
  %v3688 = vunpack.c.l.b16 %v2992
  %v3689 = vunpack.c.h.b16 %v2992
  %v3690 = vunpack.c.l.b16 %v2993
  %v3691 = vunpack.c.h.b16 %v2993
  %v3692 = vunpack.c.l.b16 %v2994
  %v3693 = vunpack.c.h.b16 %v2994
  %v3694 = vunpack.c.l.b16 %v2995
  %v3695 = vunpack.c.h.b16 %v2995
  %v3696 = vunpack.c.l.b16 %v2996
  %v3697 = vunpack.c.h.b16 %v2996
  %v3698 = vunpack.c.l.b16 %v2997
  %v3699 = vunpack.c.h.b16 %v2997
  %v3700 = vunpack.c.l.b16 %v2998
  %v3701 = vunpack.c.h.b16 %v2998
  %v3702 = vunpack.c.l.b16 %v2999
  %v3703 = vunpack.c.h.b16 %v2999
  %v3704 = vunpack.c.l.b16 %v3000
  %v3705 = vunpack.c.h.b16 %v3000
  %v3706 = vunpack.c.l.b16 %v3001
  %v3707 = vunpack.c.h.b16 %v3001
  %v3708 = vunpack.c.l.b16 %v3002
  %v3709 = vunpack.c.h.b16 %v3002
  %v3710 = vunpack.c.l.b16 %v3003
  %v3711 = vunpack.c.h.b16 %v3003
  %v3712 = vunpack.c.l.b16 %v3004
  %v3713 = vunpack.c.h.b16 %v3004
  %v3714 = vunpack.c.l.b16 %v3005
  %v3715 = vunpack.c.h.b16 %v3005
  %v3716 = vunpack.c.l.b16 %v3006
  %v3717 = vunpack.c.h.b16 %v3006
  %v3718 = vunpack.c.l.b16 %v3007
  %v3719 = vunpack.c.h.b16 %v3007
  %v3720 = vunpack.c.l.b16 %v3008
  %v3721 = vunpack.c.h.b16 %v3008
  %v3722 = vunpack.c.l.b16 %v3009
  %v3723 = vunpack.c.h.b16 %v3009
  %v3724 = vunpack.c.l.b16 %v3010
  %v3725 = vunpack.c.h.b16 %v3010
  %v3726 = vunpack.c.l.b16 %v3011
  %v3727 = vunpack.c.h.b16 %v3011
  %v3728 = vunpack.c.l.b16 %v3012
  %v3729 = vunpack.c.h.b16 %v3012
  %v3730 = vunpack.c.l.b16 %v3013
  %v3731 = vunpack.c.h.b16 %v3013
  %v3732 = vunpack.c.l.b16 %v3014
  %v3733 = vunpack.c.h.b16 %v3014
  %v3734 = vunpack.c.l.b16 %v3015
  %v3735 = vunpack.c.h.b16 %v3015
  %v3736 = vunpack.c.l.b16 %v3016
  %v3737 = vunpack.c.h.b16 %v3016
  %v3738 = vunpack.c.l.b16 %v3017
  %v3739 = vunpack.c.h.b16 %v3017
  %v3740 = vunpack.c.l.b16 %v3018
  %v3741 = vunpack.c.h.b16 %v3018
  %v3742 = vunpack.c.l.b16 %v3019
  %v3743 = vunpack.c.h.b16 %v3019
  %v3744 = vunpack.c.l.b16 %v3020
  %v3745 = vunpack.c.h.b16 %v3020
  %v3746 = vunpack.c.l.b16 %v3021
  %v3747 = vunpack.c.h.b16 %v3021
  %v3748 = vunpack.c.l.b16 %v3022
  %v3749 = vunpack.c.h.b16 %v3022
  %v3750 = vunpack.c.l.b16 %v3023
  %v3751 = vunpack.c.h.b16 %v3023
  %v3752 = vunpack.c.l.b16 %v3024
  %v3753 = vunpack.c.h.b16 %v3024
  %v3754 = vunpack.c.l.b16 %v3025
  %v3755 = vunpack.c.h.b16 %v3025
  %v3756 = vunpack.c.l.b16 %v3026
  %v3757 = vunpack.c.h.b16 %v3026
  %v3758 = vunpack.c.l.b16 %v3027
  %v3759 = vunpack.c.h.b16 %v3027
  %v3760 = vunpack.c.l.b16 %v3028
  %v3761 = vunpack.c.h.b16 %v3028
  %v3762 = vunpack.c.l.b16 %v3029
  %v3763 = vunpack.c.h.b16 %v3029
  %v3764 = vunpack.c.l.b16 %v3030
  %v3765 = vunpack.c.h.b16 %v3030
  %v3766 = vunpack.c.l.b16 %v3031
  %v3767 = vunpack.c.h.b16 %v3031
  %v3768 = vunpack.c.l.b16 %v3032
  %v3769 = vunpack.c.h.b16 %v3032
  %v3770 = vunpack.c.l.b16 %v3033
  %v3771 = vunpack.c.h.b16 %v3033
  %v3772 = vunpack.c.l.b16 %v3034
  %v3773 = vunpack.c.h.b16 %v3034
  %v3774 = vunpack.c.l.b16 %v3035
  %v3775 = vunpack.c.h.b16 %v3035
  %v3776 = vunpack.c.l.b16 %v3036
  %v3777 = vunpack.c.h.b16 %v3036
  %v3778 = vunpack.c.l.b16 %v3037
  %v3779 = vunpack.c.h.b16 %v3037
  %v3780 = vunpack.c.l.b16 %v3038
  %v3781 = vunpack.c.h.b16 %v3038
  %v3782 = vunpack.c.l.b16 %v3039
  %v3783 = vunpack.c.h.b16 %v3039
  %v3784 = vunpack.c.l.b16 %v3040
  %v3785 = vunpack.c.h.b16 %v3040
  %v3786 = vunpack.c.l.b16 %v3041
  %v3787 = vunpack.c.h.b16 %v3041
  %v3788 = vunpack.c.l.b16 %v3042
  %v3789 = vunpack.c.h.b16 %v3042
  %v3790 = vunpack.c.l.b16 %v3043
  %v3791 = vunpack.c.h.b16 %v3043
  %v3792 = vunpack.c.l.b16 %v3044
  %v3793 = vunpack.c.h.b16 %v3044
  %v3794 = vunpack.c.l.b16 %v3045
  %v3795 = vunpack.c.h.b16 %v3045
  %v3796 = vunpack.c.l.b16 %v3046
  %v3797 = vunpack.c.h.b16 %v3046
  %v3798 = vunpack.c.l.b16 %v3047
  %v3799 = vunpack.c.h.b16 %v3047
  %v3800 = vunpack.c.l.b16 %v3048
  %v3801 = vunpack.c.h.b16 %v3048
  %v3802 = vunpack.c.l.b16 %v3049
  %v3803 = vunpack.c.h.b16 %v3049
  %v3804 = vunpack.c.l.b16 %v3050
  %v3805 = vunpack.c.h.b16 %v3050
  %v3806 = vunpack.c.l.b16 %v3051
  %v3807 = vunpack.c.h.b16 %v3051
  %v3808 = vunpack.c.l.b16 %v3052
  %v3809 = vunpack.c.h.b16 %v3052
  %v3810 = vunpack.c.l.b16 %v3053
  %v3811 = vunpack.c.h.b16 %v3053
  %v3812 = vunpack.c.l.b16 %v3054
  %v3813 = vunpack.c.h.b16 %v3054
  %v3814 = vunpack.c.l.b16 %v3055
  %v3815 = vunpack.c.h.b16 %v3055
  %v3816 = vunpack.c.l.b16 %v3056
  %v3817 = vunpack.c.h.b16 %v3056
  %v3818 = vunpack.c.l.b16 %v3057
  %v3819 = vunpack.c.h.b16 %v3057
  %v3820 = vunpack.c.l.b16 %v3058
  %v3821 = vunpack.c.h.b16 %v3058
  %v3822 = vunpack.c.l.b16 %v3059
  %v3823 = vunpack.c.h.b16 %v3059
  %v3824 = vunpack.c.l.b16 %v3060
  %v3825 = vunpack.c.h.b16 %v3060
  %v3826 = vunpack.c.l.b16 %v3061
  %v3827 = vunpack.c.h.b16 %v3061
  %v3828 = vunpack.c.l.b16 %v3062
  %v3829 = vunpack.c.h.b16 %v3062
  %v3830 = vunpack.c.l.b16 %v3063
  %v3831 = vunpack.c.h.b16 %v3063
  %v3832 = vunpack.c.l.b16 %v3064
  %v3833 = vunpack.c.h.b16 %v3064
  %v3834 = vunpack.c.l.b16 %v3065
  %v3835 = vunpack.c.h.b16 %v3065
  %v3836 = vunpack.c.l.b16 %v3066
  %v3837 = vunpack.c.h.b16 %v3066
  %v3838 = vunpack.c.l.b16 %v3067
  %v3839 = vunpack.c.h.b16 %v3067
  %v3840 = vunpack.c.l.b16 %v3068
  %v3841 = vunpack.c.h.b16 %v3068
  %v3842 = vunpack.c.l.b16 %v3069
  %v3843 = vunpack.c.h.b16 %v3069
  %v3844 = vunpack.c.l.b16 %v3070
  %v3845 = vunpack.c.h.b16 %v3070
  %v3846 = vunpack.c.l.b16 %v3071
  %v3847 = vunpack.c.h.b16 %v3071
  %v3848 = vunpack.c.l.b16 %v3072
  %v3849 = vunpack.c.h.b16 %v3072
  %v3850 = vunpack.c.l.b16 %v3073
  %v3851 = vunpack.c.h.b16 %v3073
  %v3852 = vunpack.c.l.b16 %v3074
  %v3853 = vunpack.c.h.b16 %v3074
  %v3854 = vunpack.c.l.b16 %v3075
  %v3855 = vunpack.c.h.b16 %v3075
  %v3856 = vpack.c.b16 %v3346, %v3344
  %v3857 = vpack.c.b16 %v3347, %v3345
  %v3858 = vpack.c.b16 %v3350, %v3348
  %v3859 = vpack.c.b16 %v3351, %v3349
  %v3860 = vpack.c.b16 %v3354, %v3352
  %v3861 = vpack.c.b16 %v3355, %v3353
  %v3862 = vpack.c.b16 %v3358, %v3356
  %v3863 = vpack.c.b16 %v3359, %v3357
  %v3864 = vpack.c.b16 %v3362, %v3360
  %v3865 = vpack.c.b16 %v3363, %v3361
  %v3866 = vpack.c.b16 %v3366, %v3364
  %v3867 = vpack.c.b16 %v3367, %v3365
  %v3868 = vpack.c.b16 %v3370, %v3368
  %v3869 = vpack.c.b16 %v3371, %v3369
  %v3870 = vpack.c.b16 %v3374, %v3372
  %v3871 = vpack.c.b16 %v3375, %v3373
  %v3872 = vpack.c.b16 %v3378, %v3376
  %v3873 = vpack.c.b16 %v3379, %v3377
  %v3874 = vpack.c.b16 %v3382, %v3380
  %v3875 = vpack.c.b16 %v3383, %v3381
  %v3876 = vpack.c.b16 %v3386, %v3384
  %v3877 = vpack.c.b16 %v3387, %v3385
  %v3878 = vpack.c.b16 %v3390, %v3388
  %v3879 = vpack.c.b16 %v3391, %v3389
  %v3880 = vpack.c.b16 %v3394, %v3392
  %v3881 = vpack.c.b16 %v3395, %v3393
  %v3882 = vpack.c.b16 %v3398, %v3396
  %v3883 = vpack.c.b16 %v3399, %v3397
  %v3884 = vpack.c.b16 %v3402, %v3400
  %v3885 = vpack.c.b16 %v3403, %v3401
  %v3886 = vpack.c.b16 %v3406, %v3404
  %v3887 = vpack.c.b16 %v3407, %v3405
  %v3888 = vpack.c.b16 %v3410, %v3408
  %v3889 = vpack.c.b16 %v3411, %v3409
  %v3890 = vpack.c.b16 %v3414, %v3412
  %v3891 = vpack.c.b16 %v3415, %v3413
  %v3892 = vpack.c.b16 %v3418, %v3416
  %v3893 = vpack.c.b16 %v3419, %v3417
  %v3894 = vpack.c.b16 %v3422, %v3420
  %v3895 = vpack.c.b16 %v3423, %v3421
  %v3896 = vpack.c.b16 %v3426, %v3424
  %v3897 = vpack.c.b16 %v3427, %v3425
  %v3898 = vpack.c.b16 %v3430, %v3428
  %v3899 = vpack.c.b16 %v3431, %v3429
  %v3900 = vpack.c.b16 %v3434, %v3432
  %v3901 = vpack.c.b16 %v3435, %v3433
  %v3902 = vpack.c.b16 %v3438, %v3436
  %v3903 = vpack.c.b16 %v3439, %v3437
  %v3904 = vpack.c.b16 %v3442, %v3440
  %v3905 = vpack.c.b16 %v3443, %v3441
  %v3906 = vpack.c.b16 %v3446, %v3444
  %v3907 = vpack.c.b16 %v3447, %v3445
  %v3908 = vpack.c.b16 %v3450, %v3448
  %v3909 = vpack.c.b16 %v3451, %v3449
  %v3910 = vpack.c.b16 %v3454, %v3452
  %v3911 = vpack.c.b16 %v3455, %v3453
  %v3912 = vpack.c.b16 %v3458, %v3456
  %v3913 = vpack.c.b16 %v3459, %v3457
  %v3914 = vpack.c.b16 %v3462, %v3460
  %v3915 = vpack.c.b16 %v3463, %v3461
  %v3916 = vpack.c.b16 %v3466, %v3464
  %v3917 = vpack.c.b16 %v3467, %v3465
  %v3918 = vpack.c.b16 %v3470, %v3468
  %v3919 = vpack.c.b16 %v3471, %v3469
  %v3920 = vpack.c.b16 %v3474, %v3472
  %v3921 = vpack.c.b16 %v3475, %v3473
  %v3922 = vpack.c.b16 %v3478, %v3476
  %v3923 = vpack.c.b16 %v3479, %v3477
  %v3924 = vpack.c.b16 %v3482, %v3480
  %v3925 = vpack.c.b16 %v3483, %v3481
  %v3926 = vpack.c.b16 %v3486, %v3484
  %v3927 = vpack.c.b16 %v3487, %v3485
  %v3928 = vpack.c.b16 %v3490, %v3488
  %v3929 = vpack.c.b16 %v3491, %v3489
  %v3930 = vpack.c.b16 %v3494, %v3492
  %v3931 = vpack.c.b16 %v3495, %v3493
  %v3932 = vpack.c.b16 %v3498, %v3496
  %v3933 = vpack.c.b16 %v3499, %v3497
  %v3934 = vpack.c.b16 %v3502, %v3500
  %v3935 = vpack.c.b16 %v3503, %v3501
  %v3936 = vpack.c.b16 %v3506, %v3504
  %v3937 = vpack.c.b16 %v3507, %v3505
  %v3938 = vpack.c.b16 %v3510, %v3508
  %v3939 = vpack.c.b16 %v3511, %v3509
  %v3940 = vpack.c.b16 %v3514, %v3512
  %v3941 = vpack.c.b16 %v3515, %v3513
  %v3942 = vpack.c.b16 %v3518, %v3516
  %v3943 = vpack.c.b16 %v3519, %v3517
  %v3944 = vpack.c.b16 %v3522, %v3520
  %v3945 = vpack.c.b16 %v3523, %v3521
  %v3946 = vpack.c.b16 %v3526, %v3524
  %v3947 = vpack.c.b16 %v3527, %v3525
  %v3948 = vpack.c.b16 %v3530, %v3528
  %v3949 = vpack.c.b16 %v3531, %v3529
  %v3950 = vpack.c.b16 %v3534, %v3532
  %v3951 = vpack.c.b16 %v3535, %v3533
  %v3952 = vpack.c.b16 %v3538, %v3536
  %v3953 = vpack.c.b16 %v3539, %v3537
  %v3954 = vpack.c.b16 %v3542, %v3540
  %v3955 = vpack.c.b16 %v3543, %v3541
  %v3956 = vpack.c.b16 %v3546, %v3544
  %v3957 = vpack.c.b16 %v3547, %v3545
  %v3958 = vpack.c.b16 %v3550, %v3548
  %v3959 = vpack.c.b16 %v3551, %v3549
  %v3960 = vpack.c.b16 %v3554, %v3552
  %v3961 = vpack.c.b16 %v3555, %v3553
  %v3962 = vpack.c.b16 %v3558, %v3556
  %v3963 = vpack.c.b16 %v3559, %v3557
  %v3964 = vpack.c.b16 %v3562, %v3560
  %v3965 = vpack.c.b16 %v3563, %v3561
  %v3966 = vpack.c.b16 %v3566, %v3564
  %v3967 = vpack.c.b16 %v3567, %v3565
  %v3968 = vpack.c.b16 %v3570, %v3568
  %v3969 = vpack.c.b16 %v3571, %v3569
  %v3970 = vpack.c.b16 %v3574, %v3572
  %v3971 = vpack.c.b16 %v3575, %v3573
  %v3972 = vpack.c.b16 %v3578, %v3576
  %v3973 = vpack.c.b16 %v3579, %v3577
  %v3974 = vpack.c.b16 %v3582, %v3580
  %v3975 = vpack.c.b16 %v3583, %v3581
  %v3976 = vpack.c.b16 %v3586, %v3584
  %v3977 = vpack.c.b16 %v3587, %v3585
  %v3978 = vpack.c.b16 %v3590, %v3588
  %v3979 = vpack.c.b16 %v3591, %v3589
  %v3980 = vpack.c.b16 %v3594, %v3592
  %v3981 = vpack.c.b16 %v3595, %v3593
  %v3982 = vpack.c.b16 %v3598, %v3596
  %v3983 = vpack.c.b16 %v3599, %v3597
  %v3984 = vpack.c.b16 %v3602, %v3600
  %v3985 = vpack.c.b16 %v3603, %v3601
  %v3986 = vpack.c.b16 %v3606, %v3604
  %v3987 = vpack.c.b16 %v3607, %v3605
  %v3988 = vpack.c.b16 %v3610, %v3608
  %v3989 = vpack.c.b16 %v3611, %v3609
  %v3990 = vpack.c.b16 %v3614, %v3612
  %v3991 = vpack.c.b16 %v3615, %v3613
  %v3992 = vpack.c.b16 %v3618, %v3616
  %v3993 = vpack.c.b16 %v3619, %v3617
  %v3994 = vpack.c.b16 %v3622, %v3620
  %v3995 = vpack.c.b16 %v3623, %v3621
  %v3996 = vpack.c.b16 %v3626, %v3624
  %v3997 = vpack.c.b16 %v3627, %v3625
  %v3998 = vpack.c.b16 %v3630, %v3628
  %v3999 = vpack.c.b16 %v3631, %v3629
  %v4000 = vpack.c.b16 %v3634, %v3632
  %v4001 = vpack.c.b16 %v3635, %v3633
  %v4002 = vpack.c.b16 %v3638, %v3636
  %v4003 = vpack.c.b16 %v3639, %v3637
  %v4004 = vpack.c.b16 %v3642, %v3640
  %v4005 = vpack.c.b16 %v3643, %v3641
  %v4006 = vpack.c.b16 %v3646, %v3644
  %v4007 = vpack.c.b16 %v3647, %v3645
  %v4008 = vpack.c.b16 %v3650, %v3648
  %v4009 = vpack.c.b16 %v3651, %v3649
  %v4010 = vpack.c.b16 %v3654, %v3652
  %v4011 = vpack.c.b16 %v3655, %v3653
  %v4012 = vpack.c.b16 %v3658, %v3656
  %v4013 = vpack.c.b16 %v3659, %v3657
  %v4014 = vpack.c.b16 %v3662, %v3660
  %v4015 = vpack.c.b16 %v3663, %v3661
  %v4016 = vpack.c.b16 %v3666, %v3664
  %v4017 = vpack.c.b16 %v3667, %v3665
  %v4018 = vpack.c.b16 %v3670, %v3668
  %v4019 = vpack.c.b16 %v3671, %v3669
  %v4020 = vpack.c.b16 %v3674, %v3672
  %v4021 = vpack.c.b16 %v3675, %v3673
  %v4022 = vpack.c.b16 %v3678, %v3676
  %v4023 = vpack.c.b16 %v3679, %v3677
  %v4024 = vpack.c.b16 %v3682, %v3680
  %v4025 = vpack.c.b16 %v3683, %v3681
  %v4026 = vpack.c.b16 %v3686, %v3684
  %v4027 = vpack.c.b16 %v3687, %v3685
  %v4028 = vpack.c.b16 %v3690, %v3688
  %v4029 = vpack.c.b16 %v3691, %v3689
  %v4030 = vpack.c.b16 %v3694, %v3692
  %v4031 = vpack.c.b16 %v3695, %v3693
  %v4032 = vpack.c.b16 %v3698, %v3696
  %v4033 = vpack.c.b16 %v3699, %v3697
  %v4034 = vpack.c.b16 %v3702, %v3700
  %v4035 = vpack.c.b16 %v3703, %v3701
  %v4036 = vpack.c.b16 %v3706, %v3704
  %v4037 = vpack.c.b16 %v3707, %v3705
  %v4038 = vpack.c.b16 %v3710, %v3708
  %v4039 = vpack.c.b16 %v3711, %v3709
  %v4040 = vpack.c.b16 %v3714, %v3712
  %v4041 = vpack.c.b16 %v3715, %v3713
  %v4042 = vpack.c.b16 %v3718, %v3716
  %v4043 = vpack.c.b16 %v3719, %v3717
  %v4044 = vpack.c.b16 %v3722, %v3720
  %v4045 = vpack.c.b16 %v3723, %v3721
  %v4046 = vpack.c.b16 %v3726, %v3724
  %v4047 = vpack.c.b16 %v3727, %v3725
  %v4048 = vpack.c.b16 %v3730, %v3728
  %v4049 = vpack.c.b16 %v3731, %v3729
  %v4050 = vpack.c.b16 %v3734, %v3732
  %v4051 = vpack.c.b16 %v3735, %v3733
  %v4052 = vpack.c.b16 %v3738, %v3736
  %v4053 = vpack.c.b16 %v3739, %v3737
  %v4054 = vpack.c.b16 %v3742, %v3740
  %v4055 = vpack.c.b16 %v3743, %v3741
  %v4056 = vpack.c.b16 %v3746, %v3744
  %v4057 = vpack.c.b16 %v3747, %v3745
  %v4058 = vpack.c.b16 %v3750, %v3748
  %v4059 = vpack.c.b16 %v3751, %v3749
  %v4060 = vpack.c.b16 %v3754, %v3752
  %v4061 = vpack.c.b16 %v3755, %v3753
  %v4062 = vpack.c.b16 %v3758, %v3756
  %v4063 = vpack.c.b16 %v3759, %v3757
  %v4064 = vpack.c.b16 %v3762, %v3760
  %v4065 = vpack.c.b16 %v3763, %v3761
  %v4066 = vpack.c.b16 %v3766, %v3764
  %v4067 = vpack.c.b16 %v3767, %v3765
  %v4068 = vpack.c.b16 %v3770, %v3768
  %v4069 = vpack.c.b16 %v3771, %v3769
  %v4070 = vpack.c.b16 %v3774, %v3772
  %v4071 = vpack.c.b16 %v3775, %v3773
  %v4072 = vpack.c.b16 %v3778, %v3776
  %v4073 = vpack.c.b16 %v3779, %v3777
  %v4074 = vpack.c.b16 %v3782, %v3780
  %v4075 = vpack.c.b16 %v3783, %v3781
  %v4076 = vpack.c.b16 %v3786, %v3784
  %v4077 = vpack.c.b16 %v3787, %v3785
  %v4078 = vpack.c.b16 %v3790, %v3788
  %v4079 = vpack.c.b16 %v3791, %v3789
  %v4080 = vpack.c.b16 %v3794, %v3792
  %v4081 = vpack.c.b16 %v3795, %v3793
  %v4082 = vpack.c.b16 %v3798, %v3796
  %v4083 = vpack.c.b16 %v3799, %v3797
  %v4084 = vpack.c.b16 %v3802, %v3800
  %v4085 = vpack.c.b16 %v3803, %v3801
  %v4086 = vpack.c.b16 %v3806, %v3804
  %v4087 = vpack.c.b16 %v3807, %v3805
  %v4088 = vpack.c.b16 %v3810, %v3808
  %v4089 = vpack.c.b16 %v3811, %v3809
  %v4090 = vpack.c.b16 %v3814, %v3812
  %v4091 = vpack.c.b16 %v3815, %v3813
  %v4092 = vpack.c.b16 %v3818, %v3816
  %v4093 = vpack.c.b16 %v3819, %v3817
  %v4094 = vpack.c.b16 %v3822, %v3820
  %v4095 = vpack.c.b16 %v3823, %v3821
  %v4096 = vpack.c.b16 %v3826, %v3824
  %v4097 = vpack.c.b16 %v3827, %v3825
  %v4098 = vpack.c.b16 %v3830, %v3828
  %v4099 = vpack.c.b16 %v3831, %v3829
  %v4100 = vpack.c.b16 %v3834, %v3832
  %v4101 = vpack.c.b16 %v3835, %v3833
  %v4102 = vpack.c.b16 %v3838, %v3836
  %v4103 = vpack.c.b16 %v3839, %v3837
  %v4104 = vpack.c.b16 %v3842, %v3840
  %v4105 = vpack.c.b16 %v3843, %v3841
  %v4106 = vpack.c.b16 %v3846, %v3844
  %v4107 = vpack.c.b16 %v3847, %v3845
  %v4108 = vpack.c.b16 %v3850, %v3848
  %v4109 = vpack.c.b16 %v3851, %v3849
  %v4110 = vpack.c.b16 %v3854, %v3852
  %v4111 = vpack.c.b16 %v3855, %v3853
  %4368 = vmatprep.subr.bf16.mxu0 %v3857
  %4369 = vmatpush1.bf16.msra.mxu0 %v3856
  %4370 = vmatprep.subr.bf16.mxu0 %v3859
  %4371 = vmatpush1.bf16.msra.mxu0 %v3858
  %4372 = vmatprep.subr.bf16.mxu0 %v3861
  %4373 = vmatpush1.bf16.msra.mxu0 %v3860
  %4374 = vmatprep.subr.bf16.mxu0 %v3863
  %4375 = vmatpush1.bf16.msra.mxu0 %v3862
  %4376 = vmatprep.subr.bf16.mxu0 %v3865
  %4377 = vmatpush1.bf16.msra.mxu0 %v3864
  %4378 = vmatprep.subr.bf16.mxu0 %v3867
  %4379 = vmatpush1.bf16.msra.mxu0 %v3866
  %4380 = vmatprep.subr.bf16.mxu0 %v3869
  %4381 = vmatpush1.bf16.msra.mxu0 %v3868
  %4382 = vmatprep.subr.bf16.mxu0 %v3871
  %4383 = vmatpush1.bf16.msra.mxu0 %v3870
  %4384 = vmatprep.subr.bf16.mxu0 %v3873
  %4385 = vmatpush1.bf16.msra.mxu0 %v3872
  %4386 = vmatprep.subr.bf16.mxu0 %v3875
  %4387 = vmatpush1.bf16.msra.mxu0 %v3874
  %4388 = vmatprep.subr.bf16.mxu0 %v3877
  %4389 = vmatpush1.bf16.msra.mxu0 %v3876
  %4390 = vmatprep.subr.bf16.mxu0 %v3879
  %4391 = vmatpush1.bf16.msra.mxu0 %v3878
  %4392 = vmatprep.subr.bf16.mxu0 %v3881
  %4393 = vmatpush1.bf16.msra.mxu0 %v3880
  %4394 = vmatprep.subr.bf16.mxu0 %v3883
  %4395 = vmatpush1.bf16.msra.mxu0 %v3882
  %4396 = vmatprep.subr.bf16.mxu0 %v3885
  %4397 = vmatpush1.bf16.msra.mxu0 %v3884
  %4398 = vmatprep.subr.bf16.mxu0 %v3887
  %4399 = vmatpush1.bf16.msra.mxu0 %v3886
  %4400 = vmatprep.mubr.bf16.mxu0 %v2805
  %4401 = vmatmul.mubr.bf16.gmra.mrb[0].mxu0 %v2804
  %v4402 = vpop.f32.mrb[0].mxu0
  %v4403 = vadd.f32 %v3081, %v4402
  %v4404 = vpop.f32.mrb[0].mxu0
  %v4405 = vadd.f32 %v3085, %v4404
  %v4406 = vpop.f32.mrb[0].mxu0
  %v4407 = vadd.f32 %v3081, %v4406
  %v4408 = vpop.f32.mrb[0].mxu0
  %v4409 = vadd.f32 %v3085, %v4408
  %4410 = vdwg.mxu0
  %4411 = vmatprep.subr.bf16.mxu0 %v3889
  %4412 = vmatpush1.bf16.msra.mxu0 %v3888
  %4413 = vmatprep.subr.bf16.mxu0 %v3891
  %4414 = vmatpush1.bf16.msra.mxu0 %v3890
  %4415 = vmatprep.subr.bf16.mxu0 %v3893
  %4416 = vmatpush1.bf16.msra.mxu0 %v3892
  %4417 = vmatprep.subr.bf16.mxu0 %v3895
  %4418 = vmatpush1.bf16.msra.mxu0 %v3894
  %4419 = vmatprep.subr.bf16.mxu0 %v3897
  %4420 = vmatpush1.bf16.msra.mxu0 %v3896
  %4421 = vmatprep.subr.bf16.mxu0 %v3899
  %4422 = vmatpush1.bf16.msra.mxu0 %v3898
  %4423 = vmatprep.subr.bf16.mxu0 %v3901
  %4424 = vmatpush1.bf16.msra.mxu0 %v3900
  %4425 = vmatprep.subr.bf16.mxu0 %v3903
  %4426 = vmatpush1.bf16.msra.mxu0 %v3902
  %4427 = vmatprep.subr.bf16.mxu0 %v3905
  %4428 = vmatpush1.bf16.msra.mxu0 %v3904
  %4429 = vmatprep.subr.bf16.mxu0 %v3907
  %4430 = vmatpush1.bf16.msra.mxu0 %v3906
  %4431 = vmatprep.subr.bf16.mxu0 %v3909
  %4432 = vmatpush1.bf16.msra.mxu0 %v3908
  %4433 = vmatprep.subr.bf16.mxu0 %v3911
  %4434 = vmatpush1.bf16.msra.mxu0 %v3910
  %4435 = vmatprep.subr.bf16.mxu0 %v3913
  %4436 = vmatpush1.bf16.msra.mxu0 %v3912
  %4437 = vmatprep.subr.bf16.mxu0 %v3915
  %4438 = vmatpush1.bf16.msra.mxu0 %v3914
  %4439 = vmatprep.subr.bf16.mxu0 %v3917
  %4440 = vmatpush1.bf16.msra.mxu0 %v3916
  %4441 = vmatprep.subr.bf16.mxu0 %v3919
  %4442 = vmatpush1.bf16.msra.mxu0 %v3918
  %4443 = vmatprep.mubr.bf16.mxu0 %v2807
  %4444 = vmatmul.mubr.bf16.gmra.mrb[0].mxu0 %v2806
  %v4445 = vpop.f32.mrb[0].mxu0
  %v4446 = vadd.f32 %v4403, %v4445
  %v4447 = vpop.f32.mrb[0].mxu0
  %v4448 = vadd.f32 %v4405, %v4447
  %v4449 = vpop.f32.mrb[0].mxu0
  %v4450 = vadd.f32 %v4407, %v4449
  %v4451 = vpop.f32.mrb[0].mxu0
  %v4452 = vadd.f32 %v4409, %v4451
  %4453 = vdwg.mxu0
  %4454 = vmatprep.subr.bf16.mxu0 %v3921
  %4455 = vmatpush1.bf16.msra.mxu0 %v3920
  %4456 = vmatprep.subr.bf16.mxu0 %v3923
  %4457 = vmatpush1.bf16.msra.mxu0 %v3922
  %4458 = vmatprep.subr.bf16.mxu0 %v3925
  %4459 = vmatpush1.bf16.msra.mxu0 %v3924
  %4460 = vmatprep.subr.bf16.mxu0 %v3927
  %4461 = vmatpush1.bf16.msra.mxu0 %v3926
  %4462 = vmatprep.subr.bf16.mxu0 %v3929
  %4463 = vmatpush1.bf16.msra.mxu0 %v3928
  %4464 = vmatprep.subr.bf16.mxu0 %v3931
  %4465 = vmatpush1.bf16.msra.mxu0 %v3930
  %4466 = vmatprep.subr.bf16.mxu0 %v3933
  %4467 = vmatpush1.bf16.msra.mxu0 %v3932
  %4468 = vmatprep.subr.bf16.mxu0 %v3935
  %4469 = vmatpush1.bf16.msra.mxu0 %v3934
  %4470 = vmatprep.subr.bf16.mxu0 %v3937
  %4471 = vmatpush1.bf16.msra.mxu0 %v3936
  %4472 = vmatprep.subr.bf16.mxu0 %v3939
  %4473 = vmatpush1.bf16.msra.mxu0 %v3938
  %4474 = vmatprep.subr.bf16.mxu0 %v3941
  %4475 = vmatpush1.bf16.msra.mxu0 %v3940
  %4476 = vmatprep.subr.bf16.mxu0 %v3943
  %4477 = vmatpush1.bf16.msra.mxu0 %v3942
  %4478 = vmatprep.subr.bf16.mxu0 %v3945
  %4479 = vmatpush1.bf16.msra.mxu0 %v3944
  %4480 = vmatprep.subr.bf16.mxu0 %v3947
  %4481 = vmatpush1.bf16.msra.mxu0 %v3946
  %4482 = vmatprep.subr.bf16.mxu0 %v3949
  %4483 = vmatpush1.bf16.msra.mxu0 %v3948
  %4484 = vmatprep.subr.bf16.mxu0 %v3951
  %4485 = vmatpush1.bf16.msra.mxu0 %v3950
  %4486 = vmatprep.mubr.bf16.mxu0 %v2809
  %4487 = vmatmul.mubr.bf16.gmra.mrb[0].mxu0 %v2808
  %v4488 = vpop.f32.mrb[0].mxu0
  %v4489 = vadd.f32 %v4446, %v4488
  %v4490 = vpop.f32.mrb[0].mxu0
  %v4491 = vadd.f32 %v4448, %v4490
  %v4492 = vpop.f32.mrb[0].mxu0
  %v4493 = vadd.f32 %v4450, %v4492
  %v4494 = vpop.f32.mrb[0].mxu0
  %v4495 = vadd.f32 %v4452, %v4494
  %4496 = vdwg.mxu0
  %4497 = vmatprep.subr.bf16.mxu0 %v3953
  %4498 = vmatpush1.bf16.msra.mxu0 %v3952
  %4499 = vmatprep.subr.bf16.mxu0 %v3955
  %4500 = vmatpush1.bf16.msra.mxu0 %v3954
  %4501 = vmatprep.subr.bf16.mxu0 %v3957
  %4502 = vmatpush1.bf16.msra.mxu0 %v3956
  %4503 = vmatprep.subr.bf16.mxu0 %v3959
  %4504 = vmatpush1.bf16.msra.mxu0 %v3958
  %4505 = vmatprep.subr.bf16.mxu0 %v3961
  %4506 = vmatpush1.bf16.msra.mxu0 %v3960
  %4507 = vmatprep.subr.bf16.mxu0 %v3963
  %4508 = vmatpush1.bf16.msra.mxu0 %v3962
  %4509 = vmatprep.subr.bf16.mxu0 %v3965
  %4510 = vmatpush1.bf16.msra.mxu0 %v3964
  %4511 = vmatprep.subr.bf16.mxu0 %v3967
  %4512 = vmatpush1.bf16.msra.mxu0 %v3966
  %4513 = vmatprep.subr.bf16.mxu0 %v3969
  %4514 = vmatpush1.bf16.msra.mxu0 %v3968
  %4515 = vmatprep.subr.bf16.mxu0 %v3971
  %4516 = vmatpush1.bf16.msra.mxu0 %v3970
  %4517 = vmatprep.subr.bf16.mxu0 %v3973
  %4518 = vmatpush1.bf16.msra.mxu0 %v3972
  %4519 = vmatprep.subr.bf16.mxu0 %v3975
  %4520 = vmatpush1.bf16.msra.mxu0 %v3974
  %4521 = vmatprep.subr.bf16.mxu0 %v3977
  %4522 = vmatpush1.bf16.msra.mxu0 %v3976
  %4523 = vmatprep.subr.bf16.mxu0 %v3979
  %4524 = vmatpush1.bf16.msra.mxu0 %v3978
  %4525 = vmatprep.subr.bf16.mxu0 %v3981
  %4526 = vmatpush1.bf16.msra.mxu0 %v3980
  %4527 = vmatprep.subr.bf16.mxu0 %v3983
  %4528 = vmatpush1.bf16.msra.mxu0 %v3982
  %4529 = vmatprep.mubr.bf16.mxu0 %v2811
  %4530 = vmatmul.mubr.bf16.gmra.mrb[0].mxu0 %v2810
  %v4531 = vpop.f32.mrb[0].mxu0
  %v4532 = vadd.f32 %v4489, %v4531
  %v4533 = vpop.f32.mrb[0].mxu0
  %v4534 = vadd.f32 %v4491, %v4533
  %v4535 = vpop.f32.mrb[0].mxu0
  %v4536 = vadd.f32 %v4493, %v4535
  %v4537 = vpop.f32.mrb[0].mxu0
  %v4538 = vadd.f32 %v4495, %v4537
  %4539 = vdwg.mxu0
  %4540 = vmatprep.subr.bf16.mxu0 %v3985
  %4541 = vmatpush1.bf16.msra.mxu0 %v3984
  %4542 = vmatprep.subr.bf16.mxu0 %v3987
  %4543 = vmatpush1.bf16.msra.mxu0 %v3986
  %4544 = vmatprep.subr.bf16.mxu0 %v3989
  %4545 = vmatpush1.bf16.msra.mxu0 %v3988
  %4546 = vmatprep.subr.bf16.mxu0 %v3991
  %4547 = vmatpush1.bf16.msra.mxu0 %v3990
  %4548 = vmatprep.subr.bf16.mxu0 %v3993
  %4549 = vmatpush1.bf16.msra.mxu0 %v3992
  %4550 = vmatprep.subr.bf16.mxu0 %v3995
  %4551 = vmatpush1.bf16.msra.mxu0 %v3994
  %4552 = vmatprep.subr.bf16.mxu0 %v3997
  %4553 = vmatpush1.bf16.msra.mxu0 %v3996
  %4554 = vmatprep.subr.bf16.mxu0 %v3999
  %4555 = vmatpush1.bf16.msra.mxu0 %v3998
  %4556 = vmatprep.subr.bf16.mxu0 %v4001
  %4557 = vmatpush1.bf16.msra.mxu0 %v4000
  %4558 = vmatprep.subr.bf16.mxu0 %v4003
  %4559 = vmatpush1.bf16.msra.mxu0 %v4002
  %4560 = vmatprep.subr.bf16.mxu0 %v4005
  %4561 = vmatpush1.bf16.msra.mxu0 %v4004
  %4562 = vmatprep.subr.bf16.mxu0 %v4007
  %4563 = vmatpush1.bf16.msra.mxu0 %v4006
  %4564 = vmatprep.subr.bf16.mxu0 %v4009
  %4565 = vmatpush1.bf16.msra.mxu0 %v4008
  %4566 = vmatprep.subr.bf16.mxu0 %v4011
  %4567 = vmatpush1.bf16.msra.mxu0 %v4010
  %4568 = vmatprep.subr.bf16.mxu0 %v4013
  %4569 = vmatpush1.bf16.msra.mxu0 %v4012
  %4570 = vmatprep.subr.bf16.mxu0 %v4015
  %4571 = vmatpush1.bf16.msra.mxu0 %v4014
  %4572 = vmatprep.mubr.bf16.mxu0 %v2813
  %4573 = vmatmul.mubr.bf16.gmra.mrb[0].mxu0 %v2812
  %v4574 = vpop.f32.mrb[0].mxu0
  %v4575 = vadd.f32 %v4532, %v4574
  %v4576 = vpop.f32.mrb[0].mxu0
  %v4577 = vadd.f32 %v4534, %v4576
  %v4578 = vpop.f32.mrb[0].mxu0
  %v4579 = vadd.f32 %v4536, %v4578
  %v4580 = vpop.f32.mrb[0].mxu0
  %v4581 = vadd.f32 %v4538, %v4580
  %4582 = vdwg.mxu0
  %4583 = vmatprep.subr.bf16.mxu0 %v4017
  %4584 = vmatpush1.bf16.msra.mxu0 %v4016
  %4585 = vmatprep.subr.bf16.mxu0 %v4019
  %4586 = vmatpush1.bf16.msra.mxu0 %v4018
  %4587 = vmatprep.subr.bf16.mxu0 %v4021
  %4588 = vmatpush1.bf16.msra.mxu0 %v4020
  %4589 = vmatprep.subr.bf16.mxu0 %v4023
  %4590 = vmatpush1.bf16.msra.mxu0 %v4022
  %4591 = vmatprep.subr.bf16.mxu0 %v4025
  %4592 = vmatpush1.bf16.msra.mxu0 %v4024
  %4593 = vmatprep.subr.bf16.mxu0 %v4027
  %4594 = vmatpush1.bf16.msra.mxu0 %v4026
  %4595 = vmatprep.subr.bf16.mxu0 %v4029
  %4596 = vmatpush1.bf16.msra.mxu0 %v4028
  %4597 = vmatprep.subr.bf16.mxu0 %v4031
  %4598 = vmatpush1.bf16.msra.mxu0 %v4030
  %4599 = vmatprep.subr.bf16.mxu0 %v4033
  %4600 = vmatpush1.bf16.msra.mxu0 %v4032
  %4601 = vmatprep.subr.bf16.mxu0 %v4035
  %4602 = vmatpush1.bf16.msra.mxu0 %v4034
  %4603 = vmatprep.subr.bf16.mxu0 %v4037
  %4604 = vmatpush1.bf16.msra.mxu0 %v4036
  %4605 = vmatprep.subr.bf16.mxu0 %v4039
  %4606 = vmatpush1.bf16.msra.mxu0 %v4038
  %4607 = vmatprep.subr.bf16.mxu0 %v4041
  %4608 = vmatpush1.bf16.msra.mxu0 %v4040
  %4609 = vmatprep.subr.bf16.mxu0 %v4043
  %4610 = vmatpush1.bf16.msra.mxu0 %v4042
  %4611 = vmatprep.subr.bf16.mxu0 %v4045
  %4612 = vmatpush1.bf16.msra.mxu0 %v4044
  %4613 = vmatprep.subr.bf16.mxu0 %v4047
  %4614 = vmatpush1.bf16.msra.mxu0 %v4046
  %4615 = vmatprep.mubr.bf16.mxu0 %v2815
  %4616 = vmatmul.mubr.bf16.gmra.mrb[0].mxu0 %v2814
  %v4617 = vpop.f32.mrb[0].mxu0
  %v4618 = vadd.f32 %v4575, %v4617
  %v4619 = vpop.f32.mrb[0].mxu0
  %v4620 = vadd.f32 %v4577, %v4619
  %v4621 = vpop.f32.mrb[0].mxu0
  %v4622 = vadd.f32 %v4579, %v4621
  %v4623 = vpop.f32.mrb[0].mxu0
  %v4624 = vadd.f32 %v4581, %v4623
  %4625 = vdwg.mxu0
  %4626 = vmatprep.subr.bf16.mxu0 %v4049
  %4627 = vmatpush1.bf16.msra.mxu0 %v4048
  %4628 = vmatprep.subr.bf16.mxu0 %v4051
  %4629 = vmatpush1.bf16.msra.mxu0 %v4050
  %4630 = vmatprep.subr.bf16.mxu0 %v4053
  %4631 = vmatpush1.bf16.msra.mxu0 %v4052
  %4632 = vmatprep.subr.bf16.mxu0 %v4055
  %4633 = vmatpush1.bf16.msra.mxu0 %v4054
  %4634 = vmatprep.subr.bf16.mxu0 %v4057
  %4635 = vmatpush1.bf16.msra.mxu0 %v4056
  %4636 = vmatprep.subr.bf16.mxu0 %v4059
  %4637 = vmatpush1.bf16.msra.mxu0 %v4058
  %4638 = vmatprep.subr.bf16.mxu0 %v4061
  %4639 = vmatpush1.bf16.msra.mxu0 %v4060
  %4640 = vmatprep.subr.bf16.mxu0 %v4063
  %4641 = vmatpush1.bf16.msra.mxu0 %v4062
  %4642 = vmatprep.subr.bf16.mxu0 %v4065
  %4643 = vmatpush1.bf16.msra.mxu0 %v4064
  %4644 = vmatprep.subr.bf16.mxu0 %v4067
  %4645 = vmatpush1.bf16.msra.mxu0 %v4066
  %4646 = vmatprep.subr.bf16.mxu0 %v4069
  %4647 = vmatpush1.bf16.msra.mxu0 %v4068
  %4648 = vmatprep.subr.bf16.mxu0 %v4071
  %4649 = vmatpush1.bf16.msra.mxu0 %v4070
  %4650 = vmatprep.subr.bf16.mxu0 %v4073
  %4651 = vmatpush1.bf16.msra.mxu0 %v4072
  %4652 = vmatprep.subr.bf16.mxu0 %v4075
  %4653 = vmatpush1.bf16.msra.mxu0 %v4074
  %4654 = vmatprep.subr.bf16.mxu0 %v4077
  %4655 = vmatpush1.bf16.msra.mxu0 %v4076
  %4656 = vmatprep.subr.bf16.mxu0 %v4079
  %4657 = vmatpush1.bf16.msra.mxu0 %v4078
  %4658 = vmatprep.mubr.bf16.mxu0 %v2817
  %4659 = vmatmul.mubr.bf16.gmra.mrb[0].mxu0 %v2816
  %v4660 = vpop.f32.mrb[0].mxu0
  %v4661 = vadd.f32 %v4618, %v4660
  %v4662 = vpop.f32.mrb[0].mxu0
  %v4663 = vadd.f32 %v4620, %v4662
  %v4664 = vpop.f32.mrb[0].mxu0
  %v4665 = vadd.f32 %v4622, %v4664
  %v4666 = vpop.f32.mrb[0].mxu0
  %v4667 = vadd.f32 %v4624, %v4666
  %4668 = vdwg.mxu0
  %4669 = vmatprep.subr.bf16.mxu0 %v4081
  %4670 = vmatpush1.bf16.msra.mxu0 %v4080
  %4671 = vmatprep.subr.bf16.mxu0 %v4083
  %4672 = vmatpush1.bf16.msra.mxu0 %v4082
  %4673 = vmatprep.subr.bf16.mxu0 %v4085
  %4674 = vmatpush1.bf16.msra.mxu0 %v4084
  %4675 = vmatprep.subr.bf16.mxu0 %v4087
  %4676 = vmatpush1.bf16.msra.mxu0 %v4086
  %4677 = vmatprep.subr.bf16.mxu0 %v4089
  %4678 = vmatpush1.bf16.msra.mxu0 %v4088
  %4679 = vmatprep.subr.bf16.mxu0 %v4091
  %4680 = vmatpush1.bf16.msra.mxu0 %v4090
  %4681 = vmatprep.subr.bf16.mxu0 %v4093
  %4682 = vmatpush1.bf16.msra.mxu0 %v4092
  %4683 = vmatprep.subr.bf16.mxu0 %v4095
  %4684 = vmatpush1.bf16.msra.mxu0 %v4094
  %4685 = vmatprep.subr.bf16.mxu0 %v4097
  %4686 = vmatpush1.bf16.msra.mxu0 %v4096
  %4687 = vmatprep.subr.bf16.mxu0 %v4099
  %4688 = vmatpush1.bf16.msra.mxu0 %v4098
  %4689 = vmatprep.subr.bf16.mxu0 %v4101
  %4690 = vmatpush1.bf16.msra.mxu0 %v4100
  %4691 = vmatprep.subr.bf16.mxu0 %v4103
  %4692 = vmatpush1.bf16.msra.mxu0 %v4102
  %4693 = vmatprep.subr.bf16.mxu0 %v4105
  %4694 = vmatpush1.bf16.msra.mxu0 %v4104
  %4695 = vmatprep.subr.bf16.mxu0 %v4107
  %4696 = vmatpush1.bf16.msra.mxu0 %v4106
  %4697 = vmatprep.subr.bf16.mxu0 %v4109
  %4698 = vmatpush1.bf16.msra.mxu0 %v4108
  %4699 = vmatprep.subr.bf16.mxu0 %v4111
  %4700 = vmatpush1.bf16.msra.mxu0 %v4110
  %4701 = vmatprep.mubr.bf16.mxu0 %v2819
  %4702 = vmatmul.mubr.bf16.gmra.mrb[0].mxu0 %v2818
  %v4703 = vpop.f32.mrb[0].mxu0
  %v4704 = vadd.f32 %v4661, %v4703
  %v4705 = vpop.f32.mrb[0].mxu0
  %v4706 = vadd.f32 %v4663, %v4705
  %v4707 = vpop.f32.mrb[0].mxu0
  %v4708 = vadd.f32 %v4665, %v4707
  %v4709 = vpop.f32.mrb[0].mxu0
  %v4710 = vadd.f32 %v4667, %v4709
  %4711 = vdwg.mxu0
  %4712 = vst [vmem:[%s9] sm:$0xff] %v4704
  %4713 = vst [vmem:[%s9 + $0x8] sm:$0xff] %v4706
  %4714 = vst [vmem:[%s9 + $0x10] sm:$0xff] %v4708
  %4715 = vst [vmem:[%s9 + $0x18] sm:$0xff] %v4710
  // Predicated region
  $region38: #{coefs_model.1} parent=0 // pred_check
    _
  $region39: #{coefs_model.1} parent=0 // pred_check_branch
    %4717 = sbr.rel (0) target = $region41
  $region40: #{coefs_model.1} parent=0 // pred_region
    _
  $region41: #{coefs_model.1} parent=0 // pred_fallthru
    _
  // Predicated region
  $region42: #{coefs_model.1} parent=0 // pred_check
    _
  $region43: #{coefs_model.1} parent=0 // pred_check_branch
    %4719 = sbr.rel (0) target = $region45
  $region44: #{coefs_model.1} parent=0 // pred_region
    _
  $region45: #{coefs_model.1} parent=0 // pred_fallthru
    _

</llo_original>
